<compile_context>
chip_gen: v7x
topology: tpu7x:2x2x1
jax: 0.10.0
libtpu: 0.0.40
codegen_flags: <defaults>
</compile_context>

<pallas_src>
import functools

import jax
import jax.numpy as jnp
from jax.experimental import pallas as pl
from jax.experimental.pallas import tpu as pltpu


# ---------------------------------------------------------------------------
# In-kernel helper: relu(W @ X + shift) with f32 accumulation on the MXU.
#   W: (Cout, Cin) bf16 (BN scale pre-folded), X: (Cin, S) bf16,
#   shift: (Cout, 1) f32 (conv bias + BN shift).
# ---------------------------------------------------------------------------
def _mm_relu(w_ref, x_bf16, shift_ref):
    y = jnp.dot(w_ref[...], x_bf16, preferred_element_type=jnp.float32)
    return jnp.maximum(y + shift_ref[...], 0.0)


# ------------------------------ kernel bodies ------------------------------
def _plane0_kernel(x_ref, we, se, wb, sb, wd, sd, o_ref):
    """Fused enc0 -> backbone/neck stand-in -> dec0 -> residual add."""
    x = x_ref[...]                                        # (C*Z, H*W) f32
    h = _mm_relu(we, x.astype(jnp.bfloat16), se)          # (C,   H*W)
    h = _mm_relu(wb, h.astype(jnp.bfloat16), sb)          # (C,   H*W)
    d = _mm_relu(wd, h.astype(jnp.bfloat16), sd)          # (C*Z, H*W)
    o_ref[...] = d + x                                    # residual


def _planes12_kernel(x1_ref, x2_ref,
                     we1, se1, wb1, sb1, wd1, sd1,
                     we2, se2, wb2, sb2, wd2, sd2,
                     o1_ref, o2_ref):
    """Fused enc->bb->dec chains for plane 1 and plane 2 in one launch."""
    x1 = x1_ref[...].astype(jnp.bfloat16)                 # (C*H, W*Z)
    h = _mm_relu(we1, x1, se1)
    h = _mm_relu(wb1, h.astype(jnp.bfloat16), sb1)
    o1_ref[...] = _mm_relu(wd1, h.astype(jnp.bfloat16), sd1)   # (H*C, W*Z)

    x2 = x2_ref[...].astype(jnp.bfloat16)                 # (C*W, Z*H)
    h = _mm_relu(we2, x2, se2)
    h = _mm_relu(wb2, h.astype(jnp.bfloat16), sb2)
    o2_ref[...] = _mm_relu(wd2, h.astype(jnp.bfloat16), sd2)   # (W*C, Z*H)


def _fuse_kernel(f0_ref, f1_ref, res2_ref, wxy0, wxy1, bxy, wo, so, o_ref):
    """xy_enc as a split matmul (== conv over channel concat) + res + out_enc."""
    y = jnp.dot(wxy0[...], f0_ref[...].astype(jnp.bfloat16),
                preferred_element_type=jnp.float32)
    y = y + jnp.dot(wxy1[...], f1_ref[...].astype(jnp.bfloat16),
                    preferred_element_type=jnp.float32)
    y = jnp.maximum(y + bxy[...], 0.0) + res2_ref[...]          # (C, Z*H*W)
    o_ref[...] = _mm_relu(wo, y.astype(jnp.bfloat16), so)


def _fuse_kernel_no_out_enc(f0_ref, f1_ref, res2_ref, wxy0, wxy1, bxy, o_ref):
    y = jnp.dot(wxy0[...], f0_ref[...].astype(jnp.bfloat16),
                preferred_element_type=jnp.float32)
    y = y + jnp.dot(wxy1[...], f1_ref[...].astype(jnp.bfloat16),
                    preferred_element_type=jnp.float32)
    o_ref[...] = jnp.maximum(y + bxy[...], 0.0) + res2_ref[...]


# ------------------------------ call wrappers ------------------------------
_PARALLEL = pltpu.CompilerParams(dimension_semantics=("parallel",))


def _whole(arr):
    """BlockSpec: full (small) weight array, identical for every grid step."""
    nd = arr.ndim
    return pl.BlockSpec(arr.shape, lambda b, _n=nd: (0,) * _n)


def _per_batch(rows, cols):
    """BlockSpec: one batch element per grid step, batch dim squeezed."""
    return pl.BlockSpec((None, rows, cols), lambda b: (b, 0, 0))


def _plane0_call(x2, enc, bb, dec):
    B, R, S = x2.shape
    return pl.pallas_call(
        _plane0_kernel,
        out_shape=jax.ShapeDtypeStruct((B, R, S), jnp.float32),
        grid=(B,),
        in_specs=[_per_batch(R, S),
                  _whole(enc["w"]), _whole(enc["shift"]),
                  _whole(bb["w"]), _whole(bb["shift"]),
                  _whole(dec["w"]), _whole(dec["shift"])],
        out_specs=_per_batch(R, S),
        compiler_params=_PARALLEL,
    )(x2, enc["w"], enc["shift"], bb["w"], bb["shift"], dec["w"], dec["shift"])


def _planes12_call(x1, x2, p1, p2):
    B, R1, S1 = x1.shape
    _, R2, S2 = x2.shape
    enc1, bb1, dec1 = p1
    enc2, bb2, dec2 = p2
    return pl.pallas_call(
        _planes12_kernel,
        out_shape=(jax.ShapeDtypeStruct((B, R1, S1), jnp.float32),
                   jax.ShapeDtypeStruct((B, R2, S2), jnp.float32)),
        grid=(B,),
        in_specs=[_per_batch(R1, S1), _per_batch(R2, S2),
                  _whole(enc1["w"]), _whole(enc1["shift"]),
                  _whole(bb1["w"]), _whole(bb1["shift"]),
                  _whole(dec1["w"]), _whole(dec1["shift"]),
                  _whole(enc2["w"]), _whole(enc2["shift"]),
                  _whole(bb2["w"]), _whole(bb2["shift"]),
                  _whole(dec2["w"]), _whole(dec2["shift"])],
        out_specs=(_per_batch(R1, S1), _per_batch(R2, S2)),
        compiler_params=_PARALLEL,
    )(x1, x2,
      enc1["w"], enc1["shift"], bb1["w"], bb1["shift"], dec1["w"], dec1["shift"],
      enc2["w"], enc2["shift"], bb2["w"], bb2["shift"], dec2["w"], dec2["shift"])


def _fuse_call(f0, f1, res2, xy, out_layer):
    B, C, S = f0.shape
    wxy0 = xy["w"][:, :C]          # xy_enc split along Cin: concat never built
    wxy1 = xy["w"][:, C:]
    common = [_per_batch(C, S), _per_batch(C, S), _per_batch(C, S),
              _whole(wxy0), _whole(wxy1), _whole(xy["shift"])]
    if out_layer is None:
        return pl.pallas_call(
            _fuse_kernel_no_out_enc,
            out_shape=jax.ShapeDtypeStruct((B, C, S), jnp.float32),
            grid=(B,),
            in_specs=common,
            out_specs=_per_batch(C, S),
            compiler_params=_PARALLEL,
        )(f0, f1, res2, wxy0, wxy1, xy["shift"])
    return pl.pallas_call(
        _fuse_kernel,
        out_shape=jax.ShapeDtypeStruct((B, C, S), jnp.float32),
        grid=(B,),
        in_specs=common + [_whole(out_layer["w"]), _whole(out_layer["shift"])],
        out_specs=_per_batch(C, S),
        compiler_params=_PARALLEL,
    )(f0, f1, res2, wxy0, wxy1, xy["shift"], out_layer["w"], out_layer["shift"])


# ------------------------------ forward pass -------------------------------
def tri_res_v4_forward(x, params, out_enc=True):
    """x: (B, C, Z, H, W) f32 -> (B, C, Z, H, W) f32 (num_planes=3)."""
    B, C, Z, H, W = x.shape

    # Plane 0: fold Z into channels (contiguity-preserving reshape, no copy).
    x2 = x.reshape(B, C * Z, H * W)
    enc_x = _plane0_call(x2, params["enc"][0], params["bb"][0], params["dec"][0])
    enc5 = enc_x.reshape(B, C, Z, H, W)

    # The module's own inter-plane permutes (only real HBM data movement left).
    x_p1 = jnp.transpose(enc5, (0, 1, 3, 4, 2)).reshape(B, C * H, W * Z)  # fold H
    x_p2 = jnp.transpose(enc5, (0, 1, 4, 2, 3)).reshape(B, C * W, Z * H)  # fold W

    d1, d2 = _planes12_call(
        x_p1, x_p2,
        (params["enc"][1], params["bb"][1], params["dec"][1]),
        (params["enc"][2], params["bb"][2], params["dec"][2]))

    # Align both tri-plane features back to canonical (z, h, w) voxel order.
    f0 = jnp.transpose(d1.reshape(B, C, H, W, Z), (0, 1, 4, 2, 3)
                       ).reshape(B, C, Z * H * W)
    f1 = jnp.transpose(d2.reshape(B, C, W, Z, H), (0, 1, 3, 4, 2)
                       ).reshape(B, C, Z * H * W)
    res2 = enc_x.reshape(B, C, Z * H * W)

    out = _fuse_call(f0, f1, res2, params["xy_enc"],
                     params["out_enc"] if out_enc else None)
    return out.reshape(B, C, Z, H, W)


# ------------------- parameter construction (BN folded) --------------------
def make_layer(key, cin, cout, has_bn=True):
    """1x1 conv (+ eval-mode BN) folded into y = relu(W_folded @ x + shift)."""
    kw, kb = jax.random.split(key)
    w = jax.random.normal(kw, (cout, cin), jnp.float32) / jnp.sqrt(
        jnp.float32(cin))
    b = jax.random.normal(kb, (cout,), jnp.float32) * 0.01
    if has_bn:
        gamma = jnp.ones((cout,), jnp.float32)
        beta = jnp.zeros((cout,), jnp.float32)
        mean = jnp.zeros((cout,), jnp.float32)
        var = jnp.ones((cout,), jnp.float32)
        eps = 1e-5
        scale = gamma / jnp.sqrt(var + eps)
        shift = beta + (b - mean) * scale
    else:
        scale = jnp.ones((cout,), jnp.float32)
        shift = b
    return dict(
        w=(w * scale[:, None]).astype(jnp.bfloat16),      # BN scale folded in
        shift=shift.reshape(cout, 1).astype(jnp.float32))


def build_params(channels, grid_size, num_planes=3, out_enc=True, seed=0):
    """grid_size = [Dx, Dy, Dz] (same convention as create_grid_infos)."""
    keys = jax.random.split(jax.random.PRNGKey(seed), 4 * num_planes + 2)
    params = {"enc": [], "bb": [], "dec": []}
    C = channels
    for i in range(num_planes):
        fold = int(grid_size[-i - 1])
        params["enc"].append(make_layer(keys[4 * i + 0], C * fold, C, True))
        # TODO(synk): encoder_backbones[i]/encoder_necks[i] are external mmdet3d
        # builder modules (config not in this file); stand-in is a
        # shape-preserving 1x1 conv + ReLU.
        params["bb"].append(make_layer(keys[4 * i + 1], C, C, False))
        params["dec"].append(make_layer(keys[4 * i + 2], C, fold * C, True))
    params["xy_enc"] = make_layer(keys[-2], 2 * C, C, False)    # Conv3d + ReLU
    if out_enc:
        params["out_enc"] = make_layer(keys[-1], C, C, True)    # Conv3d+BN+ReLU
    return params


# ----------------- pure-JAX reference (literal PyTorch port) ----------------
def _ref_conv(x, layer):
    B, cin = x.shape[0], x.shape[1]
    sp = x.shape[2:]
    x2 = x.reshape(B, cin, -1).astype(jnp.bfloat16)
    y = jnp.einsum("oc,bcs->bos", layer["w"], x2,
                   preferred_element_type=jnp.float32)
    y = jnp.maximum(y + layer["shift"][None], 0.0)
    return y.reshape(B, layer["w"].shape[0], *sp)


def tri_res_v4_reference(x, params, out_enc=True):
    B, C, Z, H, W = x.shape
    res = x
    t = x.reshape(B, C * Z, H, W)
    t = _ref_conv(t, params["enc"][0])
    t = _ref_conv(t, params["bb"][0])
    enc_x = _ref_conv(t, params["dec"][0]).reshape(B, C, Z, H, W) + res
    res2 = enc_x
    feats = []
    for i in range(1, 3):
        enc_x = jnp.transpose(enc_x, (0, 1, 3, 4, 2))
        f = enc_x.reshape(B, -1, *enc_x.shape[3:])
        f = _ref_conv(f, params["enc"][i])
        f = _ref_conv(f, params["bb"][i])
        feats.append(_ref_conv(f, params["dec"][i]).reshape(enc_x.shape))
    feats[0] = jnp.transpose(feats[0], (0, 1, 4, 2, 3))
    feats[1] = jnp.transpose(feats[1], (0, 1, 3, 4, 2))
    fcat = jnp.concatenate(feats, axis=1)
    out = _ref_conv(fcat, params["xy_enc"]) + res2
    if out_enc:
        out = _ref_conv(out, params["out_enc"])
    return out


# ----------------------------------------------------------------------------
if __name__ == "__main__":
    # grid_config -> grid_size = [(hi - lo)/step for x, y, z] = [Dx, Dy, Dz]
    grid_config = {"x": (0.0, 16.0, 1.0), "y": (0.0, 16.0, 1.0),
                   "z": (0.0, 8.0, 1.0)}
    grid_size = [(hi - lo) / step for (lo, hi, step) in
                 (grid_config["x"], grid_config["y"], grid_config["z"])]

    B, C = 2, 8
    W, H, Z = int(grid_size[0]), int(grid_size[1]), int(grid_size[2])  # 16,16,8

    params = build_params(C, grid_size, num_planes=3, out_enc=True, seed=0)
    x = jax.random.normal(jax.random.PRNGKey(0), (B, C, Z, H, W), jnp.float32)

    fwd = jax.jit(functools.partial(tri_res_v4_forward, out_enc=True))
    out = jax.block_until_ready(fwd(x, params))
    assert out.shape == (B, C, Z, H, W), out.shape

    # Sanity check against a literal pure-JAX port of the PyTorch forward.
    ref_fn = jax.jit(functools.partial(tri_res_v4_reference, out_enc=True))
    ref = jax.block_until_ready(ref_fn(x, params))
    err = float(jnp.max(jnp.abs(out - ref)))
    assert err < 5e-2, f"max abs err {err}"

    print("KERNEL_OK")
</pallas_src>

<mosaic_0001>
module attributes {stable_mosaic.version = 11 : i64} {
  func.func @_plane0_kernel(%arg0: i32, %arg1: memref<1x64x256xf32, #tpu.memory_space<vmem>>, %arg2: memref<8x64xbf16, #tpu.memory_space<vmem>>, %arg3: memref<8x1xf32, #tpu.memory_space<vmem>>, %arg4: memref<8x8xbf16, #tpu.memory_space<vmem>>, %arg5: memref<8x1xf32, #tpu.memory_space<vmem>>, %arg6: memref<64x8xbf16, #tpu.memory_space<vmem>>, %arg7: memref<64x1xf32, #tpu.memory_space<vmem>>, %arg8: memref<1x64x256xf32, #tpu.memory_space<vmem>>) attributes {dimension_semantics = [#tpu.dimension_semantics<parallel>], iteration_bounds = array<i64: 2>, scalar_prefetch = 0 : i64, scratch_operands = 0 : i64, tpu.core_type = #tpu.core_type<tc>, window_params = [{transform_indices = @transform_0, window_bounds = array<i64: 1, 64, 256>}, {pipeline_mode = #tpu.pipeline_mode<synchronous>, transform_indices = @transform_1, window_bounds = array<i64: 8, 64>}, {pipeline_mode = #tpu.pipeline_mode<synchronous>, transform_indices = @transform_2, window_bounds = array<i64: 8, 1>}, {pipeline_mode = #tpu.pipeline_mode<synchronous>, transform_indices = @transform_3, window_bounds = array<i64: 8, 8>}, {pipeline_mode = #tpu.pipeline_mode<synchronous>, transform_indices = @transform_4, window_bounds = array<i64: 8, 1>}, {pipeline_mode = #tpu.pipeline_mode<synchronous>, transform_indices = @transform_5, window_bounds = array<i64: 64, 8>}, {pipeline_mode = #tpu.pipeline_mode<synchronous>, transform_indices = @transform_6, window_bounds = array<i64: 64, 1>}, {transform_indices = @transform_7, window_bounds = array<i64: 1, 64, 256>}]} {
    %c0 = arith.constant 0 : index
    %c0_0 = arith.constant 0 : index
    %c0_1 = arith.constant 0 : index
    %0 = vector.load %arg1[%c0, %c0_0, %c0_1] : memref<1x64x256xf32, #tpu.memory_space<vmem>>, vector<1x64x256xf32>
    %1 = vector.shape_cast %0 : vector<1x64x256xf32> to vector<64x256xf32>
    %2 = arith.truncf %1 : vector<64x256xf32> to vector<64x256xbf16>
    %c0_2 = arith.constant 0 : index
    %c0_3 = arith.constant 0 : index
    %3 = vector.load %arg2[%c0_2, %c0_3] : memref<8x64xbf16, #tpu.memory_space<vmem>>, vector<8x64xbf16>
    %cst = arith.constant dense<0.000000e+00> : vector<8x256xf32>
    %4 = tpu.matmul %3, %2, %cst {dimension_numbers = #tpu.dot_dimension_numbers<[1], [0], [0], [1], [0, 0, 1, 1], [], []>} : vector<8x64xbf16>, vector<64x256xbf16>, vector<8x256xf32> -> vector<8x256xf32>
    %c0_4 = arith.constant 0 : index
    %c0_5 = arith.constant 0 : index
    %5 = vector.load %arg3[%c0_4, %c0_5] : memref<8x1xf32, #tpu.memory_space<vmem>>, vector<8x1xf32>
    %6 = vector.broadcast %5 : vector<8x1xf32> to vector<8x256xf32>
    %7 = arith.addf %4, %6 : vector<8x256xf32>
    %cst_6 = arith.constant 0.000000e+00 : f32
    %8 = vector.broadcast %cst_6 : f32 to vector<8x256xf32>
    %9 = arith.maximumf %7, %8 : vector<8x256xf32>
    %10 = arith.truncf %9 : vector<8x256xf32> to vector<8x256xbf16>
    %c0_7 = arith.constant 0 : index
    %c0_8 = arith.constant 0 : index
    %11 = vector.load %arg4[%c0_7, %c0_8] : memref<8x8xbf16, #tpu.memory_space<vmem>>, vector<8x8xbf16>
    %cst_9 = arith.constant dense<0.000000e+00> : vector<8x256xf32>
    %12 = tpu.matmul %11, %10, %cst_9 {dimension_numbers = #tpu.dot_dimension_numbers<[1], [0], [0], [1], [0, 0, 1, 1], [], []>} : vector<8x8xbf16>, vector<8x256xbf16>, vector<8x256xf32> -> vector<8x256xf32>
    %c0_10 = arith.constant 0 : index
    %c0_11 = arith.constant 0 : index
    %13 = vector.load %arg5[%c0_10, %c0_11] : memref<8x1xf32, #tpu.memory_space<vmem>>, vector<8x1xf32>
    %14 = vector.broadcast %13 : vector<8x1xf32> to vector<8x256xf32>
    %15 = arith.addf %12, %14 : vector<8x256xf32>
    %cst_12 = arith.constant 0.000000e+00 : f32
    %16 = vector.broadcast %cst_12 : f32 to vector<8x256xf32>
    %17 = arith.maximumf %15, %16 : vector<8x256xf32>
    %18 = arith.truncf %17 : vector<8x256xf32> to vector<8x256xbf16>
    %c0_13 = arith.constant 0 : index
    %c0_14 = arith.constant 0 : index
    %19 = vector.load %arg6[%c0_13, %c0_14] : memref<64x8xbf16, #tpu.memory_space<vmem>>, vector<64x8xbf16>
    %cst_15 = arith.constant dense<0.000000e+00> : vector<64x256xf32>
    %20 = tpu.matmul %19, %18, %cst_15 {dimension_numbers = #tpu.dot_dimension_numbers<[1], [0], [0], [1], [0, 0, 1, 1], [], []>} : vector<64x8xbf16>, vector<8x256xbf16>, vector<64x256xf32> -> vector<64x256xf32>
    %c0_16 = arith.constant 0 : index
    %c0_17 = arith.constant 0 : index
    %21 = vector.load %arg7[%c0_16, %c0_17] : memref<64x1xf32, #tpu.memory_space<vmem>>, vector<64x1xf32>
    %22 = vector.broadcast %21 : vector<64x1xf32> to vector<64x256xf32>
    %23 = arith.addf %20, %22 : vector<64x256xf32>
    %cst_18 = arith.constant 0.000000e+00 : f32
    %24 = vector.broadcast %cst_18 : f32 to vector<64x256xf32>
    %25 = arith.maximumf %23, %24 : vector<64x256xf32>
    %26 = arith.addf %25, %1 : vector<64x256xf32>
    %c0_19 = arith.constant 0 : index
    %c0_20 = arith.constant 0 : index
    %c0_21 = arith.constant 0 : index
    %27 = vector.load %arg8[%c0_19, %c0_20, %c0_21] : memref<1x64x256xf32, #tpu.memory_space<vmem>>, vector<1x64x256xf32>
    %28 = vector.shape_cast %27 : vector<1x64x256xf32> to vector<64x256xf32>
    %29 = vector.shape_cast %26 : vector<64x256xf32> to vector<1x64x256xf32>
    tpu.vector_store %arg8[%c0_19, %c0_20, %c0_21], %29 {strides = array<i32>} : memref<1x64x256xf32, #tpu.memory_space<vmem>>, vector<1x64x256xf32>,
    return
  }
  func.func @transform_0(%arg0: i32) -> (i32, i32, i32) {
    %c0_i32 = arith.constant 0 : i32
    %c0_i32_0 = arith.constant 0 : i32
    %c0_i32_1 = arith.constant 0 : i32
    return %arg0, %c0_i32, %c0_i32_0 : i32, i32, i32
  }
  func.func @transform_1(%arg0: i32) -> (i32, i32) {
    %c0_i32 = arith.constant 0 : i32
    %c0_i32_0 = arith.constant 0 : i32
    %c0_i32_1 = arith.constant 0 : i32
    return %c0_i32, %c0_i32_0 : i32, i32
  }
  func.func @transform_2(%arg0: i32) -> (i32, i32) {
    %c0_i32 = arith.constant 0 : i32
    %c0_i32_0 = arith.constant 0 : i32
    %c0_i32_1 = arith.constant 0 : i32
    return %c0_i32, %c0_i32_0 : i32, i32
  }
  func.func @transform_3(%arg0: i32) -> (i32, i32) {
    %c0_i32 = arith.constant 0 : i32
    %c0_i32_0 = arith.constant 0 : i32
    %c0_i32_1 = arith.constant 0 : i32
    return %c0_i32, %c0_i32_0 : i32, i32
  }
  func.func @transform_4(%arg0: i32) -> (i32, i32) {
    %c0_i32 = arith.constant 0 : i32
    %c0_i32_0 = arith.constant 0 : i32
    %c0_i32_1 = arith.constant 0 : i32
    return %c0_i32, %c0_i32_0 : i32, i32
  }
  func.func @transform_5(%arg0: i32) -> (i32, i32) {
    %c0_i32 = arith.constant 0 : i32
    %c0_i32_0 = arith.constant 0 : i32
    %c0_i32_1 = arith.constant 0 : i32
    return %c0_i32, %c0_i32_0 : i32, i32
  }
  func.func @transform_6(%arg0: i32) -> (i32, i32) {
    %c0_i32 = arith.constant 0 : i32
    %c0_i32_0 = arith.constant 0 : i32
    %c0_i32_1 = arith.constant 0 : i32
    return %c0_i32, %c0_i32_0 : i32, i32
  }
  func.func @transform_7(%arg0: i32) -> (i32, i32, i32) {
    %c0_i32 = arith.constant 0 : i32
    %c0_i32_0 = arith.constant 0 : i32
    %c0_i32_1 = arith.constant 0 : i32
    return %arg0, %c0_i32, %c0_i32_0 : i32, i32, i32
  }
}

module attributes {stable_mosaic.version = 11 : i64} {
  func.func @_planes12_kernel(%arg0: i32, %arg1: memref<1x128x128xf32, #tpu.memory_space<vmem>>, %arg2: memref<1x128x128xf32, #tpu.memory_space<vmem>>, %arg3: memref<8x128xbf16, #tpu.memory_space<vmem>>, %arg4: memref<8x1xf32, #tpu.memory_space<vmem>>, %arg5: memref<8x8xbf16, #tpu.memory_space<vmem>>, %arg6: memref<8x1xf32, #tpu.memory_space<vmem>>, %arg7: memref<128x8xbf16, #tpu.memory_space<vmem>>, %arg8: memref<128x1xf32, #tpu.memory_space<vmem>>, %arg9: memref<8x128xbf16, #tpu.memory_space<vmem>>, %arg10: memref<8x1xf32, #tpu.memory_space<vmem>>, %arg11: memref<8x8xbf16, #tpu.memory_space<vmem>>, %arg12: memref<8x1xf32, #tpu.memory_space<vmem>>, %arg13: memref<128x8xbf16, #tpu.memory_space<vmem>>, %arg14: memref<128x1xf32, #tpu.memory_space<vmem>>, %arg15: memref<1x128x128xf32, #tpu.memory_space<vmem>>, %arg16: memref<1x128x128xf32, #tpu.memory_space<vmem>>) attributes {dimension_semantics = [#tpu.dimension_semantics<parallel>], iteration_bounds = array<i64: 2>, scalar_prefetch = 0 : i64, scratch_operands = 0 : i64, tpu.core_type = #tpu.core_type<tc>, window_params = [{transform_indices = @transform_0, window_bounds = array<i64: 1, 128, 128>}, {transform_indices = @transform_1, window_bounds = array<i64: 1, 128, 128>}, {pipeline_mode = #tpu.pipeline_mode<synchronous>, transform_indices = @transform_2, window_bounds = array<i64: 8, 128>}, {pipeline_mode = #tpu.pipeline_mode<synchronous>, transform_indices = @transform_3, window_bounds = array<i64: 8, 1>}, {pipeline_mode = #tpu.pipeline_mode<synchronous>, transform_indices = @transform_4, window_bounds = array<i64: 8, 8>}, {pipeline_mode = #tpu.pipeline_mode<synchronous>, transform_indices = @transform_5, window_bounds = array<i64: 8, 1>}, {pipeline_mode = #tpu.pipeline_mode<synchronous>, transform_indices = @transform_6, window_bounds = array<i64: 128, 8>}, {pipeline_mode = #tpu.pipeline_mode<synchronous>, transform_indices = @transform_7, window_bounds = array<i64: 128, 1>}, {pipeline_mode = #tpu.pipeline_mode<synchronous>, transform_indices = @transform_8, window_bounds = array<i64: 8, 128>}, {pipeline_mode = #tpu.pipeline_mode<synchronous>, transform_indices = @transform_9, window_bounds = array<i64: 8, 1>}, {pipeline_mode = #tpu.pipeline_mode<synchronous>, transform_indices = @transform_10, window_bounds = array<i64: 8, 8>}, {pipeline_mode = #tpu.pipeline_mode<synchronous>, transform_indices = @transform_11, window_bounds = array<i64: 8, 1>}, {pipeline_mode = #tpu.pipeline_mode<synchronous>, transform_indices = @transform_12, window_bounds = array<i64: 128, 8>}, {pipeline_mode = #tpu.pipeline_mode<synchronous>, transform_indices = @transform_13, window_bounds = array<i64: 128, 1>}, {transform_indices = @transform_14, window_bounds = array<i64: 1, 128, 128>}, {transform_indices = @transform_15, window_bounds = array<i64: 1, 128, 128>}]} {
    %c0 = arith.constant 0 : index
    %c0_0 = arith.constant 0 : index
    %c0_1 = arith.constant 0 : index
    %0 = vector.load %arg1[%c0, %c0_0, %c0_1] : memref<1x128x128xf32, #tpu.memory_space<vmem>>, vector<1x128x128xf32>
    %1 = vector.shape_cast %0 : vector<1x128x128xf32> to vector<128x128xf32>
    %2 = arith.truncf %1 : vector<128x128xf32> to vector<128x128xbf16>
    %c0_2 = arith.constant 0 : index
    %c0_3 = arith.constant 0 : index
    %3 = vector.load %arg3[%c0_2, %c0_3] : memref<8x128xbf16, #tpu.memory_space<vmem>>, vector<8x128xbf16>
    %cst = arith.constant dense<0.000000e+00> : vector<8x128xf32>
    %4 = tpu.matmul %3, %2, %cst {dimension_numbers = #tpu.dot_dimension_numbers<[1], [0], [0], [1], [0, 0, 1, 1], [], []>} : vector<8x128xbf16>, vector<128x128xbf16>, vector<8x128xf32> -> vector<8x128xf32>
    %c0_4 = arith.constant 0 : index
    %c0_5 = arith.constant 0 : index
    %5 = vector.load %arg4[%c0_4, %c0_5] : memref<8x1xf32, #tpu.memory_space<vmem>>, vector<8x1xf32>
    %6 = vector.broadcast %5 : vector<8x1xf32> to vector<8x128xf32>
    %7 = arith.addf %4, %6 : vector<8x128xf32>
    %cst_6 = arith.constant 0.000000e+00 : f32
    %8 = vector.broadcast %cst_6 : f32 to vector<8x128xf32>
    %9 = arith.maximumf %7, %8 : vector<8x128xf32>
    %10 = arith.truncf %9 : vector<8x128xf32> to vector<8x128xbf16>
    %c0_7 = arith.constant 0 : index
    %c0_8 = arith.constant 0 : index
    %11 = vector.load %arg5[%c0_7, %c0_8] : memref<8x8xbf16, #tpu.memory_space<vmem>>, vector<8x8xbf16>
    %cst_9 = arith.constant dense<0.000000e+00> : vector<8x128xf32>
    %12 = tpu.matmul %11, %10, %cst_9 {dimension_numbers = #tpu.dot_dimension_numbers<[1], [0], [0], [1], [0, 0, 1, 1], [], []>} : vector<8x8xbf16>, vector<8x128xbf16>, vector<8x128xf32> -> vector<8x128xf32>
    %c0_10 = arith.constant 0 : index
    %c0_11 = arith.constant 0 : index
    %13 = vector.load %arg6[%c0_10, %c0_11] : memref<8x1xf32, #tpu.memory_space<vmem>>, vector<8x1xf32>
    %14 = vector.broadcast %13 : vector<8x1xf32> to vector<8x128xf32>
    %15 = arith.addf %12, %14 : vector<8x128xf32>
    %cst_12 = arith.constant 0.000000e+00 : f32
    %16 = vector.broadcast %cst_12 : f32 to vector<8x128xf32>
    %17 = arith.maximumf %15, %16 : vector<8x128xf32>
    %18 = arith.truncf %17 : vector<8x128xf32> to vector<8x128xbf16>
    %c0_13 = arith.constant 0 : index
    %c0_14 = arith.constant 0 : index
    %19 = vector.load %arg7[%c0_13, %c0_14] : memref<128x8xbf16, #tpu.memory_space<vmem>>, vector<128x8xbf16>
    %cst_15 = arith.constant dense<0.000000e+00> : vector<128x128xf32>
    %20 = tpu.matmul %19, %18, %cst_15 {dimension_numbers = #tpu.dot_dimension_numbers<[1], [0], [0], [1], [0, 0, 1, 1], [], []>} : vector<128x8xbf16>, vector<8x128xbf16>, vector<128x128xf32> -> vector<128x128xf32>
    %c0_16 = arith.constant 0 : index
    %c0_17 = arith.constant 0 : index
    %21 = vector.load %arg8[%c0_16, %c0_17] : memref<128x1xf32, #tpu.memory_space<vmem>>, vector<128x1xf32>
    %22 = vector.broadcast %21 : vector<128x1xf32> to vector<128x128xf32>
    %23 = arith.addf %20, %22 : vector<128x128xf32>
    %cst_18 = arith.constant 0.000000e+00 : f32
    %24 = vector.broadcast %cst_18 : f32 to vector<128x128xf32>
    %25 = arith.maximumf %23, %24 : vector<128x128xf32>
    %c0_19 = arith.constant 0 : index
    %c0_20 = arith.constant 0 : index
    %c0_21 = arith.constant 0 : index
    %26 = vector.load %arg15[%c0_19, %c0_20, %c0_21] : memref<1x128x128xf32, #tpu.memory_space<vmem>>, vector<1x128x128xf32>
    %27 = vector.shape_cast %26 : vector<1x128x128xf32> to vector<128x128xf32>
    %28 = vector.shape_cast %25 : vector<128x128xf32> to vector<1x128x128xf32>
    tpu.vector_store %arg15[%c0_19, %c0_20, %c0_21], %28 {strides = array<i32>} : memref<1x128x128xf32, #tpu.memory_space<vmem>>, vector<1x128x128xf32>,
    %c0_22 = arith.constant 0 : index
    %c0_23 = arith.constant 0 : index
    %c0_24 = arith.constant 0 : index
    %29 = vector.load %arg2[%c0_22, %c0_23, %c0_24] : memref<1x128x128xf32, #tpu.memory_space<vmem>>, vector<1x128x128xf32>
    %30 = vector.shape_cast %29 : vector<1x128x128xf32> to vector<128x128xf32>
    %31 = arith.truncf %30 : vector<128x128xf32> to vector<128x128xbf16>
    %c0_25 = arith.constant 0 : index
    %c0_26 = arith.constant 0 : index
    %32 = vector.load %arg9[%c0_25, %c0_26] : memref<8x128xbf16, #tpu.memory_space<vmem>>, vector<8x128xbf16>
    %cst_27 = arith.constant dense<0.000000e+00> : vector<8x128xf32>
    %33 = tpu.matmul %32, %31, %cst_27 {dimension_numbers = #tpu.dot_dimension_numbers<[1], [0], [0], [1], [0, 0, 1, 1], [], []>} : vector<8x128xbf16>, vector<128x128xbf16>, vector<8x128xf32> -> vector<8x128xf32>
    %c0_28 = arith.constant 0 : index
    %c0_29 = arith.constant 0 : index
    %34 = vector.load %arg10[%c0_28, %c0_29] : memref<8x1xf32, #tpu.memory_space<vmem>>, vector<8x1xf32>
    %35 = vector.broadcast %34 : vector<8x1xf32> to vector<8x128xf32>
    %36 = arith.addf %33, %35 : vector<8x128xf32>
    %cst_30 = arith.constant 0.000000e+00 : f32
    %37 = vector.broadcast %cst_30 : f32 to vector<8x128xf32>
    %38 = arith.maximumf %36, %37 : vector<8x128xf32>
    %39 = arith.truncf %38 : vector<8x128xf32> to vector<8x128xbf16>
    %c0_31 = arith.constant 0 : index
    %c0_32 = arith.constant 0 : index
    %40 = vector.load %arg11[%c0_31, %c0_32] : memref<8x8xbf16, #tpu.memory_space<vmem>>, vector<8x8xbf16>
    %cst_33 = arith.constant dense<0.000000e+00> : vector<8x128xf32>
    %41 = tpu.matmul %40, %39, %cst_33 {dimension_numbers = #tpu.dot_dimension_numbers<[1], [0], [0], [1], [0, 0, 1, 1], [], []>} : vector<8x8xbf16>, vector<8x128xbf16>, vector<8x128xf32> -> vector<8x128xf32>
    %c0_34 = arith.constant 0 : index
    %c0_35 = arith.constant 0 : index
    %42 = vector.load %arg12[%c0_34, %c0_35] : memref<8x1xf32, #tpu.memory_space<vmem>>, vector<8x1xf32>
    %43 = vector.broadcast %42 : vector<8x1xf32> to vector<8x128xf32>
    %44 = arith.addf %41, %43 : vector<8x128xf32>
    %cst_36 = arith.constant 0.000000e+00 : f32
    %45 = vector.broadcast %cst_36 : f32 to vector<8x128xf32>
    %46 = arith.maximumf %44, %45 : vector<8x128xf32>
    %47 = arith.truncf %46 : vector<8x128xf32> to vector<8x128xbf16>
    %c0_37 = arith.constant 0 : index
    %c0_38 = arith.constant 0 : index
    %48 = vector.load %arg13[%c0_37, %c0_38] : memref<128x8xbf16, #tpu.memory_space<vmem>>, vector<128x8xbf16>
    %cst_39 = arith.constant dense<0.000000e+00> : vector<128x128xf32>
    %49 = tpu.matmul %48, %47, %cst_39 {dimension_numbers = #tpu.dot_dimension_numbers<[1], [0], [0], [1], [0, 0, 1, 1], [], []>} : vector<128x8xbf16>, vector<8x128xbf16>, vector<128x128xf32> -> vector<128x128xf32>
    %c0_40 = arith.constant 0 : index
    %c0_41 = arith.constant 0 : index
    %50 = vector.load %arg14[%c0_40, %c0_41] : memref<128x1xf32, #tpu.memory_space<vmem>>, vector<128x1xf32>
    %51 = vector.broadcast %50 : vector<128x1xf32> to vector<128x128xf32>
    %52 = arith.addf %49, %51 : vector<128x128xf32>
    %cst_42 = arith.constant 0.000000e+00 : f32
    %53 = vector.broadcast %cst_42 : f32 to vector<128x128xf32>
    %54 = arith.maximumf %52, %53 : vector<128x128xf32>
    %c0_43 = arith.constant 0 : index
    %c0_44 = arith.constant 0 : index
    %c0_45 = arith.constant 0 : index
    %55 = vector.load %arg16[%c0_43, %c0_44, %c0_45] : memref<1x128x128xf32, #tpu.memory_space<vmem>>, vector<1x128x128xf32>
    %56 = vector.shape_cast %55 : vector<1x128x128xf32> to vector<128x128xf32>
    %57 = vector.shape_cast %54 : vector<128x128xf32> to vector<1x128x128xf32>
    tpu.vector_store %arg16[%c0_43, %c0_44, %c0_45], %57 {strides = array<i32>} : memref<1x128x128xf32, #tpu.memory_space<vmem>>, vector<1x128x128xf32>,
    return
  }
  func.func @transform_0(%arg0: i32) -> (i32, i32, i32) {
    %c0_i32 = arith.constant 0 : i32
    %c0_i32_0 = arith.constant 0 : i32
    %c0_i32_1 = arith.constant 0 : i32
    return %arg0, %c0_i32, %c0_i32_0 : i32, i32, i32
  }
  func.func @transform_1(%arg0: i32) -> (i32, i32, i32) {
    %c0_i32 = arith.constant 0 : i32
    %c0_i32_0 = arith.constant 0 : i32
    %c0_i32_1 = arith.constant 0 : i32
    return %arg0, %c0_i32, %c0_i32_0 : i32, i32, i32
  }
  func.func @transform_2(%arg0: i32) -> (i32, i32) {
    %c0_i32 = arith.constant 0 : i32
    %c0_i32_0 = arith.constant 0 : i32
    %c0_i32_1 = arith.constant 0 : i32
    return %c0_i32, %c0_i32_0 : i32, i32
  }
  func.func @transform_3(%arg0: i32) -> (i32, i32) {
    %c0_i32 = arith.constant 0 : i32
    %c0_i32_0 = arith.constant 0 : i32
    %c0_i32_1 = arith.constant 0 : i32
    return %c0_i32, %c0_i32_0 : i32, i32
  }
  func.func @transform_4(%arg0: i32) -> (i32, i32) {
    %c0_i32 = arith.constant 0 : i32
    %c0_i32_0 = arith.constant 0 : i32
    %c0_i32_1 = arith.constant 0 : i32
    return %c0_i32, %c0_i32_0 : i32, i32
  }
  func.func @transform_5(%arg0: i32) -> (i32, i32) {
    %c0_i32 = arith.constant 0 : i32
    %c0_i32_0 = arith.constant 0 : i32
    %c0_i32_1 = arith.constant 0 : i32
    return %c0_i32, %c0_i32_0 : i32, i32
  }
  func.func @transform_6(%arg0: i32) -> (i32, i32) {
    %c0_i32 = arith.constant 0 : i32
    %c0_i32_0 = arith.constant 0 : i32
    %c0_i32_1 = arith.constant 0 : i32
    return %c0_i32, %c0_i32_0 : i32, i32
  }
  func.func @transform_7(%arg0: i32) -> (i32, i32) {
    %c0_i32 = arith.constant 0 : i32
    %c0_i32_0 = arith.constant 0 : i32
    %c0_i32_1 = arith.constant 0 : i32
    return %c0_i32, %c0_i32_0 : i32, i32
  }
  func.func @transform_8(%arg0: i32) -> (i32, i32) {
    %c0_i32 = arith.constant 0 : i32
    %c0_i32_0 = arith.constant 0 : i32
    %c0_i32_1 = arith.constant 0 : i32
    return %c0_i32, %c0_i32_0 : i32, i32
  }
  func.func @transform_9(%arg0: i32) -> (i32, i32) {
    %c0_i32 = arith.constant 0 : i32
    %c0_i32_0 = arith.constant 0 : i32
    %c0_i32_1 = arith.constant 0 : i32
    return %c0_i32, %c0_i32_0 : i32, i32
  }
  func.func @transform_10(%arg0: i32) -> (i32, i32) {
    %c0_i32 = arith.constant 0 : i32
    %c0_i32_0 = arith.constant 0 : i32
    %c0_i32_1 = arith.constant 0 : i32
    return %c0_i32, %c0_i32_0 : i32, i32
  }
  func.func @transform_11(%arg0: i32) -> (i32, i32) {
    %c0_i32 = arith.constant 0 : i32
    %c0_i32_0 = arith.constant 0 : i32
    %c0_i32_1 = arith.constant 0 : i32
    return %c0_i32, %c0_i32_0 : i32, i32
  }
  func.func @transform_12(%arg0: i32) -> (i32, i32) {
    %c0_i32 = arith.constant 0 : i32
    %c0_i32_0 = arith.constant 0 : i32
    %c0_i32_1 = arith.constant 0 : i32
    return %c0_i32, %c0_i32_0 : i32, i32
  }
  func.func @transform_13(%arg0: i32) -> (i32, i32) {
    %c0_i32 = arith.constant 0 : i32
    %c0_i32_0 = arith.constant 0 : i32
    %c0_i32_1 = arith.constant 0 : i32
    return %c0_i32, %c0_i32_0 : i32, i32
  }
  func.func @transform_14(%arg0: i32) -> (i32, i32, i32) {
    %c0_i32 = arith.constant 0 : i32
    %c0_i32_0 = arith.constant 0 : i32
    %c0_i32_1 = arith.constant 0 : i32
    return %arg0, %c0_i32, %c0_i32_0 : i32, i32, i32
  }
  func.func @transform_15(%arg0: i32) -> (i32, i32, i32) {
    %c0_i32 = arith.constant 0 : i32
    %c0_i32_0 = arith.constant 0 : i32
    %c0_i32_1 = arith.constant 0 : i32
    return %arg0, %c0_i32, %c0_i32_0 : i32, i32, i32
  }
}

module attributes {stable_mosaic.version = 11 : i64} {
  func.func @_fuse_kernel(%arg0: i32, %arg1: memref<1x8x2048xf32, #tpu.memory_space<vmem>>, %arg2: memref<1x8x2048xf32, #tpu.memory_space<vmem>>, %arg3: memref<1x8x2048xf32, #tpu.memory_space<vmem>>, %arg4: memref<8x8xbf16, #tpu.memory_space<vmem>>, %arg5: memref<8x8xbf16, #tpu.memory_space<vmem>>, %arg6: memref<8x1xf32, #tpu.memory_space<vmem>>, %arg7: memref<8x8xbf16, #tpu.memory_space<vmem>>, %arg8: memref<8x1xf32, #tpu.memory_space<vmem>>, %arg9: memref<1x8x2048xf32, #tpu.memory_space<vmem>>) attributes {dimension_semantics = [#tpu.dimension_semantics<parallel>], iteration_bounds = array<i64: 2>, scalar_prefetch = 0 : i64, scratch_operands = 0 : i64, tpu.core_type = #tpu.core_type<tc>, window_params = [{transform_indices = @transform_0, window_bounds = array<i64: 1, 8, 2048>}, {transform_indices = @transform_1, window_bounds = array<i64: 1, 8, 2048>}, {transform_indices = @transform_2, window_bounds = array<i64: 1, 8, 2048>}, {pipeline_mode = #tpu.pipeline_mode<synchronous>, transform_indices = @transform_3, window_bounds = array<i64: 8, 8>}, {pipeline_mode = #tpu.pipeline_mode<synchronous>, transform_indices = @transform_4, window_bounds = array<i64: 8, 8>}, {pipeline_mode = #tpu.pipeline_mode<synchronous>, transform_indices = @transform_5, window_bounds = array<i64: 8, 1>}, {pipeline_mode = #tpu.pipeline_mode<synchronous>, transform_indices = @transform_6, window_bounds = array<i64: 8, 8>}, {pipeline_mode = #tpu.pipeline_mode<synchronous>, transform_indices = @transform_7, window_bounds = array<i64: 8, 1>}, {transform_indices = @transform_8, window_bounds = array<i64: 1, 8, 2048>}]} {
    %c0 = arith.constant 0 : index
    %c0_0 = arith.constant 0 : index
    %0 = vector.load %arg4[%c0, %c0_0] : memref<8x8xbf16, #tpu.memory_space<vmem>>, vector<8x8xbf16>
    %c0_1 = arith.constant 0 : index
    %c0_2 = arith.constant 0 : index
    %c0_3 = arith.constant 0 : index
    %1 = vector.load %arg1[%c0_1, %c0_2, %c0_3] : memref<1x8x2048xf32, #tpu.memory_space<vmem>>, vector<1x8x2048xf32>
    %2 = vector.shape_cast %1 : vector<1x8x2048xf32> to vector<8x2048xf32>
    %3 = arith.truncf %2 : vector<8x2048xf32> to vector<8x2048xbf16>
    %cst = arith.constant dense<0.000000e+00> : vector<8x2048xf32>
    %4 = tpu.matmul %0, %3, %cst {dimension_numbers = #tpu.dot_dimension_numbers<[1], [0], [0], [1], [0, 0, 1, 1], [], []>} : vector<8x8xbf16>, vector<8x2048xbf16>, vector<8x2048xf32> -> vector<8x2048xf32>
    %c0_4 = arith.constant 0 : index
    %c0_5 = arith.constant 0 : index
    %5 = vector.load %arg5[%c0_4, %c0_5] : memref<8x8xbf16, #tpu.memory_space<vmem>>, vector<8x8xbf16>
    %c0_6 = arith.constant 0 : index
    %c0_7 = arith.constant 0 : index
    %c0_8 = arith.constant 0 : index
    %6 = vector.load %arg2[%c0_6, %c0_7, %c0_8] : memref<1x8x2048xf32, #tpu.memory_space<vmem>>, vector<1x8x2048xf32>
    %7 = vector.shape_cast %6 : vector<1x8x2048xf32> to vector<8x2048xf32>
    %8 = arith.truncf %7 : vector<8x2048xf32> to vector<8x2048xbf16>
    %cst_9 = arith.constant dense<0.000000e+00> : vector<8x2048xf32>
    %9 = tpu.matmul %5, %8, %cst_9 {dimension_numbers = #tpu.dot_dimension_numbers<[1], [0], [0], [1], [0, 0, 1, 1], [], []>} : vector<8x8xbf16>, vector<8x2048xbf16>, vector<8x2048xf32> -> vector<8x2048xf32>
    %10 = arith.addf %4, %9 : vector<8x2048xf32>
    %c0_10 = arith.constant 0 : index
    %c0_11 = arith.constant 0 : index
    %11 = vector.load %arg6[%c0_10, %c0_11] : memref<8x1xf32, #tpu.memory_space<vmem>>, vector<8x1xf32>
    %12 = vector.broadcast %11 : vector<8x1xf32> to vector<8x2048xf32>
    %13 = arith.addf %10, %12 : vector<8x2048xf32>
    %cst_12 = arith.constant 0.000000e+00 : f32
    %14 = vector.broadcast %cst_12 : f32 to vector<8x2048xf32>
    %15 = arith.maximumf %13, %14 : vector<8x2048xf32>
    %c0_13 = arith.constant 0 : index
    %c0_14 = arith.constant 0 : index
    %c0_15 = arith.constant 0 : index
    %16 = vector.load %arg3[%c0_13, %c0_14, %c0_15] : memref<1x8x2048xf32, #tpu.memory_space<vmem>>, vector<1x8x2048xf32>
    %17 = vector.shape_cast %16 : vector<1x8x2048xf32> to vector<8x2048xf32>
    %18 = arith.addf %15, %17 : vector<8x2048xf32>
    %19 = arith.truncf %18 : vector<8x2048xf32> to vector<8x2048xbf16>
    %c0_16 = arith.constant 0 : index
    %c0_17 = arith.constant 0 : index
    %20 = vector.load %arg7[%c0_16, %c0_17] : memref<8x8xbf16, #tpu.memory_space<vmem>>, vector<8x8xbf16>
    %cst_18 = arith.constant dense<0.000000e+00> : vector<8x2048xf32>
    %21 = tpu.matmul %20, %19, %cst_18 {dimension_numbers = #tpu.dot_dimension_numbers<[1], [0], [0], [1], [0, 0, 1, 1], [], []>} : vector<8x8xbf16>, vector<8x2048xbf16>, vector<8x2048xf32> -> vector<8x2048xf32>
    %c0_19 = arith.constant 0 : index
    %c0_20 = arith.constant 0 : index
    %22 = vector.load %arg8[%c0_19, %c0_20] : memref<8x1xf32, #tpu.memory_space<vmem>>, vector<8x1xf32>
    %23 = vector.broadcast %22 : vector<8x1xf32> to vector<8x2048xf32>
    %24 = arith.addf %21, %23 : vector<8x2048xf32>
    %cst_21 = arith.constant 0.000000e+00 : f32
    %25 = vector.broadcast %cst_21 : f32 to vector<8x2048xf32>
    %26 = arith.maximumf %24, %25 : vector<8x2048xf32>
    %c0_22 = arith.constant 0 : index
    %c0_23 = arith.constant 0 : index
    %c0_24 = arith.constant 0 : index
    %27 = vector.load %arg9[%c0_22, %c0_23, %c0_24] : memref<1x8x2048xf32, #tpu.memory_space<vmem>>, vector<1x8x2048xf32>
    %28 = vector.shape_cast %27 : vector<1x8x2048xf32> to vector<8x2048xf32>
    %29 = vector.shape_cast %26 : vector<8x2048xf32> to vector<1x8x2048xf32>
    tpu.vector_store %arg9[%c0_22, %c0_23, %c0_24], %29 {strides = array<i32>} : memref<1x8x2048xf32, #tpu.memory_space<vmem>>, vector<1x8x2048xf32>,
    return
  }
  func.func @transform_0(%arg0: i32) -> (i32, i32, i32) {
    %c0_i32 = arith.constant 0 : i32
    %c0_i32_0 = arith.constant 0 : i32
    %c0_i32_1 = arith.constant 0 : i32
    return %arg0, %c0_i32, %c0_i32_0 : i32, i32, i32
  }
  func.func @transform_1(%arg0: i32) -> (i32, i32, i32) {
    %c0_i32 = arith.constant 0 : i32
    %c0_i32_0 = arith.constant 0 : i32
    %c0_i32_1 = arith.constant 0 : i32
    return %arg0, %c0_i32, %c0_i32_0 : i32, i32, i32
  }
  func.func @transform_2(%arg0: i32) -> (i32, i32, i32) {
    %c0_i32 = arith.constant 0 : i32
    %c0_i32_0 = arith.constant 0 : i32
    %c0_i32_1 = arith.constant 0 : i32
    return %arg0, %c0_i32, %c0_i32_0 : i32, i32, i32
  }
  func.func @transform_3(%arg0: i32) -> (i32, i32) {
    %c0_i32 = arith.constant 0 : i32
    %c0_i32_0 = arith.constant 0 : i32
    %c0_i32_1 = arith.constant 0 : i32
    return %c0_i32, %c0_i32_0 : i32, i32
  }
  func.func @transform_4(%arg0: i32) -> (i32, i32) {
    %c0_i32 = arith.constant 0 : i32
    %c0_i32_0 = arith.constant 0 : i32
    %c0_i32_1 = arith.constant 0 : i32
    return %c0_i32, %c0_i32_0 : i32, i32
  }
  func.func @transform_5(%arg0: i32) -> (i32, i32) {
    %c0_i32 = arith.constant 0 : i32
    %c0_i32_0 = arith.constant 0 : i32
    %c0_i32_1 = arith.constant 0 : i32
    return %c0_i32, %c0_i32_0 : i32, i32
  }
  func.func @transform_6(%arg0: i32) -> (i32, i32) {
    %c0_i32 = arith.constant 0 : i32
    %c0_i32_0 = arith.constant 0 : i32
    %c0_i32_1 = arith.constant 0 : i32
    return %c0_i32, %c0_i32_0 : i32, i32
  }
  func.func @transform_7(%arg0: i32) -> (i32, i32) {
    %c0_i32 = arith.constant 0 : i32
    %c0_i32_0 = arith.constant 0 : i32
    %c0_i32_1 = arith.constant 0 : i32
    return %c0_i32, %c0_i32_0 : i32, i32
  }
  func.func @transform_8(%arg0: i32) -> (i32, i32, i32) {
    %c0_i32 = arith.constant 0 : i32
    %c0_i32_0 = arith.constant 0 : i32
    %c0_i32_1 = arith.constant 0 : i32
    return %arg0, %c0_i32, %c0_i32_0 : i32, i32, i32
  }
}

</mosaic_0001>

<llo_original>
// kernel: tri_res_v4_forward.3
$region0: #{tri_res_v4_forward.3}
  #allocation0 [shape = 'u32[]', space=smem, size = 0x4, offset = 0x4, fixed_abs, tag = 'smem constant byte address 0x4 - core index']
  #allocation1 [shape = 'u32[144,128]{1,0:T(1,128)}', space=vmem, size = 0x12000, scoped, tag = 'internal scratch']
  %s0 = inlined_call_operand.vmem [shape: f32[2,64,256], index: 0, kind: input, shape index: {}]
  %s1 = inlined_call_operand.vmem [shape: bf16[8,64], index: 1, kind: input, shape index: {}]
  %s2 = inlined_call_operand.vmem [shape: f32[8,1], index: 2, kind: input, shape index: {}]
  %s3 = inlined_call_operand.vmem [shape: bf16[8,8], index: 3, kind: input, shape index: {}]
  %s4 = inlined_call_operand.vmem [shape: f32[8,1], index: 4, kind: input, shape index: {}]
  %s5 = inlined_call_operand.vmem [shape: bf16[64,8], index: 5, kind: input, shape index: {}]
  %s6 = inlined_call_operand.vmem [shape: f32[64,1], index: 6, kind: input, shape index: {}]
  %s7 = inlined_call_operand.vmem [shape: f32[2,64,256], index: 7, kind: output, shape index: {}]
  %s8 = sld [smem:[#allocation0]]
  $region61: #{tri_res_v4_forward.3} parent=0
    _
  %s10 = ssub.s32 1, %s8
  %s11 = scalar_select 0, %s10, %s8
  loop: start=0, step=1, limit=4
  $region2: #{tri_res_v4_forward.3} parent=0 // loop_pre_header
    _
  $region3: #{tri_res_v4_forward.3} parent=0 // loop_header
    %s13 = sphi 0, %s17
    %p14 = scmp.ge.s32.totalorder %s13, 4
    %s23 = sphi 0, %s25
    %s26 = sphi 0, %s23
    %s27 = sphi 0, %s26
    %s43 = sphi 0, %s27
    %s47 = sphi 0, %s47
    %s49 = sphi 0, %s47
    %s50 = sphi 0, %s49
    %s64 = sphi 0, %s50
    %s68 = sphi 0, %s68
    %s70 = sphi 0, %s68
    %s71 = sphi 0, %s70
    %s85 = sphi 0, %s71
    %s89 = sphi 0, %s89
    %s91 = sphi 0, %s89
    %s92 = sphi 0, %s91
    %s106 = sphi 0, %s92
    %s110 = sphi 0, %s110
    %s112 = sphi 0, %s110
    %s113 = sphi 0, %s112
    %s127 = sphi 0, %s113
    %s131 = sphi 0, %s131
    %s133 = sphi 0, %s131
    %s134 = sphi 0, %s133
    %s148 = sphi 0, %s134
    %s152 = sphi 0, %s152
    %s154 = sphi 0, %s152
    %s155 = sphi 0, %s154
    %s169 = sphi 0, %s155
    %s175 = sphi 0, %s177
    %s178 = sphi 0, %s175
    %s179 = sphi 0, %s178
    %s195 = sphi 0, %s179
  $region4: #{tri_res_v4_forward.3} parent=0 // loop_header_branch
    %16 = sbr.rel (%p14) target = $region8
  $region5: #{tri_res_v4_forward.3} parent=0 // loop_body
    %s18 = ssub.s32 %s13, 1
    %s19 = ssub.s32 %s13, 2
    %s20 = sadd.s32 %s13, 1
    %s21 = ssub.s32 %s13, %s20
    %p22 = scmp.eq.s32.totalorder %s21, 0
    %s24 = sadd.s32 %s23, 1
    %s25 = scalar_select %p22, %s23, %s24
    %p28 = pneg %p22
    %p29 = scmp.eq.s32.totalorder %s13, 1
    %p30 = por %p28, %p29
    %p31 = scmp.ne.s32.totalorder %s23, %s26
    %p32 = scmp.eq.s32.totalorder %s13, 0
    %p33 = por %p31, %p32
    %p34 = scmp.ne.s32.totalorder %s23, %s26
    %p35 = scmp.eq.s32.totalorder %s18, 1
    %p36 = por %p34, %p35
    %p37 = scmp.ne.s32.totalorder %s26, %s27
    %p38 = scmp.eq.s32.totalorder %s18, 0
    %p39 = por %p37, %p38
    %p40 = scmp.ne.s32.totalorder %s26, %s27
    %p41 = scmp.eq.s32.totalorder %s19, 1
    %p42 = por %p40, %p41
    %p44 = scmp.ne.s32.totalorder %s27, %s43
    %p45 = scmp.eq.s32.totalorder %s19, 0
    %p46 = por %p44, %p45
    %s48 = sadd.s32 %s47, 1
    %p51 = scmp.eq.s32.totalorder %s13, 1
    %p52 = scmp.ne.s32.totalorder %s47, %s49
    %p53 = scmp.eq.s32.totalorder %s13, 0
    %p54 = por %p52, %p53
    %p55 = scmp.ne.s32.totalorder %s47, %s49
    %p56 = scmp.eq.s32.totalorder %s18, 1
    %p57 = por %p55, %p56
    %p58 = scmp.ne.s32.totalorder %s49, %s50
    %p59 = scmp.eq.s32.totalorder %s18, 0
    %p60 = por %p58, %p59
    %p61 = scmp.ne.s32.totalorder %s49, %s50
    %p62 = scmp.eq.s32.totalorder %s19, 1
    %p63 = por %p61, %p62
    %p65 = scmp.ne.s32.totalorder %s50, %s64
    %p66 = scmp.eq.s32.totalorder %s19, 0
    %p67 = por %p65, %p66
    %s69 = sadd.s32 %s68, 1
    %p72 = scmp.eq.s32.totalorder %s13, 1
    %p73 = scmp.ne.s32.totalorder %s68, %s70
    %p74 = scmp.eq.s32.totalorder %s13, 0
    %p75 = por %p73, %p74
    %p76 = scmp.ne.s32.totalorder %s68, %s70
    %p77 = scmp.eq.s32.totalorder %s18, 1
    %p78 = por %p76, %p77
    %p79 = scmp.ne.s32.totalorder %s70, %s71
    %p80 = scmp.eq.s32.totalorder %s18, 0
    %p81 = por %p79, %p80
    %p82 = scmp.ne.s32.totalorder %s70, %s71
    %p83 = scmp.eq.s32.totalorder %s19, 1
    %p84 = por %p82, %p83
    %p86 = scmp.ne.s32.totalorder %s71, %s85
    %p87 = scmp.eq.s32.totalorder %s19, 0
    %p88 = por %p86, %p87
    %s90 = sadd.s32 %s89, 1
    %p93 = scmp.eq.s32.totalorder %s13, 1
    %p94 = scmp.ne.s32.totalorder %s89, %s91
    %p95 = scmp.eq.s32.totalorder %s13, 0
    %p96 = por %p94, %p95
    %p97 = scmp.ne.s32.totalorder %s89, %s91
    %p98 = scmp.eq.s32.totalorder %s18, 1
    %p99 = por %p97, %p98
    %p100 = scmp.ne.s32.totalorder %s91, %s92
    %p101 = scmp.eq.s32.totalorder %s18, 0
    %p102 = por %p100, %p101
    %p103 = scmp.ne.s32.totalorder %s91, %s92
    %p104 = scmp.eq.s32.totalorder %s19, 1
    %p105 = por %p103, %p104
    %p107 = scmp.ne.s32.totalorder %s92, %s106
    %p108 = scmp.eq.s32.totalorder %s19, 0
    %p109 = por %p107, %p108
    %s111 = sadd.s32 %s110, 1
    %p114 = scmp.eq.s32.totalorder %s13, 1
    %p115 = scmp.ne.s32.totalorder %s110, %s112
    %p116 = scmp.eq.s32.totalorder %s13, 0
    %p117 = por %p115, %p116
    %p118 = scmp.ne.s32.totalorder %s110, %s112
    %p119 = scmp.eq.s32.totalorder %s18, 1
    %p120 = por %p118, %p119
    %p121 = scmp.ne.s32.totalorder %s112, %s113
    %p122 = scmp.eq.s32.totalorder %s18, 0
    %p123 = por %p121, %p122
    %p124 = scmp.ne.s32.totalorder %s112, %s113
    %p125 = scmp.eq.s32.totalorder %s19, 1
    %p126 = por %p124, %p125
    %p128 = scmp.ne.s32.totalorder %s113, %s127
    %p129 = scmp.eq.s32.totalorder %s19, 0
    %p130 = por %p128, %p129
    %s132 = sadd.s32 %s131, 1
    %p135 = scmp.eq.s32.totalorder %s13, 1
    %p136 = scmp.ne.s32.totalorder %s131, %s133
    %p137 = scmp.eq.s32.totalorder %s13, 0
    %p138 = por %p136, %p137
    %p139 = scmp.ne.s32.totalorder %s131, %s133
    %p140 = scmp.eq.s32.totalorder %s18, 1
    %p141 = por %p139, %p140
    %p142 = scmp.ne.s32.totalorder %s133, %s134
    %p143 = scmp.eq.s32.totalorder %s18, 0
    %p144 = por %p142, %p143
    %p145 = scmp.ne.s32.totalorder %s133, %s134
    %p146 = scmp.eq.s32.totalorder %s19, 1
    %p147 = por %p145, %p146
    %p149 = scmp.ne.s32.totalorder %s134, %s148
    %p150 = scmp.eq.s32.totalorder %s19, 0
    %p151 = por %p149, %p150
    %s153 = sadd.s32 %s152, 1
    %p156 = scmp.eq.s32.totalorder %s13, 1
    %p157 = scmp.ne.s32.totalorder %s152, %s154
    %p158 = scmp.eq.s32.totalorder %s13, 0
    %p159 = por %p157, %p158
    %p160 = scmp.ne.s32.totalorder %s152, %s154
    %p161 = scmp.eq.s32.totalorder %s18, 1
    %p162 = por %p160, %p161
    %p163 = scmp.ne.s32.totalorder %s154, %s155
    %p164 = scmp.eq.s32.totalorder %s18, 0
    %p165 = por %p163, %p164
    %p166 = scmp.ne.s32.totalorder %s154, %s155
    %p167 = scmp.eq.s32.totalorder %s19, 1
    %p168 = por %p166, %p167
    %p170 = scmp.ne.s32.totalorder %s155, %s169
    %p171 = scmp.eq.s32.totalorder %s19, 0
    %p172 = por %p170, %p171
    %s173 = ssub.s32 %s13, %s20
    %p174 = scmp.eq.s32.totalorder %s173, 0
    %s176 = sadd.s32 %s175, 1
    %s177 = scalar_select %p174, %s175, %s176
    %p180 = pneg %p174
    %p181 = scmp.eq.s32.totalorder %s13, 1
    %p182 = por %p180, %p181
    %p183 = scmp.ne.s32.totalorder %s175, %s178
    %p184 = scmp.eq.s32.totalorder %s13, 0
    %p185 = por %p183, %p184
    %p186 = scmp.ne.s32.totalorder %s175, %s178
    %p187 = scmp.eq.s32.totalorder %s18, 1
    %p188 = por %p186, %p187
    %p189 = scmp.ne.s32.totalorder %s178, %s179
    %p190 = scmp.eq.s32.totalorder %s18, 0
    %p191 = por %p189, %p190
    %p192 = scmp.ne.s32.totalorder %s178, %s179
    %p193 = scmp.eq.s32.totalorder %s19, 1
    %p194 = por %p192, %p193
    %p196 = scmp.ne.s32.totalorder %s179, %s195
    %p197 = scmp.eq.s32.totalorder %s19, 0
    %p198 = por %p196, %p197
    %p199 = scmp.le.s32.totalorder 1, %s13
    %p200 = scmp.lt.s32.totalorder %s13, 3
    %p201 = pnand %p199, %p200
    %p202 = pneg %p201
    // Predicated region
    $region9: #{tri_res_v4_forward.3} parent=5 // pred_check
      _
    $region10: #{tri_res_v4_forward.3} parent=5 // pred_check_branch
      %204 = sbr.rel (%p201) target = $region12
    $region11: #{tri_res_v4_forward.3} parent=5 // pred_region
      %s205 = ssub.s32 %s13, 1
      // Predicated region
      $region13: #{tri_res_v4_forward.3} parent=11 // pred_check
        %p206 = pneg %p60
      $region14: #{tri_res_v4_forward.3} parent=11 // pred_check_branch
        %208 = sbr.rel (%p206) target = $region16
      $region15: #{tri_res_v4_forward.3} parent=11 // pred_region
        _
      $region16: #{tri_res_v4_forward.3} parent=11 // pred_fallthru
        _
      // Predicated region
      $region17: #{tri_res_v4_forward.3} parent=11 // pred_check
        %p209 = pneg %p81
      $region18: #{tri_res_v4_forward.3} parent=11 // pred_check_branch
        %211 = sbr.rel (%p209) target = $region20
      $region19: #{tri_res_v4_forward.3} parent=11 // pred_region
        _
      $region20: #{tri_res_v4_forward.3} parent=11 // pred_fallthru
        _
      // Predicated region
      $region21: #{tri_res_v4_forward.3} parent=11 // pred_check
        %p212 = pneg %p102
      $region22: #{tri_res_v4_forward.3} parent=11 // pred_check_branch
        %214 = sbr.rel (%p212) target = $region24
      $region23: #{tri_res_v4_forward.3} parent=11 // pred_region
        _
      $region24: #{tri_res_v4_forward.3} parent=11 // pred_fallthru
        _
      // Predicated region
      $region25: #{tri_res_v4_forward.3} parent=11 // pred_check
        %p215 = pneg %p123
      $region26: #{tri_res_v4_forward.3} parent=11 // pred_check_branch
        %217 = sbr.rel (%p215) target = $region28
      $region27: #{tri_res_v4_forward.3} parent=11 // pred_region
        _
      $region28: #{tri_res_v4_forward.3} parent=11 // pred_fallthru
        _
      // Predicated region
      $region29: #{tri_res_v4_forward.3} parent=11 // pred_check
        %p218 = pneg %p144
      $region30: #{tri_res_v4_forward.3} parent=11 // pred_check_branch
        %220 = sbr.rel (%p218) target = $region32
      $region31: #{tri_res_v4_forward.3} parent=11 // pred_region
        _
      $region32: #{tri_res_v4_forward.3} parent=11 // pred_fallthru
        _
      // Predicated region
      $region33: #{tri_res_v4_forward.3} parent=11 // pred_check
        %p221 = pneg %p165
      $region34: #{tri_res_v4_forward.3} parent=11 // pred_check_branch
        %223 = sbr.rel (%p221) target = $region36
      $region35: #{tri_res_v4_forward.3} parent=11 // pred_region
        _
      $region36: #{tri_res_v4_forward.3} parent=11 // pred_fallthru
        _
    $region12: #{tri_res_v4_forward.3} parent=5 // pred_fallthru
      _
    %p224 = scmp.lt.s32.totalorder %s13, 2
    // Predicated region
    $region37: #{tri_res_v4_forward.3} parent=5 // pred_check
      %p225 = pneg %p224
    $region38: #{tri_res_v4_forward.3} parent=5 // pred_check_branch
      %227 = sbr.rel (%p225) target = $region40
    $region39: #{tri_res_v4_forward.3} parent=5 // pred_region
      // Predicated region
      $region41: #{tri_res_v4_forward.3} parent=39 // pred_check
        %p228 = pneg %p33
      $region42: #{tri_res_v4_forward.3} parent=39 // pred_check_branch
        %230 = sbr.rel (%p228) target = $region44
      $region43: #{tri_res_v4_forward.3} parent=39 // pred_region
        %p231 = scmp.lt.s32.totalorder %s13, 1
        %s232 = scalar_select %p231, %s13, 1
        %s233 = smul.addr %s232, 16
        %s234 = smul.addr %s233, 8
        %s235 = scalar_lea.vmem %s0, %s234
      $region44: #{tri_res_v4_forward.3} parent=39 // pred_fallthru
        _
    $region40: #{tri_res_v4_forward.3} parent=5 // pred_fallthru
      _
    %p236 = scmp.le.s32.totalorder 1, %s13
    %p237 = scmp.lt.s32.totalorder %s13, 3
    %p238 = pnand %p236, %p237
    %p239 = pneg %p238
    // Predicated region
    $region45: #{tri_res_v4_forward.3} parent=5 // pred_check
      _
    $region46: #{tri_res_v4_forward.3} parent=5 // pred_check_branch
      %241 = sbr.rel (%p238) target = $region48
    $region47: #{tri_res_v4_forward.3} parent=5 // pred_region
      %s242 = ssub.s32 %s13, 1
      %p243 = scmp.lt.s32.totalorder %s18, 1
      %s244 = scalar_select %p243, %s18, 1
      %s245 = smul.addr %s244, 16
      %s246 = smul.addr %s245, 8
      %s247 = scalar_lea.vmem %s0, %s246
      %p248 = pneg %p39
      %p249 = pneg %p36
      %p250 = pneg %p60
      %p251 = pneg %p57
      %p252 = pneg %p81
      %p253 = pneg %p78
      %p254 = pneg %p102
      %p255 = pneg %p99
      %p256 = pneg %p123
      %p257 = pneg %p120
      %p258 = pneg %p144
      %p259 = pneg %p141
      %p260 = pneg %p165
      %p261 = pneg %p162
      %p262 = pneg %p191
      %p263 = pneg %p188
      %p264 = scmp.lt.s32.totalorder %s18, 1
      %s265 = scalar_select %p264, %s18, 1
      %s266 = smul.addr %s265, 16
      %s267 = smul.addr %s266, 8
      %s268 = scalar_lea.vmem %s7, %s267
      %p269 = scmp.lt.s32.totalorder %s18, 1
      %s270 = scalar_select %p269, %s18, 1
      %s271 = smul.addr %s270, 16
      %s272 = smul.addr %s271, 8
      %s273 = scalar_lea.vmem %s0, %s272
      %p274 = scmp.lt.s32.totalorder %s18, 1
      %s275 = scalar_select %p274, %s18, 1
      %s276 = smul.addr %s275, 16
      %s277 = smul.addr %s276, 8
      %s278 = scalar_lea.vmem %s7, %s277
      %v280 = vld [vmem:[%s273] sm:$0xff]
      %v281 = vld [vmem:[%s273 + $0x8] sm:$0xff]
      %v282 = vld [vmem:[%s273 + $0x10] sm:$0xff]
      %v283 = vld [vmem:[%s273 + $0x18] sm:$0xff]
      %v284 = vld [vmem:[%s273 + $0x20] sm:$0xff]
      %v285 = vld [vmem:[%s273 + $0x28] sm:$0xff]
      %v286 = vld [vmem:[%s273 + $0x30] sm:$0xff]
      %v287 = vld [vmem:[%s273 + $0x38] sm:$0xff]
      %v288 = vld [vmem:[%s273 + $0x40] sm:$0xff]
      %v289 = vld [vmem:[%s273 + $0x48] sm:$0xff]
      %v290 = vld [vmem:[%s273 + $0x50] sm:$0xff]
      %v291 = vld [vmem:[%s273 + $0x58] sm:$0xff]
      %v292 = vld [vmem:[%s273 + $0x60] sm:$0xff]
      %v293 = vld [vmem:[%s273 + $0x68] sm:$0xff]
      %v294 = vld [vmem:[%s273 + $0x70] sm:$0xff]
      %v295 = vld [vmem:[%s273 + $0x78] sm:$0xff]
      %v296 = vpack.c.bf16 %v282, %v280
      %v297 = vpack.c.bf16 %v283, %v281
      %v298 = vpack.c.bf16 %v286, %v284
      %v299 = vpack.c.bf16 %v287, %v285
      %v300 = vpack.c.bf16 %v290, %v288
      %v301 = vpack.c.bf16 %v291, %v289
      %v302 = vpack.c.bf16 %v294, %v292
      %v303 = vpack.c.bf16 %v295, %v293
      %v304 = vld [vmem:[%s1] sm:$0xf]
      %v305 = vld [vmem:[%s2] sm:$0xff]
      %307 = vset.pattern.permute.xlu0 0
      %308 = vperm.xlu0 %307, %v305
      %v309 = vpop.permute.xlu0 %308
      %vm311 = vcmask 523264
      %v313 = vsel %vm311, %v304, 0
      %315 = vmatprep.subr.bf16.mxu0 %v297
      %316 = vmatpush1.bf16.msra.mxu0 %v296
      %317 = vmatprep.subr.bf16.mxu0 %v299
      %318 = vmatpush1.bf16.msra.mxu0 %v298
      %319 = vmatprep.subr.bf16.mxu0 %v301
      %320 = vmatpush1.bf16.msra.mxu0 %v300
      %321 = vmatprep.subr.bf16.mxu0 %v303
      %322 = vmatpush1.bf16.msra.mxu0 %v302
      %323 = vmatprep.subr.bf16.mxu0 0
      %324 = vmatpush1.bf16.msra.mxu0 0
      %325 = vmatprep.subr.bf16.mxu0 0
      %326 = vmatpush1.bf16.msra.mxu0 0
      %327 = vmatprep.subr.bf16.mxu0 0
      %328 = vmatpush1.bf16.msra.mxu0 0
      %329 = vmatprep.subr.bf16.mxu0 0
      %330 = vmatpush1.bf16.msra.mxu0 0
      %331 = vmatprep.subr.bf16.mxu0 0
      %332 = vmatpush1.bf16.msra.mxu0 0
      %333 = vmatprep.subr.bf16.mxu0 0
      %334 = vmatpush1.bf16.msra.mxu0 0
      %335 = vmatprep.subr.bf16.mxu0 0
      %336 = vmatpush1.bf16.msra.mxu0 0
      %337 = vmatprep.subr.bf16.mxu0 0
      %338 = vmatpush1.bf16.msra.mxu0 0
      %339 = vmatprep.subr.bf16.mxu0 0
      %340 = vmatpush1.bf16.msra.mxu0 0
      %341 = vmatprep.subr.bf16.mxu0 0
      %342 = vmatpush1.bf16.msra.mxu0 0
      %343 = vmatprep.subr.bf16.mxu0 0
      %344 = vmatpush1.bf16.msra.mxu0 0
      %345 = vmatprep.subr.bf16.mxu0 0
      %346 = vmatpush1.bf16.msra.mxu0 0
      %347 = vmatprep.mubr.bf16.mxu0 0
      %348 = vmatmul.mubr.bf16.gmra.mrb[0].mxu0 %v313
      %v349 = vpop.f32.mrb[0].mxu0
      %v350 = vadd.f32 %v309, %v349
      %v351 = vpop.f32.mrb[0].mxu0
      %v352 = vadd.f32 %v309, %v351
      %v353 = vpop.f32.mrb[0].mxu0
      %v354 = vpop.f32.mrb[0].mxu0
      %355 = vdwg.mxu0
      %v356 = vmax.f32 %v350, 0.0
      %v357 = vmax.f32 %v352, 0.0
      %v358 = vpack.c.bf16 %v356, %v356
      %v359 = vpack.c.bf16 %v357, %v357
      %v360 = vld [vmem:[%s3] sm:$0xf]
      %v361 = vld [vmem:[%s4] sm:$0xff]
      %363 = vset.pattern.permute.xlu0 0
      %364 = vperm.xlu0 %363, %v361
      %v365 = vpop.permute.xlu0 %364
      %vm367 = vcmask 64512
      %v369 = vsel %vm367, %v360, 0
      %vm371 = vcmask 1043456
      %v373 = vsel %vm371, %v358, 0
      %v376 = vsel %vm371, %v359, 0
      %378 = vmatprep.subr.bf16.mxu0 %v376
      %379 = vmatpush1.bf16.msra.mxu0 %v373
      %380 = vmatprep.subr.bf16.mxu0 0
      %381 = vmatpush1.bf16.msra.mxu0 0
      %382 = vmatprep.subr.bf16.mxu0 0
      %383 = vmatpush1.bf16.msra.mxu0 0
      %384 = vmatprep.subr.bf16.mxu0 0
      %385 = vmatpush1.bf16.msra.mxu0 0
      %386 = vmatprep.subr.bf16.mxu0 0
      %387 = vmatpush1.bf16.msra.mxu0 0
      %388 = vmatprep.subr.bf16.mxu0 0
      %389 = vmatpush1.bf16.msra.mxu0 0
      %390 = vmatprep.subr.bf16.mxu0 0
      %391 = vmatpush1.bf16.msra.mxu0 0
      %392 = vmatprep.subr.bf16.mxu0 0
      %393 = vmatpush1.bf16.msra.mxu0 0
      %394 = vmatprep.subr.bf16.mxu0 0
      %395 = vmatpush1.bf16.msra.mxu0 0
      %396 = vmatprep.subr.bf16.mxu0 0
      %397 = vmatpush1.bf16.msra.mxu0 0
      %398 = vmatprep.subr.bf16.mxu0 0
      %399 = vmatpush1.bf16.msra.mxu0 0
      %400 = vmatprep.subr.bf16.mxu0 0
      %401 = vmatpush1.bf16.msra.mxu0 0
      %402 = vmatprep.subr.bf16.mxu0 0
      %403 = vmatpush1.bf16.msra.mxu0 0
      %404 = vmatprep.subr.bf16.mxu0 0
      %405 = vmatpush1.bf16.msra.mxu0 0
      %406 = vmatprep.subr.bf16.mxu0 0
      %407 = vmatpush1.bf16.msra.mxu0 0
      %408 = vmatprep.subr.bf16.mxu0 0
      %409 = vmatpush1.bf16.msra.mxu0 0
      %410 = vmatprep.mubr.bf16.mxu0 0
      %411 = vmatmul.mubr.bf16.gmra.mrb[0].mxu0 %v369
      %v412 = vpop.f32.mrb[0].mxu0
      %v413 = vadd.f32 %v365, %v412
      %v414 = vpop.f32.mrb[0].mxu0
      %v415 = vadd.f32 %v365, %v414
      %v416 = vpop.f32.mrb[0].mxu0
      %v417 = vpop.f32.mrb[0].mxu0
      %418 = vdwg.mxu0
      %v419 = vmax.f32 %v413, 0.0
      %v420 = vmax.f32 %v415, 0.0
      %v421 = vpack.c.bf16 %v419, %v419
      %v422 = vpack.c.bf16 %v420, %v420
      %v423 = vld [vmem:[%s5] sm:$0xf]
      %v424 = vld [vmem:[%s5 + $0x4] sm:$0xf]
      %v425 = vld [vmem:[%s5 + $0x8] sm:$0xf]
      %v426 = vld [vmem:[%s5 + $0xc] sm:$0xf]
      %v427 = vld [vmem:[%s5 + $0x10] sm:$0xf]
      %v428 = vld [vmem:[%s5 + $0x14] sm:$0xf]
      %v429 = vld [vmem:[%s5 + $0x18] sm:$0xf]
      %v430 = vld [vmem:[%s5 + $0x1c] sm:$0xf]
      %v431 = vld [vmem:[%s6] sm:$0xff]
      %v432 = vld [vmem:[%s6 + $0x8] sm:$0xff]
      %v433 = vld [vmem:[%s6 + $0x10] sm:$0xff]
      %v434 = vld [vmem:[%s6 + $0x18] sm:$0xff]
      %v435 = vld [vmem:[%s6 + $0x20] sm:$0xff]
      %v436 = vld [vmem:[%s6 + $0x28] sm:$0xff]
      %v437 = vld [vmem:[%s6 + $0x30] sm:$0xff]
      %v438 = vld [vmem:[%s6 + $0x38] sm:$0xff]
      %440 = vset.pattern.permute.xlu0 0
      %441 = vperm.xlu0 %440, %v431
      %v442 = vpop.permute.xlu0 %441
      %445 = vset.pattern.permute.xlu0 0
      %446 = vperm.xlu0 %445, %v432
      %v447 = vpop.permute.xlu0 %446
      %450 = vset.pattern.permute.xlu0 0
      %451 = vperm.xlu0 %450, %v433
      %v452 = vpop.permute.xlu0 %451
      %455 = vset.pattern.permute.xlu0 0
      %456 = vperm.xlu0 %455, %v434
      %v457 = vpop.permute.xlu0 %456
      %460 = vset.pattern.permute.xlu0 0
      %461 = vperm.xlu0 %460, %v435
      %v462 = vpop.permute.xlu0 %461
      %465 = vset.pattern.permute.xlu0 0
      %466 = vperm.xlu0 %465, %v436
      %v467 = vpop.permute.xlu0 %466
      %470 = vset.pattern.permute.xlu0 0
      %471 = vperm.xlu0 %470, %v437
      %v472 = vpop.permute.xlu0 %471
      %475 = vset.pattern.permute.xlu0 0
      %476 = vperm.xlu0 %475, %v438
      %v477 = vpop.permute.xlu0 %476
      %v487 = vunpack.c.l.b16 %v423
      %v488 = vunpack.c.l.b16 %v424
      %v489 = vunpack.c.l.b16 %v425
      %v490 = vunpack.c.l.b16 %v426
      %v491 = vunpack.c.l.b16 %v427
      %v492 = vunpack.c.l.b16 %v428
      %v493 = vunpack.c.l.b16 %v429
      %v494 = vunpack.c.l.b16 %v430
      %v495 = vpack.c.b16 %v488, %v487
      %v496 = vpack.c.b16 %v490, %v489
      %v497 = vpack.c.b16 %v492, %v491
      %v498 = vpack.c.b16 %v494, %v493
      %v500 = vsel %vm367, %v495, 0
      %v503 = vsel %vm367, %v496, 0
      %v506 = vsel %vm367, %v497, 0
      %v509 = vsel %vm367, %v498, 0
      %v512 = vsel %vm371, %v421, 0
      %v515 = vsel %vm371, %v422, 0
      %517 = vmatprep.subr.bf16.mxu0 %v515
      %518 = vmatpush1.bf16.msra.mxu0 %v512
      %519 = vmatprep.subr.bf16.mxu0 0
      %520 = vmatpush1.bf16.msra.mxu0 0
      %521 = vmatprep.subr.bf16.mxu0 0
      %522 = vmatpush1.bf16.msra.mxu0 0
      %523 = vmatprep.subr.bf16.mxu0 0
      %524 = vmatpush1.bf16.msra.mxu0 0
      %525 = vmatprep.subr.bf16.mxu0 0
      %526 = vmatpush1.bf16.msra.mxu0 0
      %527 = vmatprep.subr.bf16.mxu0 0
      %528 = vmatpush1.bf16.msra.mxu0 0
      %529 = vmatprep.subr.bf16.mxu0 0
      %530 = vmatpush1.bf16.msra.mxu0 0
      %531 = vmatprep.subr.bf16.mxu0 0
      %532 = vmatpush1.bf16.msra.mxu0 0
      %533 = vmatprep.subr.bf16.mxu0 0
      %534 = vmatpush1.bf16.msra.mxu0 0
      %535 = vmatprep.subr.bf16.mxu0 0
      %536 = vmatpush1.bf16.msra.mxu0 0
      %537 = vmatprep.subr.bf16.mxu0 0
      %538 = vmatpush1.bf16.msra.mxu0 0
      %539 = vmatprep.subr.bf16.mxu0 0
      %540 = vmatpush1.bf16.msra.mxu0 0
      %541 = vmatprep.subr.bf16.mxu0 0
      %542 = vmatpush1.bf16.msra.mxu0 0
      %543 = vmatprep.subr.bf16.mxu0 0
      %544 = vmatpush1.bf16.msra.mxu0 0
      %545 = vmatprep.subr.bf16.mxu0 0
      %546 = vmatpush1.bf16.msra.mxu0 0
      %547 = vmatprep.subr.bf16.mxu0 0
      %548 = vmatpush1.bf16.msra.mxu0 0
      %549 = vmatprep.mubr.bf16.mxu0 0
      %550 = vmatmul.mubr.bf16.gmra.mrb[0].mxu0 %v500
      %v551 = vpop.f32.mrb[0].mxu0
      %v552 = vadd.f32 %v442, %v551
      %v553 = vpop.f32.mrb[0].mxu0
      %v554 = vadd.f32 %v442, %v553
      %v555 = vpop.f32.mrb[0].mxu0
      %v556 = vadd.f32 %v447, %v555
      %v557 = vpop.f32.mrb[0].mxu0
      %v558 = vadd.f32 %v447, %v557
      %559 = vmatprep.mubr.bf16.mxu0 0
      %560 = vmatmul.mubr.bf16.gmra.mrb[0].mxu0 %v503
      %v561 = vpop.f32.mrb[0].mxu0
      %v562 = vadd.f32 %v452, %v561
      %v563 = vpop.f32.mrb[0].mxu0
      %v564 = vadd.f32 %v452, %v563
      %v565 = vpop.f32.mrb[0].mxu0
      %v566 = vadd.f32 %v457, %v565
      %v567 = vpop.f32.mrb[0].mxu0
      %v568 = vadd.f32 %v457, %v567
      %569 = vmatprep.mubr.bf16.mxu0 0
      %570 = vmatmul.mubr.bf16.gmra.mrb[0].mxu0 %v506
      %v571 = vpop.f32.mrb[0].mxu0
      %v572 = vadd.f32 %v462, %v571
      %v573 = vpop.f32.mrb[0].mxu0
      %v574 = vadd.f32 %v462, %v573
      %v575 = vpop.f32.mrb[0].mxu0
      %v576 = vadd.f32 %v467, %v575
      %v577 = vpop.f32.mrb[0].mxu0
      %v578 = vadd.f32 %v467, %v577
      %579 = vmatprep.mubr.bf16.mxu0 0
      %580 = vmatmul.mubr.bf16.gmra.mrb[0].mxu0 %v509
      %v581 = vpop.f32.mrb[0].mxu0
      %v582 = vadd.f32 %v472, %v581
      %v583 = vpop.f32.mrb[0].mxu0
      %v584 = vadd.f32 %v472, %v583
      %v585 = vpop.f32.mrb[0].mxu0
      %v586 = vadd.f32 %v477, %v585
      %v587 = vpop.f32.mrb[0].mxu0
      %v588 = vadd.f32 %v477, %v587
      %589 = vdwg.mxu0
      %v590 = vmax.f32 %v552, 0.0
      %v591 = vmax.f32 %v554, 0.0
      %v592 = vmax.f32 %v556, 0.0
      %v593 = vmax.f32 %v558, 0.0
      %v594 = vmax.f32 %v562, 0.0
      %v595 = vmax.f32 %v564, 0.0
      %v596 = vmax.f32 %v566, 0.0
      %v597 = vmax.f32 %v568, 0.0
      %v598 = vmax.f32 %v572, 0.0
      %v599 = vmax.f32 %v574, 0.0
      %v600 = vmax.f32 %v576, 0.0
      %v601 = vmax.f32 %v578, 0.0
      %v602 = vmax.f32 %v582, 0.0
      %v603 = vmax.f32 %v584, 0.0
      %v604 = vmax.f32 %v586, 0.0
      %v605 = vmax.f32 %v588, 0.0
      %v606 = vadd.f32 %v590, %v280
      %v607 = vadd.f32 %v591, %v281
      %v608 = vadd.f32 %v592, %v282
      %v609 = vadd.f32 %v593, %v283
      %v610 = vadd.f32 %v594, %v284
      %v611 = vadd.f32 %v595, %v285
      %v612 = vadd.f32 %v596, %v286
      %v613 = vadd.f32 %v597, %v287
      %v614 = vadd.f32 %v598, %v288
      %v615 = vadd.f32 %v599, %v289
      %v616 = vadd.f32 %v600, %v290
      %v617 = vadd.f32 %v601, %v291
      %v618 = vadd.f32 %v602, %v292
      %v619 = vadd.f32 %v603, %v293
      %v620 = vadd.f32 %v604, %v294
      %v621 = vadd.f32 %v605, %v295
      %622 = vst [vmem:[%s278] sm:$0xff] %v606
      %623 = vst [vmem:[%s278 + $0x8] sm:$0xff] %v607
      %624 = vst [vmem:[%s278 + $0x10] sm:$0xff] %v608
      %625 = vst [vmem:[%s278 + $0x18] sm:$0xff] %v609
      %626 = vst [vmem:[%s278 + $0x20] sm:$0xff] %v610
      %627 = vst [vmem:[%s278 + $0x28] sm:$0xff] %v611
      %628 = vst [vmem:[%s278 + $0x30] sm:$0xff] %v612
      %629 = vst [vmem:[%s278 + $0x38] sm:$0xff] %v613
      %630 = vst [vmem:[%s278 + $0x40] sm:$0xff] %v614
      %631 = vst [vmem:[%s278 + $0x48] sm:$0xff] %v615
      %632 = vst [vmem:[%s278 + $0x50] sm:$0xff] %v616
      %633 = vst [vmem:[%s278 + $0x58] sm:$0xff] %v617
      %634 = vst [vmem:[%s278 + $0x60] sm:$0xff] %v618
      %635 = vst [vmem:[%s278 + $0x68] sm:$0xff] %v619
      %636 = vst [vmem:[%s278 + $0x70] sm:$0xff] %v620
      %637 = vst [vmem:[%s278 + $0x78] sm:$0xff] %v621
      %p638 = scmp.lt.s32.totalorder %s18, 1
      %s639 = scalar_select %p638, %s18, 1
      %s640 = smul.addr %s639, 16
      %s641 = smul.addr %s640, 8
      %s642 = scalar_lea.vmem %s7, %s641
      // Predicated region
      $region49: #{tri_res_v4_forward.3} parent=47 // pred_check
        %p643 = pneg %p188
      $region50: #{tri_res_v4_forward.3} parent=47 // pred_check_branch
        %645 = sbr.rel (%p643) target = $region52
      $region51: #{tri_res_v4_forward.3} parent=47 // pred_region
        _
      $region52: #{tri_res_v4_forward.3} parent=47 // pred_fallthru
        _
    $region48: #{tri_res_v4_forward.3} parent=5 // pred_fallthru
      _
    %p646 = scmp.le.s32.totalorder 2, %s13
    // Predicated region
    $region53: #{tri_res_v4_forward.3} parent=5 // pred_check
      %p647 = pneg %p646
    $region54: #{tri_res_v4_forward.3} parent=5 // pred_check_branch
      %649 = sbr.rel (%p647) target = $region56
    $region55: #{tri_res_v4_forward.3} parent=5 // pred_region
      %s650 = ssub.s32 %s13, 2
      // Predicated region
      $region57: #{tri_res_v4_forward.3} parent=55 // pred_check
        %p651 = pneg %p194
      $region58: #{tri_res_v4_forward.3} parent=55 // pred_check_branch
        %653 = sbr.rel (%p651) target = $region60
      $region59: #{tri_res_v4_forward.3} parent=55 // pred_region
        %p654 = scmp.lt.s32.totalorder %s19, 1
        %s655 = scalar_select %p654, %s19, 1
        %s656 = smul.addr %s655, 16
        %s657 = smul.addr %s656, 8
        %s658 = scalar_lea.vmem %s7, %s657
      $region60: #{tri_res_v4_forward.3} parent=55 // pred_fallthru
        _
    $region56: #{tri_res_v4_forward.3} parent=5 // pred_fallthru
      _
  $region6: #{tri_res_v4_forward.3} parent=0 // loop_footer
    %s17 = sadd.s32 1, %s13
  $region7: #{tri_res_v4_forward.3} parent=0 // loop_footer_branch
    %12 = sbr.rel target = $region3
  $region8: #{tri_res_v4_forward.3} parent=0 // loop_exit
    _

// kernel: tri_res_v4_forward.4
$region0: #{tri_res_v4_forward.4}
  #allocation0 [shape = 'u32[]', space=smem, size = 0x4, offset = 0x4, fixed_abs, tag = 'smem constant byte address 0x4 - core index']
  #allocation1 [shape = 'u32[144,128]{1,0:T(1,128)}', space=vmem, size = 0x12000, scoped, tag = 'internal scratch']
  %s0 = inlined_call_operand.vmem [shape: f32[2,128,128], index: 0, kind: input, shape index: {}]
  %s1 = inlined_call_operand.vmem [shape: f32[2,128,128], index: 1, kind: input, shape index: {}]
  %s2 = inlined_call_operand.vmem [shape: bf16[8,128], index: 2, kind: input, shape index: {}]
  %s3 = inlined_call_operand.vmem [shape: f32[8,1], index: 3, kind: input, shape index: {}]
  %s4 = inlined_call_operand.vmem [shape: bf16[8,8], index: 4, kind: input, shape index: {}]
  %s5 = inlined_call_operand.vmem [shape: f32[8,1], index: 5, kind: input, shape index: {}]
  %s6 = inlined_call_operand.vmem [shape: bf16[128,8], index: 6, kind: input, shape index: {}]
  %s7 = inlined_call_operand.vmem [shape: f32[128,1], index: 7, kind: input, shape index: {}]
  %s8 = inlined_call_operand.vmem [shape: bf16[8,128], index: 8, kind: input, shape index: {}]
  %s9 = inlined_call_operand.vmem [shape: f32[8,1], index: 9, kind: input, shape index: {}]
  %s10 = inlined_call_operand.vmem [shape: bf16[8,8], index: 10, kind: input, shape index: {}]
  %s11 = inlined_call_operand.vmem [shape: f32[8,1], index: 11, kind: input, shape index: {}]
  %s12 = inlined_call_operand.vmem [shape: bf16[128,8], index: 12, kind: input, shape index: {}]
  %s13 = inlined_call_operand.vmem [shape: f32[128,1], index: 13, kind: input, shape index: {}]
  %s14 = inlined_call_operand.vmem [shape: f32[2,128,128], index: 14, kind: output, shape index: {0}]
  %s15 = inlined_call_operand.vmem [shape: f32[2,128,128], index: 15, kind: output, shape index: {1}]
  %16 = xla_tuple %s14, %s15
  %s17 = sld [smem:[#allocation0]]
  $region97: #{tri_res_v4_forward.4} parent=0
    _
  %s19 = ssub.s32 1, %s17
  %s20 = scalar_select 0, %s19, %s17
  loop: start=0, step=1, limit=4
  $region2: #{tri_res_v4_forward.4} parent=0 // loop_pre_header
    _
  $region3: #{tri_res_v4_forward.4} parent=0 // loop_header
    %s22 = sphi 0, %s26
    %p23 = scmp.ge.s32.totalorder %s22, 4
    %s32 = sphi 0, %s34
    %s35 = sphi 0, %s32
    %s36 = sphi 0, %s35
    %s52 = sphi 0, %s36
    %s58 = sphi 0, %s60
    %s61 = sphi 0, %s58
    %s62 = sphi 0, %s61
    %s78 = sphi 0, %s62
    %s82 = sphi 0, %s82
    %s84 = sphi 0, %s82
    %s85 = sphi 0, %s84
    %s99 = sphi 0, %s85
    %s103 = sphi 0, %s103
    %s105 = sphi 0, %s103
    %s106 = sphi 0, %s105
    %s120 = sphi 0, %s106
    %s124 = sphi 0, %s124
    %s126 = sphi 0, %s124
    %s127 = sphi 0, %s126
    %s141 = sphi 0, %s127
    %s145 = sphi 0, %s145
    %s147 = sphi 0, %s145
    %s148 = sphi 0, %s147
    %s162 = sphi 0, %s148
    %s166 = sphi 0, %s166
    %s168 = sphi 0, %s166
    %s169 = sphi 0, %s168
    %s183 = sphi 0, %s169
    %s187 = sphi 0, %s187
    %s189 = sphi 0, %s187
    %s190 = sphi 0, %s189
    %s204 = sphi 0, %s190
    %s208 = sphi 0, %s208
    %s210 = sphi 0, %s208
    %s211 = sphi 0, %s210
    %s225 = sphi 0, %s211
    %s229 = sphi 0, %s229
    %s231 = sphi 0, %s229
    %s232 = sphi 0, %s231
    %s246 = sphi 0, %s232
    %s250 = sphi 0, %s250
    %s252 = sphi 0, %s250
    %s253 = sphi 0, %s252
    %s267 = sphi 0, %s253
    %s271 = sphi 0, %s271
    %s273 = sphi 0, %s271
    %s274 = sphi 0, %s273
    %s288 = sphi 0, %s274
    %s292 = sphi 0, %s292
    %s294 = sphi 0, %s292
    %s295 = sphi 0, %s294
    %s309 = sphi 0, %s295
    %s313 = sphi 0, %s313
    %s315 = sphi 0, %s313
    %s316 = sphi 0, %s315
    %s330 = sphi 0, %s316
    %s336 = sphi 0, %s338
    %s339 = sphi 0, %s336
    %s340 = sphi 0, %s339
    %s356 = sphi 0, %s340
    %s362 = sphi 0, %s364
    %s365 = sphi 0, %s362
    %s366 = sphi 0, %s365
    %s382 = sphi 0, %s366
  $region4: #{tri_res_v4_forward.4} parent=0 // loop_header_branch
    %25 = sbr.rel (%p23) target = $region8
  $region5: #{tri_res_v4_forward.4} parent=0 // loop_body
    %s27 = ssub.s32 %s22, 1
    %s28 = ssub.s32 %s22, 2
    %s29 = sadd.s32 %s22, 1
    %s30 = ssub.s32 %s22, %s29
    %p31 = scmp.eq.s32.totalorder %s30, 0
    %s33 = sadd.s32 %s32, 1
    %s34 = scalar_select %p31, %s32, %s33
    %p37 = pneg %p31
    %p38 = scmp.eq.s32.totalorder %s22, 1
    %p39 = por %p37, %p38
    %p40 = scmp.ne.s32.totalorder %s32, %s35
    %p41 = scmp.eq.s32.totalorder %s22, 0
    %p42 = por %p40, %p41
    %p43 = scmp.ne.s32.totalorder %s32, %s35
    %p44 = scmp.eq.s32.totalorder %s27, 1
    %p45 = por %p43, %p44
    %p46 = scmp.ne.s32.totalorder %s35, %s36
    %p47 = scmp.eq.s32.totalorder %s27, 0
    %p48 = por %p46, %p47
    %p49 = scmp.ne.s32.totalorder %s35, %s36
    %p50 = scmp.eq.s32.totalorder %s28, 1
    %p51 = por %p49, %p50
    %p53 = scmp.ne.s32.totalorder %s36, %s52
    %p54 = scmp.eq.s32.totalorder %s28, 0
    %p55 = por %p53, %p54
    %s56 = ssub.s32 %s22, %s29
    %p57 = scmp.eq.s32.totalorder %s56, 0
    %s59 = sadd.s32 %s58, 1
    %s60 = scalar_select %p57, %s58, %s59
    %p63 = pneg %p57
    %p64 = scmp.eq.s32.totalorder %s22, 1
    %p65 = por %p63, %p64
    %p66 = scmp.ne.s32.totalorder %s58, %s61
    %p67 = scmp.eq.s32.totalorder %s22, 0
    %p68 = por %p66, %p67
    %p69 = scmp.ne.s32.totalorder %s58, %s61
    %p70 = scmp.eq.s32.totalorder %s27, 1
    %p71 = por %p69, %p70
    %p72 = scmp.ne.s32.totalorder %s61, %s62
    %p73 = scmp.eq.s32.totalorder %s27, 0
    %p74 = por %p72, %p73
    %p75 = scmp.ne.s32.totalorder %s61, %s62
    %p76 = scmp.eq.s32.totalorder %s28, 1
    %p77 = por %p75, %p76
    %p79 = scmp.ne.s32.totalorder %s62, %s78
    %p80 = scmp.eq.s32.totalorder %s28, 0
    %p81 = por %p79, %p80
    %s83 = sadd.s32 %s82, 1
    %p86 = scmp.eq.s32.totalorder %s22, 1
    %p87 = scmp.ne.s32.totalorder %s82, %s84
    %p88 = scmp.eq.s32.totalorder %s22, 0
    %p89 = por %p87, %p88
    %p90 = scmp.ne.s32.totalorder %s82, %s84
    %p91 = scmp.eq.s32.totalorder %s27, 1
    %p92 = por %p90, %p91
    %p93 = scmp.ne.s32.totalorder %s84, %s85
    %p94 = scmp.eq.s32.totalorder %s27, 0
    %p95 = por %p93, %p94
    %p96 = scmp.ne.s32.totalorder %s84, %s85
    %p97 = scmp.eq.s32.totalorder %s28, 1
    %p98 = por %p96, %p97
    %p100 = scmp.ne.s32.totalorder %s85, %s99
    %p101 = scmp.eq.s32.totalorder %s28, 0
    %p102 = por %p100, %p101
    %s104 = sadd.s32 %s103, 1
    %p107 = scmp.eq.s32.totalorder %s22, 1
    %p108 = scmp.ne.s32.totalorder %s103, %s105
    %p109 = scmp.eq.s32.totalorder %s22, 0
    %p110 = por %p108, %p109
    %p111 = scmp.ne.s32.totalorder %s103, %s105
    %p112 = scmp.eq.s32.totalorder %s27, 1
    %p113 = por %p111, %p112
    %p114 = scmp.ne.s32.totalorder %s105, %s106
    %p115 = scmp.eq.s32.totalorder %s27, 0
    %p116 = por %p114, %p115
    %p117 = scmp.ne.s32.totalorder %s105, %s106
    %p118 = scmp.eq.s32.totalorder %s28, 1
    %p119 = por %p117, %p118
    %p121 = scmp.ne.s32.totalorder %s106, %s120
    %p122 = scmp.eq.s32.totalorder %s28, 0
    %p123 = por %p121, %p122
    %s125 = sadd.s32 %s124, 1
    %p128 = scmp.eq.s32.totalorder %s22, 1
    %p129 = scmp.ne.s32.totalorder %s124, %s126
    %p130 = scmp.eq.s32.totalorder %s22, 0
    %p131 = por %p129, %p130
    %p132 = scmp.ne.s32.totalorder %s124, %s126
    %p133 = scmp.eq.s32.totalorder %s27, 1
    %p134 = por %p132, %p133
    %p135 = scmp.ne.s32.totalorder %s126, %s127
    %p136 = scmp.eq.s32.totalorder %s27, 0
    %p137 = por %p135, %p136
    %p138 = scmp.ne.s32.totalorder %s126, %s127
    %p139 = scmp.eq.s32.totalorder %s28, 1
    %p140 = por %p138, %p139
    %p142 = scmp.ne.s32.totalorder %s127, %s141
    %p143 = scmp.eq.s32.totalorder %s28, 0
    %p144 = por %p142, %p143
    %s146 = sadd.s32 %s145, 1
    %p149 = scmp.eq.s32.totalorder %s22, 1
    %p150 = scmp.ne.s32.totalorder %s145, %s147
    %p151 = scmp.eq.s32.totalorder %s22, 0
    %p152 = por %p150, %p151
    %p153 = scmp.ne.s32.totalorder %s145, %s147
    %p154 = scmp.eq.s32.totalorder %s27, 1
    %p155 = por %p153, %p154
    %p156 = scmp.ne.s32.totalorder %s147, %s148
    %p157 = scmp.eq.s32.totalorder %s27, 0
    %p158 = por %p156, %p157
    %p159 = scmp.ne.s32.totalorder %s147, %s148
    %p160 = scmp.eq.s32.totalorder %s28, 1
    %p161 = por %p159, %p160
    %p163 = scmp.ne.s32.totalorder %s148, %s162
    %p164 = scmp.eq.s32.totalorder %s28, 0
    %p165 = por %p163, %p164
    %s167 = sadd.s32 %s166, 1
    %p170 = scmp.eq.s32.totalorder %s22, 1
    %p171 = scmp.ne.s32.totalorder %s166, %s168
    %p172 = scmp.eq.s32.totalorder %s22, 0
    %p173 = por %p171, %p172
    %p174 = scmp.ne.s32.totalorder %s166, %s168
    %p175 = scmp.eq.s32.totalorder %s27, 1
    %p176 = por %p174, %p175
    %p177 = scmp.ne.s32.totalorder %s168, %s169
    %p178 = scmp.eq.s32.totalorder %s27, 0
    %p179 = por %p177, %p178
    %p180 = scmp.ne.s32.totalorder %s168, %s169
    %p181 = scmp.eq.s32.totalorder %s28, 1
    %p182 = por %p180, %p181
    %p184 = scmp.ne.s32.totalorder %s169, %s183
    %p185 = scmp.eq.s32.totalorder %s28, 0
    %p186 = por %p184, %p185
    %s188 = sadd.s32 %s187, 1
    %p191 = scmp.eq.s32.totalorder %s22, 1
    %p192 = scmp.ne.s32.totalorder %s187, %s189
    %p193 = scmp.eq.s32.totalorder %s22, 0
    %p194 = por %p192, %p193
    %p195 = scmp.ne.s32.totalorder %s187, %s189
    %p196 = scmp.eq.s32.totalorder %s27, 1
    %p197 = por %p195, %p196
    %p198 = scmp.ne.s32.totalorder %s189, %s190
    %p199 = scmp.eq.s32.totalorder %s27, 0
    %p200 = por %p198, %p199
    %p201 = scmp.ne.s32.totalorder %s189, %s190
    %p202 = scmp.eq.s32.totalorder %s28, 1
    %p203 = por %p201, %p202
    %p205 = scmp.ne.s32.totalorder %s190, %s204
    %p206 = scmp.eq.s32.totalorder %s28, 0
    %p207 = por %p205, %p206
    %s209 = sadd.s32 %s208, 1
    %p212 = scmp.eq.s32.totalorder %s22, 1
    %p213 = scmp.ne.s32.totalorder %s208, %s210
    %p214 = scmp.eq.s32.totalorder %s22, 0
    %p215 = por %p213, %p214
    %p216 = scmp.ne.s32.totalorder %s208, %s210
    %p217 = scmp.eq.s32.totalorder %s27, 1
    %p218 = por %p216, %p217
    %p219 = scmp.ne.s32.totalorder %s210, %s211
    %p220 = scmp.eq.s32.totalorder %s27, 0
    %p221 = por %p219, %p220
    %p222 = scmp.ne.s32.totalorder %s210, %s211
    %p223 = scmp.eq.s32.totalorder %s28, 1
    %p224 = por %p222, %p223
    %p226 = scmp.ne.s32.totalorder %s211, %s225
    %p227 = scmp.eq.s32.totalorder %s28, 0
    %p228 = por %p226, %p227
    %s230 = sadd.s32 %s229, 1
    %p233 = scmp.eq.s32.totalorder %s22, 1
    %p234 = scmp.ne.s32.totalorder %s229, %s231
    %p235 = scmp.eq.s32.totalorder %s22, 0
    %p236 = por %p234, %p235
    %p237 = scmp.ne.s32.totalorder %s229, %s231
    %p238 = scmp.eq.s32.totalorder %s27, 1
    %p239 = por %p237, %p238
    %p240 = scmp.ne.s32.totalorder %s231, %s232
    %p241 = scmp.eq.s32.totalorder %s27, 0
    %p242 = por %p240, %p241
    %p243 = scmp.ne.s32.totalorder %s231, %s232
    %p244 = scmp.eq.s32.totalorder %s28, 1
    %p245 = por %p243, %p244
    %p247 = scmp.ne.s32.totalorder %s232, %s246
    %p248 = scmp.eq.s32.totalorder %s28, 0
    %p249 = por %p247, %p248
    %s251 = sadd.s32 %s250, 1
    %p254 = scmp.eq.s32.totalorder %s22, 1
    %p255 = scmp.ne.s32.totalorder %s250, %s252
    %p256 = scmp.eq.s32.totalorder %s22, 0
    %p257 = por %p255, %p256
    %p258 = scmp.ne.s32.totalorder %s250, %s252
    %p259 = scmp.eq.s32.totalorder %s27, 1
    %p260 = por %p258, %p259
    %p261 = scmp.ne.s32.totalorder %s252, %s253
    %p262 = scmp.eq.s32.totalorder %s27, 0
    %p263 = por %p261, %p262
    %p264 = scmp.ne.s32.totalorder %s252, %s253
    %p265 = scmp.eq.s32.totalorder %s28, 1
    %p266 = por %p264, %p265
    %p268 = scmp.ne.s32.totalorder %s253, %s267
    %p269 = scmp.eq.s32.totalorder %s28, 0
    %p270 = por %p268, %p269
    %s272 = sadd.s32 %s271, 1
    %p275 = scmp.eq.s32.totalorder %s22, 1
    %p276 = scmp.ne.s32.totalorder %s271, %s273
    %p277 = scmp.eq.s32.totalorder %s22, 0
    %p278 = por %p276, %p277
    %p279 = scmp.ne.s32.totalorder %s271, %s273
    %p280 = scmp.eq.s32.totalorder %s27, 1
    %p281 = por %p279, %p280
    %p282 = scmp.ne.s32.totalorder %s273, %s274
    %p283 = scmp.eq.s32.totalorder %s27, 0
    %p284 = por %p282, %p283
    %p285 = scmp.ne.s32.totalorder %s273, %s274
    %p286 = scmp.eq.s32.totalorder %s28, 1
    %p287 = por %p285, %p286
    %p289 = scmp.ne.s32.totalorder %s274, %s288
    %p290 = scmp.eq.s32.totalorder %s28, 0
    %p291 = por %p289, %p290
    %s293 = sadd.s32 %s292, 1
    %p296 = scmp.eq.s32.totalorder %s22, 1
    %p297 = scmp.ne.s32.totalorder %s292, %s294
    %p298 = scmp.eq.s32.totalorder %s22, 0
    %p299 = por %p297, %p298
    %p300 = scmp.ne.s32.totalorder %s292, %s294
    %p301 = scmp.eq.s32.totalorder %s27, 1
    %p302 = por %p300, %p301
    %p303 = scmp.ne.s32.totalorder %s294, %s295
    %p304 = scmp.eq.s32.totalorder %s27, 0
    %p305 = por %p303, %p304
    %p306 = scmp.ne.s32.totalorder %s294, %s295
    %p307 = scmp.eq.s32.totalorder %s28, 1
    %p308 = por %p306, %p307
    %p310 = scmp.ne.s32.totalorder %s295, %s309
    %p311 = scmp.eq.s32.totalorder %s28, 0
    %p312 = por %p310, %p311
    %s314 = sadd.s32 %s313, 1
    %p317 = scmp.eq.s32.totalorder %s22, 1
    %p318 = scmp.ne.s32.totalorder %s313, %s315
    %p319 = scmp.eq.s32.totalorder %s22, 0
    %p320 = por %p318, %p319
    %p321 = scmp.ne.s32.totalorder %s313, %s315
    %p322 = scmp.eq.s32.totalorder %s27, 1
    %p323 = por %p321, %p322
    %p324 = scmp.ne.s32.totalorder %s315, %s316
    %p325 = scmp.eq.s32.totalorder %s27, 0
    %p326 = por %p324, %p325
    %p327 = scmp.ne.s32.totalorder %s315, %s316
    %p328 = scmp.eq.s32.totalorder %s28, 1
    %p329 = por %p327, %p328
    %p331 = scmp.ne.s32.totalorder %s316, %s330
    %p332 = scmp.eq.s32.totalorder %s28, 0
    %p333 = por %p331, %p332
    %s334 = ssub.s32 %s22, %s29
    %p335 = scmp.eq.s32.totalorder %s334, 0
    %s337 = sadd.s32 %s336, 1
    %s338 = scalar_select %p335, %s336, %s337
    %p341 = pneg %p335
    %p342 = scmp.eq.s32.totalorder %s22, 1
    %p343 = por %p341, %p342
    %p344 = scmp.ne.s32.totalorder %s336, %s339
    %p345 = scmp.eq.s32.totalorder %s22, 0
    %p346 = por %p344, %p345
    %p347 = scmp.ne.s32.totalorder %s336, %s339
    %p348 = scmp.eq.s32.totalorder %s27, 1
    %p349 = por %p347, %p348
    %p350 = scmp.ne.s32.totalorder %s339, %s340
    %p351 = scmp.eq.s32.totalorder %s27, 0
    %p352 = por %p350, %p351
    %p353 = scmp.ne.s32.totalorder %s339, %s340
    %p354 = scmp.eq.s32.totalorder %s28, 1
    %p355 = por %p353, %p354
    %p357 = scmp.ne.s32.totalorder %s340, %s356
    %p358 = scmp.eq.s32.totalorder %s28, 0
    %p359 = por %p357, %p358
    %s360 = ssub.s32 %s22, %s29
    %p361 = scmp.eq.s32.totalorder %s360, 0
    %s363 = sadd.s32 %s362, 1
    %s364 = scalar_select %p361, %s362, %s363
    %p367 = pneg %p361
    %p368 = scmp.eq.s32.totalorder %s22, 1
    %p369 = por %p367, %p368
    %p370 = scmp.ne.s32.totalorder %s362, %s365
    %p371 = scmp.eq.s32.totalorder %s22, 0
    %p372 = por %p370, %p371
    %p373 = scmp.ne.s32.totalorder %s362, %s365
    %p374 = scmp.eq.s32.totalorder %s27, 1
    %p375 = por %p373, %p374
    %p376 = scmp.ne.s32.totalorder %s365, %s366
    %p377 = scmp.eq.s32.totalorder %s27, 0
    %p378 = por %p376, %p377
    %p379 = scmp.ne.s32.totalorder %s365, %s366
    %p380 = scmp.eq.s32.totalorder %s28, 1
    %p381 = por %p379, %p380
    %p383 = scmp.ne.s32.totalorder %s366, %s382
    %p384 = scmp.eq.s32.totalorder %s28, 0
    %p385 = por %p383, %p384
    %p386 = scmp.le.s32.totalorder 1, %s22
    %p387 = scmp.lt.s32.totalorder %s22, 3
    %p388 = pnand %p386, %p387
    %p389 = pneg %p388
    // Predicated region
    $region9: #{tri_res_v4_forward.4} parent=5 // pred_check
      _
    $region10: #{tri_res_v4_forward.4} parent=5 // pred_check_branch
      %391 = sbr.rel (%p388) target = $region12
    $region11: #{tri_res_v4_forward.4} parent=5 // pred_region
      %s392 = ssub.s32 %s22, 1
      // Predicated region
      $region13: #{tri_res_v4_forward.4} parent=11 // pred_check
        %p393 = pneg %p95
      $region14: #{tri_res_v4_forward.4} parent=11 // pred_check_branch
        %395 = sbr.rel (%p393) target = $region16
      $region15: #{tri_res_v4_forward.4} parent=11 // pred_region
        _
      $region16: #{tri_res_v4_forward.4} parent=11 // pred_fallthru
        _
      // Predicated region
      $region17: #{tri_res_v4_forward.4} parent=11 // pred_check
        %p396 = pneg %p116
      $region18: #{tri_res_v4_forward.4} parent=11 // pred_check_branch
        %398 = sbr.rel (%p396) target = $region20
      $region19: #{tri_res_v4_forward.4} parent=11 // pred_region
        _
      $region20: #{tri_res_v4_forward.4} parent=11 // pred_fallthru
        _
      // Predicated region
      $region21: #{tri_res_v4_forward.4} parent=11 // pred_check
        %p399 = pneg %p137
      $region22: #{tri_res_v4_forward.4} parent=11 // pred_check_branch
        %401 = sbr.rel (%p399) target = $region24
      $region23: #{tri_res_v4_forward.4} parent=11 // pred_region
        _
      $region24: #{tri_res_v4_forward.4} parent=11 // pred_fallthru
        _
      // Predicated region
      $region25: #{tri_res_v4_forward.4} parent=11 // pred_check
        %p402 = pneg %p158
      $region26: #{tri_res_v4_forward.4} parent=11 // pred_check_branch
        %404 = sbr.rel (%p402) target = $region28
      $region27: #{tri_res_v4_forward.4} parent=11 // pred_region
        _
      $region28: #{tri_res_v4_forward.4} parent=11 // pred_fallthru
        _
      // Predicated region
      $region29: #{tri_res_v4_forward.4} parent=11 // pred_check
        %p405 = pneg %p179
      $region30: #{tri_res_v4_forward.4} parent=11 // pred_check_branch
        %407 = sbr.rel (%p405) target = $region32
      $region31: #{tri_res_v4_forward.4} parent=11 // pred_region
        _
      $region32: #{tri_res_v4_forward.4} parent=11 // pred_fallthru
        _
      // Predicated region
      $region33: #{tri_res_v4_forward.4} parent=11 // pred_check
        %p408 = pneg %p200
      $region34: #{tri_res_v4_forward.4} parent=11 // pred_check_branch
        %410 = sbr.rel (%p408) target = $region36
      $region35: #{tri_res_v4_forward.4} parent=11 // pred_region
        _
      $region36: #{tri_res_v4_forward.4} parent=11 // pred_fallthru
        _
      // Predicated region
      $region37: #{tri_res_v4_forward.4} parent=11 // pred_check
        %p411 = pneg %p221
      $region38: #{tri_res_v4_forward.4} parent=11 // pred_check_branch
        %413 = sbr.rel (%p411) target = $region40
      $region39: #{tri_res_v4_forward.4} parent=11 // pred_region
        _
      $region40: #{tri_res_v4_forward.4} parent=11 // pred_fallthru
        _
      // Predicated region
      $region41: #{tri_res_v4_forward.4} parent=11 // pred_check
        %p414 = pneg %p242
      $region42: #{tri_res_v4_forward.4} parent=11 // pred_check_branch
        %416 = sbr.rel (%p414) target = $region44
      $region43: #{tri_res_v4_forward.4} parent=11 // pred_region
        _
      $region44: #{tri_res_v4_forward.4} parent=11 // pred_fallthru
        _
      // Predicated region
      $region45: #{tri_res_v4_forward.4} parent=11 // pred_check
        %p417 = pneg %p263
      $region46: #{tri_res_v4_forward.4} parent=11 // pred_check_branch
        %419 = sbr.rel (%p417) target = $region48
      $region47: #{tri_res_v4_forward.4} parent=11 // pred_region
        _
      $region48: #{tri_res_v4_forward.4} parent=11 // pred_fallthru
        _
      // Predicated region
      $region49: #{tri_res_v4_forward.4} parent=11 // pred_check
        %p420 = pneg %p284
      $region50: #{tri_res_v4_forward.4} parent=11 // pred_check_branch
        %422 = sbr.rel (%p420) target = $region52
      $region51: #{tri_res_v4_forward.4} parent=11 // pred_region
        _
      $region52: #{tri_res_v4_forward.4} parent=11 // pred_fallthru
        _
      // Predicated region
      $region53: #{tri_res_v4_forward.4} parent=11 // pred_check
        %p423 = pneg %p305
      $region54: #{tri_res_v4_forward.4} parent=11 // pred_check_branch
        %425 = sbr.rel (%p423) target = $region56
      $region55: #{tri_res_v4_forward.4} parent=11 // pred_region
        _
      $region56: #{tri_res_v4_forward.4} parent=11 // pred_fallthru
        _
      // Predicated region
      $region57: #{tri_res_v4_forward.4} parent=11 // pred_check
        %p426 = pneg %p326
      $region58: #{tri_res_v4_forward.4} parent=11 // pred_check_branch
        %428 = sbr.rel (%p426) target = $region60
      $region59: #{tri_res_v4_forward.4} parent=11 // pred_region
        _
      $region60: #{tri_res_v4_forward.4} parent=11 // pred_fallthru
        _
    $region12: #{tri_res_v4_forward.4} parent=5 // pred_fallthru
      _
    %p429 = scmp.lt.s32.totalorder %s22, 2
    // Predicated region
    $region61: #{tri_res_v4_forward.4} parent=5 // pred_check
      %p430 = pneg %p429
    $region62: #{tri_res_v4_forward.4} parent=5 // pred_check_branch
      %432 = sbr.rel (%p430) target = $region64
    $region63: #{tri_res_v4_forward.4} parent=5 // pred_region
      // Predicated region
      $region65: #{tri_res_v4_forward.4} parent=63 // pred_check
        %p433 = pneg %p42
      $region66: #{tri_res_v4_forward.4} parent=63 // pred_check_branch
        %435 = sbr.rel (%p433) target = $region68
      $region67: #{tri_res_v4_forward.4} parent=63 // pred_region
        %p436 = scmp.lt.s32.totalorder %s22, 1
        %s437 = scalar_select %p436, %s22, 1
        %s438 = smul.addr %s437, 16
        %s439 = smul.addr %s438, 8
        %s440 = scalar_lea.vmem %s0, %s439
      $region68: #{tri_res_v4_forward.4} parent=63 // pred_fallthru
        _
      // Predicated region
      $region69: #{tri_res_v4_forward.4} parent=63 // pred_check
        %p441 = pneg %p68
      $region70: #{tri_res_v4_forward.4} parent=63 // pred_check_branch
        %443 = sbr.rel (%p441) target = $region72
      $region71: #{tri_res_v4_forward.4} parent=63 // pred_region
        %p444 = scmp.lt.s32.totalorder %s22, 1
        %s445 = scalar_select %p444, %s22, 1
        %s446 = smul.addr %s445, 16
        %s447 = smul.addr %s446, 8
        %s448 = scalar_lea.vmem %s1, %s447
      $region72: #{tri_res_v4_forward.4} parent=63 // pred_fallthru
        _
    $region64: #{tri_res_v4_forward.4} parent=5 // pred_fallthru
      _
    %p449 = scmp.le.s32.totalorder 1, %s22
    %p450 = scmp.lt.s32.totalorder %s22, 3
    %p451 = pnand %p449, %p450
    %p452 = pneg %p451
    // Predicated region
    $region73: #{tri_res_v4_forward.4} parent=5 // pred_check
      _
    $region74: #{tri_res_v4_forward.4} parent=5 // pred_check_branch
      %454 = sbr.rel (%p451) target = $region76
    $region75: #{tri_res_v4_forward.4} parent=5 // pred_region
      %s455 = ssub.s32 %s22, 1
      %p456 = scmp.lt.s32.totalorder %s27, 1
      %s457 = scalar_select %p456, %s27, 1
      %s458 = smul.addr %s457, 16
      %s459 = smul.addr %s458, 8
      %s460 = scalar_lea.vmem %s0, %s459
      %p461 = pneg %p48
      %p462 = pneg %p45
      %p463 = scmp.lt.s32.totalorder %s27, 1
      %s464 = scalar_select %p463, %s27, 1
      %s465 = smul.addr %s464, 16
      %s466 = smul.addr %s465, 8
      %s467 = scalar_lea.vmem %s1, %s466
      %p468 = pneg %p74
      %p469 = pneg %p71
      %p470 = pneg %p95
      %p471 = pneg %p92
      %p472 = pneg %p116
      %p473 = pneg %p113
      %p474 = pneg %p137
      %p475 = pneg %p134
      %p476 = pneg %p158
      %p477 = pneg %p155
      %p478 = pneg %p179
      %p479 = pneg %p176
      %p480 = pneg %p200
      %p481 = pneg %p197
      %p482 = pneg %p221
      %p483 = pneg %p218
      %p484 = pneg %p242
      %p485 = pneg %p239
      %p486 = pneg %p263
      %p487 = pneg %p260
      %p488 = pneg %p284
      %p489 = pneg %p281
      %p490 = pneg %p305
      %p491 = pneg %p302
      %p492 = pneg %p326
      %p493 = pneg %p323
      %p494 = pneg %p352
      %p495 = pneg %p349
      %p496 = scmp.lt.s32.totalorder %s27, 1
      %s497 = scalar_select %p496, %s27, 1
      %s498 = smul.addr %s497, 16
      %s499 = smul.addr %s498, 8
      %s500 = scalar_lea.vmem %s14, %s499
      %p501 = pneg %p378
      %p502 = pneg %p375
      %p503 = scmp.lt.s32.totalorder %s27, 1
      %s504 = scalar_select %p503, %s27, 1
      %s505 = smul.addr %s504, 16
      %s506 = smul.addr %s505, 8
      %s507 = scalar_lea.vmem %s15, %s506
      %p508 = scmp.lt.s32.totalorder %s27, 1
      %s509 = scalar_select %p508, %s27, 1
      %s510 = smul.addr %s509, 16
      %s511 = smul.addr %s510, 8
      %s512 = scalar_lea.vmem %s0, %s511
      %p513 = scmp.lt.s32.totalorder %s27, 1
      %s514 = scalar_select %p513, %s27, 1
      %s515 = smul.addr %s514, 16
      %s516 = smul.addr %s515, 8
      %s517 = scalar_lea.vmem %s1, %s516
      %p518 = scmp.lt.s32.totalorder %s27, 1
      %s519 = scalar_select %p518, %s27, 1
      %s520 = smul.addr %s519, 16
      %s521 = smul.addr %s520, 8
      %s522 = scalar_lea.vmem %s14, %s521
      %p523 = scmp.lt.s32.totalorder %s27, 1
      %s524 = scalar_select %p523, %s27, 1
      %s525 = smul.addr %s524, 16
      %s526 = smul.addr %s525, 8
      %s527 = scalar_lea.vmem %s15, %s526
      %v529 = vld [vmem:[%s512] sm:$0xff]
      %v530 = vld [vmem:[%s512 + $0x8] sm:$0xff]
      %v531 = vld [vmem:[%s512 + $0x10] sm:$0xff]
      %v532 = vld [vmem:[%s512 + $0x18] sm:$0xff]
      %v533 = vld [vmem:[%s512 + $0x20] sm:$0xff]
      %v534 = vld [vmem:[%s512 + $0x28] sm:$0xff]
      %v535 = vld [vmem:[%s512 + $0x30] sm:$0xff]
      %v536 = vld [vmem:[%s512 + $0x38] sm:$0xff]
      %v537 = vld [vmem:[%s512 + $0x40] sm:$0xff]
      %v538 = vld [vmem:[%s512 + $0x48] sm:$0xff]
      %v539 = vld [vmem:[%s512 + $0x50] sm:$0xff]
      %v540 = vld [vmem:[%s512 + $0x58] sm:$0xff]
      %v541 = vld [vmem:[%s512 + $0x60] sm:$0xff]
      %v542 = vld [vmem:[%s512 + $0x68] sm:$0xff]
      %v543 = vld [vmem:[%s512 + $0x70] sm:$0xff]
      %v544 = vld [vmem:[%s512 + $0x78] sm:$0xff]
      %v545 = vpack.c.bf16 %v530, %v529
      %v546 = vpack.c.bf16 %v532, %v531
      %v547 = vpack.c.bf16 %v534, %v533
      %v548 = vpack.c.bf16 %v536, %v535
      %v549 = vpack.c.bf16 %v538, %v537
      %v550 = vpack.c.bf16 %v540, %v539
      %v551 = vpack.c.bf16 %v542, %v541
      %v552 = vpack.c.bf16 %v544, %v543
      %v553 = vld [vmem:[%s2] sm:$0xf]
      %v554 = vld [vmem:[%s3] sm:$0xff]
      %556 = vset.pattern.permute.xlu0 0
      %557 = vperm.xlu0 %556, %v554
      %v558 = vpop.permute.xlu0 %557
      %560 = vmatprep.subr.bf16.mxu0 0
      %561 = vmatpush1.bf16.msra.mxu0 %v545
      %562 = vmatprep.subr.bf16.mxu0 0
      %563 = vmatpush1.bf16.msra.mxu0 %v546
      %564 = vmatprep.subr.bf16.mxu0 0
      %565 = vmatpush1.bf16.msra.mxu0 %v547
      %566 = vmatprep.subr.bf16.mxu0 0
      %567 = vmatpush1.bf16.msra.mxu0 %v548
      %568 = vmatprep.subr.bf16.mxu0 0
      %569 = vmatpush1.bf16.msra.mxu0 %v549
      %570 = vmatprep.subr.bf16.mxu0 0
      %571 = vmatpush1.bf16.msra.mxu0 %v550
      %572 = vmatprep.subr.bf16.mxu0 0
      %573 = vmatpush1.bf16.msra.mxu0 %v551
      %574 = vmatprep.subr.bf16.mxu0 0
      %575 = vmatpush1.bf16.msra.mxu0 %v552
      %576 = vmatprep.subr.bf16.mxu0 0
      %577 = vmatpush1.bf16.msra.mxu0 0
      %578 = vmatprep.subr.bf16.mxu0 0
      %579 = vmatpush1.bf16.msra.mxu0 0
      %580 = vmatprep.subr.bf16.mxu0 0
      %581 = vmatpush1.bf16.msra.mxu0 0
      %582 = vmatprep.subr.bf16.mxu0 0
      %583 = vmatpush1.bf16.msra.mxu0 0
      %584 = vmatprep.subr.bf16.mxu0 0
      %585 = vmatpush1.bf16.msra.mxu0 0
      %586 = vmatprep.subr.bf16.mxu0 0
      %587 = vmatpush1.bf16.msra.mxu0 0
      %588 = vmatprep.subr.bf16.mxu0 0
      %589 = vmatpush1.bf16.msra.mxu0 0
      %590 = vmatprep.subr.bf16.mxu0 0
      %591 = vmatpush1.bf16.msra.mxu0 0
      %592 = vmatprep.mubr.bf16.mxu0 0
      %593 = vmatmul.mubr.bf16.gmra.mrb[0].mxu0 %v553
      %v594 = vpop.f32.mrb[0].mxu0
      %v595 = vadd.f32 %v558, %v594
      %v596 = vpop.f32.mrb[0].mxu0
      %v597 = vpop.f32.mrb[0].mxu0
      %v598 = vpop.f32.mrb[0].mxu0
      %599 = vdwg.mxu0
      %v600 = vmax.f32 %v595, 0.0
      %v601 = vpack.c.bf16 %v600, %v600
      %v602 = vld [vmem:[%s4] sm:$0xf]
      %v603 = vld [vmem:[%s5] sm:$0xff]
      %605 = vset.pattern.permute.xlu0 0
      %606 = vperm.xlu0 %605, %v603
      %v607 = vpop.permute.xlu0 %606
      %vm609 = vcmask 64512
      %v611 = vsel %vm609, %v602, 0
      %vm613 = vcmask 1043456
      %v615 = vsel %vm613, %v601, 0
      %617 = vmatprep.subr.bf16.mxu0 0
      %618 = vmatpush1.bf16.msra.mxu0 %v615
      %619 = vmatprep.subr.bf16.mxu0 0
      %620 = vmatpush1.bf16.msra.mxu0 0
      %621 = vmatprep.subr.bf16.mxu0 0
      %622 = vmatpush1.bf16.msra.mxu0 0
      %623 = vmatprep.subr.bf16.mxu0 0
      %624 = vmatpush1.bf16.msra.mxu0 0
      %625 = vmatprep.subr.bf16.mxu0 0
      %626 = vmatpush1.bf16.msra.mxu0 0
      %627 = vmatprep.subr.bf16.mxu0 0
      %628 = vmatpush1.bf16.msra.mxu0 0
      %629 = vmatprep.subr.bf16.mxu0 0
      %630 = vmatpush1.bf16.msra.mxu0 0
      %631 = vmatprep.subr.bf16.mxu0 0
      %632 = vmatpush1.bf16.msra.mxu0 0
      %633 = vmatprep.subr.bf16.mxu0 0
      %634 = vmatpush1.bf16.msra.mxu0 0
      %635 = vmatprep.subr.bf16.mxu0 0
      %636 = vmatpush1.bf16.msra.mxu0 0
      %637 = vmatprep.subr.bf16.mxu0 0
      %638 = vmatpush1.bf16.msra.mxu0 0
      %639 = vmatprep.subr.bf16.mxu0 0
      %640 = vmatpush1.bf16.msra.mxu0 0
      %641 = vmatprep.subr.bf16.mxu0 0
      %642 = vmatpush1.bf16.msra.mxu0 0
      %643 = vmatprep.subr.bf16.mxu0 0
      %644 = vmatpush1.bf16.msra.mxu0 0
      %645 = vmatprep.subr.bf16.mxu0 0
      %646 = vmatpush1.bf16.msra.mxu0 0
      %647 = vmatprep.subr.bf16.mxu0 0
      %648 = vmatpush1.bf16.msra.mxu0 0
      %649 = vmatprep.mubr.bf16.mxu0 0
      %650 = vmatmul.mubr.bf16.gmra.mrb[0].mxu0 %v611
      %v651 = vpop.f32.mrb[0].mxu0
      %v652 = vadd.f32 %v607, %v651
      %v653 = vpop.f32.mrb[0].mxu0
      %v654 = vpop.f32.mrb[0].mxu0
      %v655 = vpop.f32.mrb[0].mxu0
      %656 = vdwg.mxu0
      %v657 = vmax.f32 %v652, 0.0
      %v658 = vpack.c.bf16 %v657, %v657
      %v659 = vld [vmem:[%s6] sm:$0xf]
      %v660 = vld [vmem:[%s6 + $0x4] sm:$0xf]
      %v661 = vld [vmem:[%s6 + $0x8] sm:$0xf]
      %v662 = vld [vmem:[%s6 + $0xc] sm:$0xf]
      %v663 = vld [vmem:[%s6 + $0x10] sm:$0xf]
      %v664 = vld [vmem:[%s6 + $0x14] sm:$0xf]
      %v665 = vld [vmem:[%s6 + $0x18] sm:$0xf]
      %v666 = vld [vmem:[%s6 + $0x1c] sm:$0xf]
      %v667 = vld [vmem:[%s6 + $0x20] sm:$0xf]
      %v668 = vld [vmem:[%s6 + $0x24] sm:$0xf]
      %v669 = vld [vmem:[%s6 + $0x28] sm:$0xf]
      %v670 = vld [vmem:[%s6 + $0x2c] sm:$0xf]
      %v671 = vld [vmem:[%s6 + $0x30] sm:$0xf]
      %v672 = vld [vmem:[%s6 + $0x34] sm:$0xf]
      %v673 = vld [vmem:[%s6 + $0x38] sm:$0xf]
      %v674 = vld [vmem:[%s6 + $0x3c] sm:$0xf]
      %v675 = vld [vmem:[%s7] sm:$0xff]
      %v676 = vld [vmem:[%s7 + $0x8] sm:$0xff]
      %v677 = vld [vmem:[%s7 + $0x10] sm:$0xff]
      %v678 = vld [vmem:[%s7 + $0x18] sm:$0xff]
      %v679 = vld [vmem:[%s7 + $0x20] sm:$0xff]
      %v680 = vld [vmem:[%s7 + $0x28] sm:$0xff]
      %v681 = vld [vmem:[%s7 + $0x30] sm:$0xff]
      %v682 = vld [vmem:[%s7 + $0x38] sm:$0xff]
      %v683 = vld [vmem:[%s7 + $0x40] sm:$0xff]
      %v684 = vld [vmem:[%s7 + $0x48] sm:$0xff]
      %v685 = vld [vmem:[%s7 + $0x50] sm:$0xff]
      %v686 = vld [vmem:[%s7 + $0x58] sm:$0xff]
      %v687 = vld [vmem:[%s7 + $0x60] sm:$0xff]
      %v688 = vld [vmem:[%s7 + $0x68] sm:$0xff]
      %v689 = vld [vmem:[%s7 + $0x70] sm:$0xff]
      %v690 = vld [vmem:[%s7 + $0x78] sm:$0xff]
      %692 = vset.pattern.permute.xlu0 0
      %693 = vperm.xlu0 %692, %v675
      %v694 = vpop.permute.xlu0 %693
      %697 = vset.pattern.permute.xlu0 0
      %698 = vperm.xlu0 %697, %v676
      %v699 = vpop.permute.xlu0 %698
      %702 = vset.pattern.permute.xlu0 0
      %703 = vperm.xlu0 %702, %v677
      %v704 = vpop.permute.xlu0 %703
      %707 = vset.pattern.permute.xlu0 0
      %708 = vperm.xlu0 %707, %v678
      %v709 = vpop.permute.xlu0 %708
      %712 = vset.pattern.permute.xlu0 0
      %713 = vperm.xlu0 %712, %v679
      %v714 = vpop.permute.xlu0 %713
      %717 = vset.pattern.permute.xlu0 0
      %718 = vperm.xlu0 %717, %v680
      %v719 = vpop.permute.xlu0 %718
      %722 = vset.pattern.permute.xlu0 0
      %723 = vperm.xlu0 %722, %v681
      %v724 = vpop.permute.xlu0 %723
      %727 = vset.pattern.permute.xlu0 0
      %728 = vperm.xlu0 %727, %v682
      %v729 = vpop.permute.xlu0 %728
      %732 = vset.pattern.permute.xlu0 0
      %733 = vperm.xlu0 %732, %v683
      %v734 = vpop.permute.xlu0 %733
      %737 = vset.pattern.permute.xlu0 0
      %738 = vperm.xlu0 %737, %v684
      %v739 = vpop.permute.xlu0 %738
      %742 = vset.pattern.permute.xlu0 0
      %743 = vperm.xlu0 %742, %v685
      %v744 = vpop.permute.xlu0 %743
      %747 = vset.pattern.permute.xlu0 0
      %748 = vperm.xlu0 %747, %v686
      %v749 = vpop.permute.xlu0 %748
      %752 = vset.pattern.permute.xlu0 0
      %753 = vperm.xlu0 %752, %v687
      %v754 = vpop.permute.xlu0 %753
      %757 = vset.pattern.permute.xlu0 0
      %758 = vperm.xlu0 %757, %v688
      %v759 = vpop.permute.xlu0 %758
      %762 = vset.pattern.permute.xlu0 0
      %763 = vperm.xlu0 %762, %v689
      %v764 = vpop.permute.xlu0 %763
      %767 = vset.pattern.permute.xlu0 0
      %768 = vperm.xlu0 %767, %v690
      %v769 = vpop.permute.xlu0 %768
      %v787 = vunpack.c.l.b16 %v659
      %v788 = vunpack.c.l.b16 %v660
      %v789 = vunpack.c.l.b16 %v661
      %v790 = vunpack.c.l.b16 %v662
      %v791 = vunpack.c.l.b16 %v663
      %v792 = vunpack.c.l.b16 %v664
      %v793 = vunpack.c.l.b16 %v665
      %v794 = vunpack.c.l.b16 %v666
      %v795 = vunpack.c.l.b16 %v667
      %v796 = vunpack.c.l.b16 %v668
      %v797 = vunpack.c.l.b16 %v669
      %v798 = vunpack.c.l.b16 %v670
      %v799 = vunpack.c.l.b16 %v671
      %v800 = vunpack.c.l.b16 %v672
      %v801 = vunpack.c.l.b16 %v673
      %v802 = vunpack.c.l.b16 %v674
      %v803 = vpack.c.b16 %v788, %v787
      %v804 = vpack.c.b16 %v790, %v789
      %v805 = vpack.c.b16 %v792, %v791
      %v806 = vpack.c.b16 %v794, %v793
      %v807 = vpack.c.b16 %v796, %v795
      %v808 = vpack.c.b16 %v798, %v797
      %v809 = vpack.c.b16 %v800, %v799
      %v810 = vpack.c.b16 %v802, %v801
      %v812 = vsel %vm609, %v803, 0
      %v815 = vsel %vm609, %v804, 0
      %v818 = vsel %vm609, %v805, 0
      %v821 = vsel %vm609, %v806, 0
      %v824 = vsel %vm609, %v807, 0
      %v827 = vsel %vm609, %v808, 0
      %v830 = vsel %vm609, %v809, 0
      %v833 = vsel %vm609, %v810, 0
      %v836 = vsel %vm613, %v658, 0
      %838 = vmatprep.subr.bf16.mxu0 0
      %839 = vmatpush1.bf16.msra.mxu0 %v836
      %840 = vmatprep.subr.bf16.mxu0 0
      %841 = vmatpush1.bf16.msra.mxu0 0
      %842 = vmatprep.subr.bf16.mxu0 0
      %843 = vmatpush1.bf16.msra.mxu0 0
      %844 = vmatprep.subr.bf16.mxu0 0
      %845 = vmatpush1.bf16.msra.mxu0 0
      %846 = vmatprep.subr.bf16.mxu0 0
      %847 = vmatpush1.bf16.msra.mxu0 0
      %848 = vmatprep.subr.bf16.mxu0 0
      %849 = vmatpush1.bf16.msra.mxu0 0
      %850 = vmatprep.subr.bf16.mxu0 0
      %851 = vmatpush1.bf16.msra.mxu0 0
      %852 = vmatprep.subr.bf16.mxu0 0
      %853 = vmatpush1.bf16.msra.mxu0 0
      %854 = vmatprep.subr.bf16.mxu0 0
      %855 = vmatpush1.bf16.msra.mxu0 0
      %856 = vmatprep.subr.bf16.mxu0 0
      %857 = vmatpush1.bf16.msra.mxu0 0
      %858 = vmatprep.subr.bf16.mxu0 0
      %859 = vmatpush1.bf16.msra.mxu0 0
      %860 = vmatprep.subr.bf16.mxu0 0
      %861 = vmatpush1.bf16.msra.mxu0 0
      %862 = vmatprep.subr.bf16.mxu0 0
      %863 = vmatpush1.bf16.msra.mxu0 0
      %864 = vmatprep.subr.bf16.mxu0 0
      %865 = vmatpush1.bf16.msra.mxu0 0
      %866 = vmatprep.subr.bf16.mxu0 0
      %867 = vmatpush1.bf16.msra.mxu0 0
      %868 = vmatprep.subr.bf16.mxu0 0
      %869 = vmatpush1.bf16.msra.mxu0 0
      %870 = vmatprep.mubr.bf16.mxu0 0
      %871 = vmatmul.mubr.bf16.gmra.mrb[0].mxu0 %v812
      %v872 = vpop.f32.mrb[0].mxu0
      %v873 = vadd.f32 %v694, %v872
      %v874 = vpop.f32.mrb[0].mxu0
      %v875 = vpop.f32.mrb[0].mxu0
      %v876 = vadd.f32 %v699, %v875
      %v877 = vpop.f32.mrb[0].mxu0
      %878 = vmatprep.mubr.bf16.mxu0 0
      %879 = vmatmul.mubr.bf16.gmra.mrb[0].mxu0 %v815
      %v880 = vpop.f32.mrb[0].mxu0
      %v881 = vadd.f32 %v704, %v880
      %v882 = vpop.f32.mrb[0].mxu0
      %v883 = vpop.f32.mrb[0].mxu0
      %v884 = vadd.f32 %v709, %v883
      %v885 = vpop.f32.mrb[0].mxu0
      %886 = vmatprep.mubr.bf16.mxu0 0
      %887 = vmatmul.mubr.bf16.gmra.mrb[0].mxu0 %v818
      %v888 = vpop.f32.mrb[0].mxu0
      %v889 = vadd.f32 %v714, %v888
      %v890 = vpop.f32.mrb[0].mxu0
      %v891 = vpop.f32.mrb[0].mxu0
      %v892 = vadd.f32 %v719, %v891
      %v893 = vpop.f32.mrb[0].mxu0
      %894 = vmatprep.mubr.bf16.mxu0 0
      %895 = vmatmul.mubr.bf16.gmra.mrb[0].mxu0 %v821
      %v896 = vpop.f32.mrb[0].mxu0
      %v897 = vadd.f32 %v724, %v896
      %v898 = vpop.f32.mrb[0].mxu0
      %v899 = vpop.f32.mrb[0].mxu0
      %v900 = vadd.f32 %v729, %v899
      %v901 = vpop.f32.mrb[0].mxu0
      %902 = vmatprep.mubr.bf16.mxu0 0
      %903 = vmatmul.mubr.bf16.gmra.mrb[0].mxu0 %v824
      %v904 = vpop.f32.mrb[0].mxu0
      %v905 = vadd.f32 %v734, %v904
      %v906 = vpop.f32.mrb[0].mxu0
      %v907 = vpop.f32.mrb[0].mxu0
      %v908 = vadd.f32 %v739, %v907
      %v909 = vpop.f32.mrb[0].mxu0
      %910 = vmatprep.mubr.bf16.mxu0 0
      %911 = vmatmul.mubr.bf16.gmra.mrb[0].mxu0 %v827
      %v912 = vpop.f32.mrb[0].mxu0
      %v913 = vadd.f32 %v744, %v912
      %v914 = vpop.f32.mrb[0].mxu0
      %v915 = vpop.f32.mrb[0].mxu0
      %v916 = vadd.f32 %v749, %v915
      %v917 = vpop.f32.mrb[0].mxu0
      %918 = vmatprep.mubr.bf16.mxu0 0
      %919 = vmatmul.mubr.bf16.gmra.mrb[0].mxu0 %v830
      %v920 = vpop.f32.mrb[0].mxu0
      %v921 = vadd.f32 %v754, %v920
      %v922 = vpop.f32.mrb[0].mxu0
      %v923 = vpop.f32.mrb[0].mxu0
      %v924 = vadd.f32 %v759, %v923
      %v925 = vpop.f32.mrb[0].mxu0
      %926 = vmatprep.mubr.bf16.mxu0 0
      %927 = vmatmul.mubr.bf16.gmra.mrb[0].mxu0 %v833
      %v928 = vpop.f32.mrb[0].mxu0
      %v929 = vadd.f32 %v764, %v928
      %v930 = vpop.f32.mrb[0].mxu0
      %v931 = vpop.f32.mrb[0].mxu0
      %v932 = vadd.f32 %v769, %v931
      %v933 = vpop.f32.mrb[0].mxu0
      %934 = vdwg.mxu0
      %v935 = vmax.f32 %v873, 0.0
      %v936 = vmax.f32 %v876, 0.0
      %v937 = vmax.f32 %v881, 0.0
      %v938 = vmax.f32 %v884, 0.0
      %v939 = vmax.f32 %v889, 0.0
      %v940 = vmax.f32 %v892, 0.0
      %v941 = vmax.f32 %v897, 0.0
      %v942 = vmax.f32 %v900, 0.0
      %v943 = vmax.f32 %v905, 0.0
      %v944 = vmax.f32 %v908, 0.0
      %v945 = vmax.f32 %v913, 0.0
      %v946 = vmax.f32 %v916, 0.0
      %v947 = vmax.f32 %v921, 0.0
      %v948 = vmax.f32 %v924, 0.0
      %v949 = vmax.f32 %v929, 0.0
      %v950 = vmax.f32 %v932, 0.0
      %951 = vst [vmem:[%s522] sm:$0xff] %v935
      %952 = vst [vmem:[%s522 + $0x8] sm:$0xff] %v936
      %953 = vst [vmem:[%s522 + $0x10] sm:$0xff] %v937
      %954 = vst [vmem:[%s522 + $0x18] sm:$0xff] %v938
      %955 = vst [vmem:[%s522 + $0x20] sm:$0xff] %v939
      %956 = vst [vmem:[%s522 + $0x28] sm:$0xff] %v940
      %957 = vst [vmem:[%s522 + $0x30] sm:$0xff] %v941
      %958 = vst [vmem:[%s522 + $0x38] sm:$0xff] %v942
      %959 = vst [vmem:[%s522 + $0x40] sm:$0xff] %v943
      %960 = vst [vmem:[%s522 + $0x48] sm:$0xff] %v944
      %961 = vst [vmem:[%s522 + $0x50] sm:$0xff] %v945
      %962 = vst [vmem:[%s522 + $0x58] sm:$0xff] %v946
      %963 = vst [vmem:[%s522 + $0x60] sm:$0xff] %v947
      %964 = vst [vmem:[%s522 + $0x68] sm:$0xff] %v948
      %965 = vst [vmem:[%s522 + $0x70] sm:$0xff] %v949
      %966 = vst [vmem:[%s522 + $0x78] sm:$0xff] %v950
      %v967 = vld [vmem:[%s517] sm:$0xff]
      %v968 = vld [vmem:[%s517 + $0x8] sm:$0xff]
      %v969 = vld [vmem:[%s517 + $0x10] sm:$0xff]
      %v970 = vld [vmem:[%s517 + $0x18] sm:$0xff]
      %v971 = vld [vmem:[%s517 + $0x20] sm:$0xff]
      %v972 = vld [vmem:[%s517 + $0x28] sm:$0xff]
      %v973 = vld [vmem:[%s517 + $0x30] sm:$0xff]
      %v974 = vld [vmem:[%s517 + $0x38] sm:$0xff]
      %v975 = vld [vmem:[%s517 + $0x40] sm:$0xff]
      %v976 = vld [vmem:[%s517 + $0x48] sm:$0xff]
      %v977 = vld [vmem:[%s517 + $0x50] sm:$0xff]
      %v978 = vld [vmem:[%s517 + $0x58] sm:$0xff]
      %v979 = vld [vmem:[%s517 + $0x60] sm:$0xff]
      %v980 = vld [vmem:[%s517 + $0x68] sm:$0xff]
      %v981 = vld [vmem:[%s517 + $0x70] sm:$0xff]
      %v982 = vld [vmem:[%s517 + $0x78] sm:$0xff]
      %v983 = vpack.c.bf16 %v968, %v967
      %v984 = vpack.c.bf16 %v970, %v969
      %v985 = vpack.c.bf16 %v972, %v971
      %v986 = vpack.c.bf16 %v974, %v973
      %v987 = vpack.c.bf16 %v976, %v975
      %v988 = vpack.c.bf16 %v978, %v977
      %v989 = vpack.c.bf16 %v980, %v979
      %v990 = vpack.c.bf16 %v982, %v981
      %v991 = vld [vmem:[%s8] sm:$0xf]
      %v992 = vld [vmem:[%s9] sm:$0xff]
      %994 = vset.pattern.permute.xlu0 0
      %995 = vperm.xlu0 %994, %v992
      %v996 = vpop.permute.xlu0 %995
      %998 = vmatprep.subr.bf16.mxu0 0
      %999 = vmatpush1.bf16.msra.mxu0 %v983
      %1000 = vmatprep.subr.bf16.mxu0 0
      %1001 = vmatpush1.bf16.msra.mxu0 %v984
      %1002 = vmatprep.subr.bf16.mxu0 0
      %1003 = vmatpush1.bf16.msra.mxu0 %v985
      %1004 = vmatprep.subr.bf16.mxu0 0
      %1005 = vmatpush1.bf16.msra.mxu0 %v986
      %1006 = vmatprep.subr.bf16.mxu0 0
      %1007 = vmatpush1.bf16.msra.mxu0 %v987
      %1008 = vmatprep.subr.bf16.mxu0 0
      %1009 = vmatpush1.bf16.msra.mxu0 %v988
      %1010 = vmatprep.subr.bf16.mxu0 0
      %1011 = vmatpush1.bf16.msra.mxu0 %v989
      %1012 = vmatprep.subr.bf16.mxu0 0
      %1013 = vmatpush1.bf16.msra.mxu0 %v990
      %1014 = vmatprep.subr.bf16.mxu0 0
      %1015 = vmatpush1.bf16.msra.mxu0 0
      %1016 = vmatprep.subr.bf16.mxu0 0
      %1017 = vmatpush1.bf16.msra.mxu0 0
      %1018 = vmatprep.subr.bf16.mxu0 0
      %1019 = vmatpush1.bf16.msra.mxu0 0
      %1020 = vmatprep.subr.bf16.mxu0 0
      %1021 = vmatpush1.bf16.msra.mxu0 0
      %1022 = vmatprep.subr.bf16.mxu0 0
      %1023 = vmatpush1.bf16.msra.mxu0 0
      %1024 = vmatprep.subr.bf16.mxu0 0
      %1025 = vmatpush1.bf16.msra.mxu0 0
      %1026 = vmatprep.subr.bf16.mxu0 0
      %1027 = vmatpush1.bf16.msra.mxu0 0
      %1028 = vmatprep.subr.bf16.mxu0 0
      %1029 = vmatpush1.bf16.msra.mxu0 0
      %1030 = vmatprep.mubr.bf16.mxu0 0
      %1031 = vmatmul.mubr.bf16.gmra.mrb[0].mxu0 %v991
      %v1032 = vpop.f32.mrb[0].mxu0
      %v1033 = vadd.f32 %v996, %v1032
      %v1034 = vpop.f32.mrb[0].mxu0
      %v1035 = vpop.f32.mrb[0].mxu0
      %v1036 = vpop.f32.mrb[0].mxu0
      %1037 = vdwg.mxu0
      %v1038 = vmax.f32 %v1033, 0.0
      %v1039 = vpack.c.bf16 %v1038, %v1038
      %v1040 = vld [vmem:[%s10] sm:$0xf]
      %v1041 = vld [vmem:[%s11] sm:$0xff]
      %1043 = vset.pattern.permute.xlu0 0
      %1044 = vperm.xlu0 %1043, %v1041
      %v1045 = vpop.permute.xlu0 %1044
      %v1048 = vsel %vm609, %v1040, 0
      %v1051 = vsel %vm613, %v1039, 0
      %1053 = vmatprep.subr.bf16.mxu0 0
      %1054 = vmatpush1.bf16.msra.mxu0 %v1051
      %1055 = vmatprep.subr.bf16.mxu0 0
      %1056 = vmatpush1.bf16.msra.mxu0 0
      %1057 = vmatprep.subr.bf16.mxu0 0
      %1058 = vmatpush1.bf16.msra.mxu0 0
      %1059 = vmatprep.subr.bf16.mxu0 0
      %1060 = vmatpush1.bf16.msra.mxu0 0
      %1061 = vmatprep.subr.bf16.mxu0 0
      %1062 = vmatpush1.bf16.msra.mxu0 0
      %1063 = vmatprep.subr.bf16.mxu0 0
      %1064 = vmatpush1.bf16.msra.mxu0 0
      %1065 = vmatprep.subr.bf16.mxu0 0
      %1066 = vmatpush1.bf16.msra.mxu0 0
      %1067 = vmatprep.subr.bf16.mxu0 0
      %1068 = vmatpush1.bf16.msra.mxu0 0
      %1069 = vmatprep.subr.bf16.mxu0 0
      %1070 = vmatpush1.bf16.msra.mxu0 0
      %1071 = vmatprep.subr.bf16.mxu0 0
      %1072 = vmatpush1.bf16.msra.mxu0 0
      %1073 = vmatprep.subr.bf16.mxu0 0
      %1074 = vmatpush1.bf16.msra.mxu0 0
      %1075 = vmatprep.subr.bf16.mxu0 0
      %1076 = vmatpush1.bf16.msra.mxu0 0
      %1077 = vmatprep.subr.bf16.mxu0 0
      %1078 = vmatpush1.bf16.msra.mxu0 0
      %1079 = vmatprep.subr.bf16.mxu0 0
      %1080 = vmatpush1.bf16.msra.mxu0 0
      %1081 = vmatprep.subr.bf16.mxu0 0
      %1082 = vmatpush1.bf16.msra.mxu0 0
      %1083 = vmatprep.subr.bf16.mxu0 0
      %1084 = vmatpush1.bf16.msra.mxu0 0
      %1085 = vmatprep.mubr.bf16.mxu0 0
      %1086 = vmatmul.mubr.bf16.gmra.mrb[0].mxu0 %v1048
      %v1087 = vpop.f32.mrb[0].mxu0
      %v1088 = vadd.f32 %v1045, %v1087
      %v1089 = vpop.f32.mrb[0].mxu0
      %v1090 = vpop.f32.mrb[0].mxu0
      %v1091 = vpop.f32.mrb[0].mxu0
      %1092 = vdwg.mxu0
      %v1093 = vmax.f32 %v1088, 0.0
      %v1094 = vpack.c.bf16 %v1093, %v1093
      %v1095 = vld [vmem:[%s12] sm:$0xf]
      %v1096 = vld [vmem:[%s12 + $0x4] sm:$0xf]
      %v1097 = vld [vmem:[%s12 + $0x8] sm:$0xf]
      %v1098 = vld [vmem:[%s12 + $0xc] sm:$0xf]
      %v1099 = vld [vmem:[%s12 + $0x10] sm:$0xf]
      %v1100 = vld [vmem:[%s12 + $0x14] sm:$0xf]
      %v1101 = vld [vmem:[%s12 + $0x18] sm:$0xf]
      %v1102 = vld [vmem:[%s12 + $0x1c] sm:$0xf]
      %v1103 = vld [vmem:[%s12 + $0x20] sm:$0xf]
      %v1104 = vld [vmem:[%s12 + $0x24] sm:$0xf]
      %v1105 = vld [vmem:[%s12 + $0x28] sm:$0xf]
      %v1106 = vld [vmem:[%s12 + $0x2c] sm:$0xf]
      %v1107 = vld [vmem:[%s12 + $0x30] sm:$0xf]
      %v1108 = vld [vmem:[%s12 + $0x34] sm:$0xf]
      %v1109 = vld [vmem:[%s12 + $0x38] sm:$0xf]
      %v1110 = vld [vmem:[%s12 + $0x3c] sm:$0xf]
      %v1111 = vld [vmem:[%s13] sm:$0xff]
      %v1112 = vld [vmem:[%s13 + $0x8] sm:$0xff]
      %v1113 = vld [vmem:[%s13 + $0x10] sm:$0xff]
      %v1114 = vld [vmem:[%s13 + $0x18] sm:$0xff]
      %v1115 = vld [vmem:[%s13 + $0x20] sm:$0xff]
      %v1116 = vld [vmem:[%s13 + $0x28] sm:$0xff]
      %v1117 = vld [vmem:[%s13 + $0x30] sm:$0xff]
      %v1118 = vld [vmem:[%s13 + $0x38] sm:$0xff]
      %v1119 = vld [vmem:[%s13 + $0x40] sm:$0xff]
      %v1120 = vld [vmem:[%s13 + $0x48] sm:$0xff]
      %v1121 = vld [vmem:[%s13 + $0x50] sm:$0xff]
      %v1122 = vld [vmem:[%s13 + $0x58] sm:$0xff]
      %v1123 = vld [vmem:[%s13 + $0x60] sm:$0xff]
      %v1124 = vld [vmem:[%s13 + $0x68] sm:$0xff]
      %v1125 = vld [vmem:[%s13 + $0x70] sm:$0xff]
      %v1126 = vld [vmem:[%s13 + $0x78] sm:$0xff]
      %1128 = vset.pattern.permute.xlu0 0
      %1129 = vperm.xlu0 %1128, %v1111
      %v1130 = vpop.permute.xlu0 %1129
      %1133 = vset.pattern.permute.xlu0 0
      %1134 = vperm.xlu0 %1133, %v1112
      %v1135 = vpop.permute.xlu0 %1134
      %1138 = vset.pattern.permute.xlu0 0
      %1139 = vperm.xlu0 %1138, %v1113
      %v1140 = vpop.permute.xlu0 %1139
      %1143 = vset.pattern.permute.xlu0 0
      %1144 = vperm.xlu0 %1143, %v1114
      %v1145 = vpop.permute.xlu0 %1144
      %1148 = vset.pattern.permute.xlu0 0
      %1149 = vperm.xlu0 %1148, %v1115
      %v1150 = vpop.permute.xlu0 %1149
      %1153 = vset.pattern.permute.xlu0 0
      %1154 = vperm.xlu0 %1153, %v1116
      %v1155 = vpop.permute.xlu0 %1154
      %1158 = vset.pattern.permute.xlu0 0
      %1159 = vperm.xlu0 %1158, %v1117
      %v1160 = vpop.permute.xlu0 %1159
      %1163 = vset.pattern.permute.xlu0 0
      %1164 = vperm.xlu0 %1163, %v1118
      %v1165 = vpop.permute.xlu0 %1164
      %1168 = vset.pattern.permute.xlu0 0
      %1169 = vperm.xlu0 %1168, %v1119
      %v1170 = vpop.permute.xlu0 %1169
      %1173 = vset.pattern.permute.xlu0 0
      %1174 = vperm.xlu0 %1173, %v1120
      %v1175 = vpop.permute.xlu0 %1174
      %1178 = vset.pattern.permute.xlu0 0
      %1179 = vperm.xlu0 %1178, %v1121
      %v1180 = vpop.permute.xlu0 %1179
      %1183 = vset.pattern.permute.xlu0 0
      %1184 = vperm.xlu0 %1183, %v1122
      %v1185 = vpop.permute.xlu0 %1184
      %1188 = vset.pattern.permute.xlu0 0
      %1189 = vperm.xlu0 %1188, %v1123
      %v1190 = vpop.permute.xlu0 %1189
      %1193 = vset.pattern.permute.xlu0 0
      %1194 = vperm.xlu0 %1193, %v1124
      %v1195 = vpop.permute.xlu0 %1194
      %1198 = vset.pattern.permute.xlu0 0
      %1199 = vperm.xlu0 %1198, %v1125
      %v1200 = vpop.permute.xlu0 %1199
      %1203 = vset.pattern.permute.xlu0 0
      %1204 = vperm.xlu0 %1203, %v1126
      %v1205 = vpop.permute.xlu0 %1204
      %v1223 = vunpack.c.l.b16 %v1095
      %v1224 = vunpack.c.l.b16 %v1096
      %v1225 = vunpack.c.l.b16 %v1097
      %v1226 = vunpack.c.l.b16 %v1098
      %v1227 = vunpack.c.l.b16 %v1099
      %v1228 = vunpack.c.l.b16 %v1100
      %v1229 = vunpack.c.l.b16 %v1101
      %v1230 = vunpack.c.l.b16 %v1102
      %v1231 = vunpack.c.l.b16 %v1103
      %v1232 = vunpack.c.l.b16 %v1104
      %v1233 = vunpack.c.l.b16 %v1105
      %v1234 = vunpack.c.l.b16 %v1106
      %v1235 = vunpack.c.l.b16 %v1107
      %v1236 = vunpack.c.l.b16 %v1108
      %v1237 = vunpack.c.l.b16 %v1109
      %v1238 = vunpack.c.l.b16 %v1110
      %v1239 = vpack.c.b16 %v1224, %v1223
      %v1240 = vpack.c.b16 %v1226, %v1225
      %v1241 = vpack.c.b16 %v1228, %v1227
      %v1242 = vpack.c.b16 %v1230, %v1229
      %v1243 = vpack.c.b16 %v1232, %v1231
      %v1244 = vpack.c.b16 %v1234, %v1233
      %v1245 = vpack.c.b16 %v1236, %v1235
      %v1246 = vpack.c.b16 %v1238, %v1237
      %v1248 = vsel %vm609, %v1239, 0
      %v1251 = vsel %vm609, %v1240, 0
      %v1254 = vsel %vm609, %v1241, 0
      %v1257 = vsel %vm609, %v1242, 0
      %v1260 = vsel %vm609, %v1243, 0
      %v1263 = vsel %vm609, %v1244, 0
      %v1266 = vsel %vm609, %v1245, 0
      %v1269 = vsel %vm609, %v1246, 0
      %v1272 = vsel %vm613, %v1094, 0
      %1274 = vmatprep.subr.bf16.mxu0 0
      %1275 = vmatpush1.bf16.msra.mxu0 %v1272
      %1276 = vmatprep.subr.bf16.mxu0 0
      %1277 = vmatpush1.bf16.msra.mxu0 0
      %1278 = vmatprep.subr.bf16.mxu0 0
      %1279 = vmatpush1.bf16.msra.mxu0 0
      %1280 = vmatprep.subr.bf16.mxu0 0
      %1281 = vmatpush1.bf16.msra.mxu0 0
      %1282 = vmatprep.subr.bf16.mxu0 0
      %1283 = vmatpush1.bf16.msra.mxu0 0
      %1284 = vmatprep.subr.bf16.mxu0 0
      %1285 = vmatpush1.bf16.msra.mxu0 0
      %1286 = vmatprep.subr.bf16.mxu0 0
      %1287 = vmatpush1.bf16.msra.mxu0 0
      %1288 = vmatprep.subr.bf16.mxu0 0
      %1289 = vmatpush1.bf16.msra.mxu0 0
      %1290 = vmatprep.subr.bf16.mxu0 0
      %1291 = vmatpush1.bf16.msra.mxu0 0
      %1292 = vmatprep.subr.bf16.mxu0 0
      %1293 = vmatpush1.bf16.msra.mxu0 0
      %1294 = vmatprep.subr.bf16.mxu0 0
      %1295 = vmatpush1.bf16.msra.mxu0 0
      %1296 = vmatprep.subr.bf16.mxu0 0
      %1297 = vmatpush1.bf16.msra.mxu0 0
      %1298 = vmatprep.subr.bf16.mxu0 0
      %1299 = vmatpush1.bf16.msra.mxu0 0
      %1300 = vmatprep.subr.bf16.mxu0 0
      %1301 = vmatpush1.bf16.msra.mxu0 0
      %1302 = vmatprep.subr.bf16.mxu0 0
      %1303 = vmatpush1.bf16.msra.mxu0 0
      %1304 = vmatprep.subr.bf16.mxu0 0
      %1305 = vmatpush1.bf16.msra.mxu0 0
      %1306 = vmatprep.mubr.bf16.mxu0 0
      %1307 = vmatmul.mubr.bf16.gmra.mrb[0].mxu0 %v1248
      %v1308 = vpop.f32.mrb[0].mxu0
      %v1309 = vadd.f32 %v1130, %v1308
      %v1310 = vpop.f32.mrb[0].mxu0
      %v1311 = vpop.f32.mrb[0].mxu0
      %v1312 = vadd.f32 %v1135, %v1311
      %v1313 = vpop.f32.mrb[0].mxu0
      %1314 = vmatprep.mubr.bf16.mxu0 0
      %1315 = vmatmul.mubr.bf16.gmra.mrb[0].mxu0 %v1251
      %v1316 = vpop.f32.mrb[0].mxu0
      %v1317 = vadd.f32 %v1140, %v1316
      %v1318 = vpop.f32.mrb[0].mxu0
      %v1319 = vpop.f32.mrb[0].mxu0
      %v1320 = vadd.f32 %v1145, %v1319
      %v1321 = vpop.f32.mrb[0].mxu0
      %1322 = vmatprep.mubr.bf16.mxu0 0
      %1323 = vmatmul.mubr.bf16.gmra.mrb[0].mxu0 %v1254
      %v1324 = vpop.f32.mrb[0].mxu0
      %v1325 = vadd.f32 %v1150, %v1324
      %v1326 = vpop.f32.mrb[0].mxu0
      %v1327 = vpop.f32.mrb[0].mxu0
      %v1328 = vadd.f32 %v1155, %v1327
      %v1329 = vpop.f32.mrb[0].mxu0
      %1330 = vmatprep.mubr.bf16.mxu0 0
      %1331 = vmatmul.mubr.bf16.gmra.mrb[0].mxu0 %v1257
      %v1332 = vpop.f32.mrb[0].mxu0
      %v1333 = vadd.f32 %v1160, %v1332
      %v1334 = vpop.f32.mrb[0].mxu0
      %v1335 = vpop.f32.mrb[0].mxu0
      %v1336 = vadd.f32 %v1165, %v1335
      %v1337 = vpop.f32.mrb[0].mxu0
      %1338 = vmatprep.mubr.bf16.mxu0 0
      %1339 = vmatmul.mubr.bf16.gmra.mrb[0].mxu0 %v1260
      %v1340 = vpop.f32.mrb[0].mxu0
      %v1341 = vadd.f32 %v1170, %v1340
      %v1342 = vpop.f32.mrb[0].mxu0
      %v1343 = vpop.f32.mrb[0].mxu0
      %v1344 = vadd.f32 %v1175, %v1343
      %v1345 = vpop.f32.mrb[0].mxu0
      %1346 = vmatprep.mubr.bf16.mxu0 0
      %1347 = vmatmul.mubr.bf16.gmra.mrb[0].mxu0 %v1263
      %v1348 = vpop.f32.mrb[0].mxu0
      %v1349 = vadd.f32 %v1180, %v1348
      %v1350 = vpop.f32.mrb[0].mxu0
      %v1351 = vpop.f32.mrb[0].mxu0
      %v1352 = vadd.f32 %v1185, %v1351
      %v1353 = vpop.f32.mrb[0].mxu0
      %1354 = vmatprep.mubr.bf16.mxu0 0
      %1355 = vmatmul.mubr.bf16.gmra.mrb[0].mxu0 %v1266
      %v1356 = vpop.f32.mrb[0].mxu0
      %v1357 = vadd.f32 %v1190, %v1356
      %v1358 = vpop.f32.mrb[0].mxu0
      %v1359 = vpop.f32.mrb[0].mxu0
      %v1360 = vadd.f32 %v1195, %v1359
      %v1361 = vpop.f32.mrb[0].mxu0
      %1362 = vmatprep.mubr.bf16.mxu0 0
      %1363 = vmatmul.mubr.bf16.gmra.mrb[0].mxu0 %v1269
      %v1364 = vpop.f32.mrb[0].mxu0
      %v1365 = vadd.f32 %v1200, %v1364
      %v1366 = vpop.f32.mrb[0].mxu0
      %v1367 = vpop.f32.mrb[0].mxu0
      %v1368 = vadd.f32 %v1205, %v1367
      %v1369 = vpop.f32.mrb[0].mxu0
      %1370 = vdwg.mxu0
      %v1371 = vmax.f32 %v1309, 0.0
      %v1372 = vmax.f32 %v1312, 0.0
      %v1373 = vmax.f32 %v1317, 0.0
      %v1374 = vmax.f32 %v1320, 0.0
      %v1375 = vmax.f32 %v1325, 0.0
      %v1376 = vmax.f32 %v1328, 0.0
      %v1377 = vmax.f32 %v1333, 0.0
      %v1378 = vmax.f32 %v1336, 0.0
      %v1379 = vmax.f32 %v1341, 0.0
      %v1380 = vmax.f32 %v1344, 0.0
      %v1381 = vmax.f32 %v1349, 0.0
      %v1382 = vmax.f32 %v1352, 0.0
      %v1383 = vmax.f32 %v1357, 0.0
      %v1384 = vmax.f32 %v1360, 0.0
      %v1385 = vmax.f32 %v1365, 0.0
      %v1386 = vmax.f32 %v1368, 0.0
      %1387 = vst [vmem:[%s527] sm:$0xff] %v1371
      %1388 = vst [vmem:[%s527 + $0x8] sm:$0xff] %v1372
      %1389 = vst [vmem:[%s527 + $0x10] sm:$0xff] %v1373
      %1390 = vst [vmem:[%s527 + $0x18] sm:$0xff] %v1374
      %1391 = vst [vmem:[%s527 + $0x20] sm:$0xff] %v1375
      %1392 = vst [vmem:[%s527 + $0x28] sm:$0xff] %v1376
      %1393 = vst [vmem:[%s527 + $0x30] sm:$0xff] %v1377
      %1394 = vst [vmem:[%s527 + $0x38] sm:$0xff] %v1378
      %1395 = vst [vmem:[%s527 + $0x40] sm:$0xff] %v1379
      %1396 = vst [vmem:[%s527 + $0x48] sm:$0xff] %v1380
      %1397 = vst [vmem:[%s527 + $0x50] sm:$0xff] %v1381
      %1398 = vst [vmem:[%s527 + $0x58] sm:$0xff] %v1382
      %1399 = vst [vmem:[%s527 + $0x60] sm:$0xff] %v1383
      %1400 = vst [vmem:[%s527 + $0x68] sm:$0xff] %v1384
      %1401 = vst [vmem:[%s527 + $0x70] sm:$0xff] %v1385
      %1402 = vst [vmem:[%s527 + $0x78] sm:$0xff] %v1386
      %p1403 = scmp.lt.s32.totalorder %s27, 1
      %s1404 = scalar_select %p1403, %s27, 1
      %s1405 = smul.addr %s1404, 16
      %s1406 = smul.addr %s1405, 8
      %s1407 = scalar_lea.vmem %s14, %s1406
      %p1408 = scmp.lt.s32.totalorder %s27, 1
      %s1409 = scalar_select %p1408, %s27, 1
      %s1410 = smul.addr %s1409, 16
      %s1411 = smul.addr %s1410, 8
      %s1412 = scalar_lea.vmem %s15, %s1411
      // Predicated region
      $region77: #{tri_res_v4_forward.4} parent=75 // pred_check
        %p1413 = pneg %p349
      $region78: #{tri_res_v4_forward.4} parent=75 // pred_check_branch
        %1415 = sbr.rel (%p1413) target = $region80
      $region79: #{tri_res_v4_forward.4} parent=75 // pred_region
        _
      $region80: #{tri_res_v4_forward.4} parent=75 // pred_fallthru
        _
      // Predicated region
      $region81: #{tri_res_v4_forward.4} parent=75 // pred_check
        %p1416 = pneg %p375
      $region82: #{tri_res_v4_forward.4} parent=75 // pred_check_branch
        %1418 = sbr.rel (%p1416) target = $region84
      $region83: #{tri_res_v4_forward.4} parent=75 // pred_region
        _
      $region84: #{tri_res_v4_forward.4} parent=75 // pred_fallthru
        _
    $region76: #{tri_res_v4_forward.4} parent=5 // pred_fallthru
      _
    %p1419 = scmp.le.s32.totalorder 2, %s22
    // Predicated region
    $region85: #{tri_res_v4_forward.4} parent=5 // pred_check
      %p1420 = pneg %p1419
    $region86: #{tri_res_v4_forward.4} parent=5 // pred_check_branch
      %1422 = sbr.rel (%p1420) target = $region88
    $region87: #{tri_res_v4_forward.4} parent=5 // pred_region
      %s1423 = ssub.s32 %s22, 2
      // Predicated region
      $region89: #{tri_res_v4_forward.4} parent=87 // pred_check
        %p1424 = pneg %p355
      $region90: #{tri_res_v4_forward.4} parent=87 // pred_check_branch
        %1426 = sbr.rel (%p1424) target = $region92
      $region91: #{tri_res_v4_forward.4} parent=87 // pred_region
        %p1427 = scmp.lt.s32.totalorder %s28, 1
        %s1428 = scalar_select %p1427, %s28, 1
        %s1429 = smul.addr %s1428, 16
        %s1430 = smul.addr %s1429, 8
        %s1431 = scalar_lea.vmem %s14, %s1430
      $region92: #{tri_res_v4_forward.4} parent=87 // pred_fallthru
        _
      // Predicated region
      $region93: #{tri_res_v4_forward.4} parent=87 // pred_check
        %p1432 = pneg %p381
      $region94: #{tri_res_v4_forward.4} parent=87 // pred_check_branch
        %1434 = sbr.rel (%p1432) target = $region96
      $region95: #{tri_res_v4_forward.4} parent=87 // pred_region
        %p1435 = scmp.lt.s32.totalorder %s28, 1
        %s1436 = scalar_select %p1435, %s28, 1
        %s1437 = smul.addr %s1436, 16
        %s1438 = smul.addr %s1437, 8
        %s1439 = scalar_lea.vmem %s15, %s1438
      $region96: #{tri_res_v4_forward.4} parent=87 // pred_fallthru
        _
    $region88: #{tri_res_v4_forward.4} parent=5 // pred_fallthru
      _
  $region6: #{tri_res_v4_forward.4} parent=0 // loop_footer
    %s26 = sadd.s32 1, %s22
  $region7: #{tri_res_v4_forward.4} parent=0 // loop_footer_branch
    %21 = sbr.rel target = $region3
  $region8: #{tri_res_v4_forward.4} parent=0 // loop_exit
    _

// kernel: tri_res_v4_forward.5
$region0: #{tri_res_v4_forward.5}
  #allocation0 [shape = 'u32[]', space=smem, size = 0x4, offset = 0x4, fixed_abs, tag = 'smem constant byte address 0x4 - core index']
  #allocation1 [shape = 'u32[144,128]{1,0:T(1,128)}', space=vmem, size = 0x12000, scoped, tag = 'internal scratch']
  %s0 = inlined_call_operand.vmem [shape: f32[2,8,2048], index: 0, kind: input, shape index: {}]
  %s1 = inlined_call_operand.vmem [shape: f32[2,8,2048], index: 1, kind: input, shape index: {}]
  %s2 = inlined_call_operand.vmem [shape: f32[2,8,2048], index: 2, kind: input, shape index: {}]
  %s3 = inlined_call_operand.vmem [shape: bf16[8,8], index: 3, kind: input, shape index: {}]
  %s4 = inlined_call_operand.vmem [shape: bf16[8,8], index: 4, kind: input, shape index: {}]
  %s5 = inlined_call_operand.vmem [shape: f32[8,1], index: 5, kind: input, shape index: {}]
  %s6 = inlined_call_operand.vmem [shape: bf16[8,8], index: 6, kind: input, shape index: {}]
  %s7 = inlined_call_operand.vmem [shape: f32[8,1], index: 7, kind: input, shape index: {}]
  %s8 = inlined_call_operand.vmem [shape: f32[2,8,2048], index: 8, kind: output, shape index: {}]
  %s9 = sld [smem:[#allocation0]]
  $region65: #{tri_res_v4_forward.5} parent=0
    _
  %s11 = ssub.s32 1, %s9
  %s12 = scalar_select 0, %s11, %s9
  loop: start=0, step=1, limit=4
  $region2: #{tri_res_v4_forward.5} parent=0 // loop_pre_header
    _
  $region3: #{tri_res_v4_forward.5} parent=0 // loop_header
    %s14 = sphi 0, %s18
    %p15 = scmp.ge.s32.totalorder %s14, 4
    %s24 = sphi 0, %s26
    %s27 = sphi 0, %s24
    %s28 = sphi 0, %s27
    %s44 = sphi 0, %s28
    %s50 = sphi 0, %s52
    %s53 = sphi 0, %s50
    %s54 = sphi 0, %s53
    %s70 = sphi 0, %s54
    %s76 = sphi 0, %s78
    %s79 = sphi 0, %s76
    %s80 = sphi 0, %s79
    %s96 = sphi 0, %s80
    %s100 = sphi 0, %s100
    %s102 = sphi 0, %s100
    %s103 = sphi 0, %s102
    %s117 = sphi 0, %s103
    %s121 = sphi 0, %s121
    %s123 = sphi 0, %s121
    %s124 = sphi 0, %s123
    %s138 = sphi 0, %s124
    %s142 = sphi 0, %s142
    %s144 = sphi 0, %s142
    %s145 = sphi 0, %s144
    %s159 = sphi 0, %s145
    %s163 = sphi 0, %s163
    %s165 = sphi 0, %s163
    %s166 = sphi 0, %s165
    %s180 = sphi 0, %s166
    %s184 = sphi 0, %s184
    %s186 = sphi 0, %s184
    %s187 = sphi 0, %s186
    %s201 = sphi 0, %s187
    %s207 = sphi 0, %s209
    %s210 = sphi 0, %s207
    %s211 = sphi 0, %s210
    %s227 = sphi 0, %s211
  $region4: #{tri_res_v4_forward.5} parent=0 // loop_header_branch
    %17 = sbr.rel (%p15) target = $region8
  $region5: #{tri_res_v4_forward.5} parent=0 // loop_body
    %s19 = ssub.s32 %s14, 1
    %s20 = ssub.s32 %s14, 2
    %s21 = sadd.s32 %s14, 1
    %s22 = ssub.s32 %s14, %s21
    %p23 = scmp.eq.s32.totalorder %s22, 0
    %s25 = sadd.s32 %s24, 1
    %s26 = scalar_select %p23, %s24, %s25
    %p29 = pneg %p23
    %p30 = scmp.eq.s32.totalorder %s14, 1
    %p31 = por %p29, %p30
    %p32 = scmp.ne.s32.totalorder %s24, %s27
    %p33 = scmp.eq.s32.totalorder %s14, 0
    %p34 = por %p32, %p33
    %p35 = scmp.ne.s32.totalorder %s24, %s27
    %p36 = scmp.eq.s32.totalorder %s19, 1
    %p37 = por %p35, %p36
    %p38 = scmp.ne.s32.totalorder %s27, %s28
    %p39 = scmp.eq.s32.totalorder %s19, 0
    %p40 = por %p38, %p39
    %p41 = scmp.ne.s32.totalorder %s27, %s28
    %p42 = scmp.eq.s32.totalorder %s20, 1
    %p43 = por %p41, %p42
    %p45 = scmp.ne.s32.totalorder %s28, %s44
    %p46 = scmp.eq.s32.totalorder %s20, 0
    %p47 = por %p45, %p46
    %s48 = ssub.s32 %s14, %s21
    %p49 = scmp.eq.s32.totalorder %s48, 0
    %s51 = sadd.s32 %s50, 1
    %s52 = scalar_select %p49, %s50, %s51
    %p55 = pneg %p49
    %p56 = scmp.eq.s32.totalorder %s14, 1
    %p57 = por %p55, %p56
    %p58 = scmp.ne.s32.totalorder %s50, %s53
    %p59 = scmp.eq.s32.totalorder %s14, 0
    %p60 = por %p58, %p59
    %p61 = scmp.ne.s32.totalorder %s50, %s53
    %p62 = scmp.eq.s32.totalorder %s19, 1
    %p63 = por %p61, %p62
    %p64 = scmp.ne.s32.totalorder %s53, %s54
    %p65 = scmp.eq.s32.totalorder %s19, 0
    %p66 = por %p64, %p65
    %p67 = scmp.ne.s32.totalorder %s53, %s54
    %p68 = scmp.eq.s32.totalorder %s20, 1
    %p69 = por %p67, %p68
    %p71 = scmp.ne.s32.totalorder %s54, %s70
    %p72 = scmp.eq.s32.totalorder %s20, 0
    %p73 = por %p71, %p72
    %s74 = ssub.s32 %s14, %s21
    %p75 = scmp.eq.s32.totalorder %s74, 0
    %s77 = sadd.s32 %s76, 1
    %s78 = scalar_select %p75, %s76, %s77
    %p81 = pneg %p75
    %p82 = scmp.eq.s32.totalorder %s14, 1
    %p83 = por %p81, %p82
    %p84 = scmp.ne.s32.totalorder %s76, %s79
    %p85 = scmp.eq.s32.totalorder %s14, 0
    %p86 = por %p84, %p85
    %p87 = scmp.ne.s32.totalorder %s76, %s79
    %p88 = scmp.eq.s32.totalorder %s19, 1
    %p89 = por %p87, %p88
    %p90 = scmp.ne.s32.totalorder %s79, %s80
    %p91 = scmp.eq.s32.totalorder %s19, 0
    %p92 = por %p90, %p91
    %p93 = scmp.ne.s32.totalorder %s79, %s80
    %p94 = scmp.eq.s32.totalorder %s20, 1
    %p95 = por %p93, %p94
    %p97 = scmp.ne.s32.totalorder %s80, %s96
    %p98 = scmp.eq.s32.totalorder %s20, 0
    %p99 = por %p97, %p98
    %s101 = sadd.s32 %s100, 1
    %p104 = scmp.eq.s32.totalorder %s14, 1
    %p105 = scmp.ne.s32.totalorder %s100, %s102
    %p106 = scmp.eq.s32.totalorder %s14, 0
    %p107 = por %p105, %p106
    %p108 = scmp.ne.s32.totalorder %s100, %s102
    %p109 = scmp.eq.s32.totalorder %s19, 1
    %p110 = por %p108, %p109
    %p111 = scmp.ne.s32.totalorder %s102, %s103
    %p112 = scmp.eq.s32.totalorder %s19, 0
    %p113 = por %p111, %p112
    %p114 = scmp.ne.s32.totalorder %s102, %s103
    %p115 = scmp.eq.s32.totalorder %s20, 1
    %p116 = por %p114, %p115
    %p118 = scmp.ne.s32.totalorder %s103, %s117
    %p119 = scmp.eq.s32.totalorder %s20, 0
    %p120 = por %p118, %p119
    %s122 = sadd.s32 %s121, 1
    %p125 = scmp.eq.s32.totalorder %s14, 1
    %p126 = scmp.ne.s32.totalorder %s121, %s123
    %p127 = scmp.eq.s32.totalorder %s14, 0
    %p128 = por %p126, %p127
    %p129 = scmp.ne.s32.totalorder %s121, %s123
    %p130 = scmp.eq.s32.totalorder %s19, 1
    %p131 = por %p129, %p130
    %p132 = scmp.ne.s32.totalorder %s123, %s124
    %p133 = scmp.eq.s32.totalorder %s19, 0
    %p134 = por %p132, %p133
    %p135 = scmp.ne.s32.totalorder %s123, %s124
    %p136 = scmp.eq.s32.totalorder %s20, 1
    %p137 = por %p135, %p136
    %p139 = scmp.ne.s32.totalorder %s124, %s138
    %p140 = scmp.eq.s32.totalorder %s20, 0
    %p141 = por %p139, %p140
    %s143 = sadd.s32 %s142, 1
    %p146 = scmp.eq.s32.totalorder %s14, 1
    %p147 = scmp.ne.s32.totalorder %s142, %s144
    %p148 = scmp.eq.s32.totalorder %s14, 0
    %p149 = por %p147, %p148
    %p150 = scmp.ne.s32.totalorder %s142, %s144
    %p151 = scmp.eq.s32.totalorder %s19, 1
    %p152 = por %p150, %p151
    %p153 = scmp.ne.s32.totalorder %s144, %s145
    %p154 = scmp.eq.s32.totalorder %s19, 0
    %p155 = por %p153, %p154
    %p156 = scmp.ne.s32.totalorder %s144, %s145
    %p157 = scmp.eq.s32.totalorder %s20, 1
    %p158 = por %p156, %p157
    %p160 = scmp.ne.s32.totalorder %s145, %s159
    %p161 = scmp.eq.s32.totalorder %s20, 0
    %p162 = por %p160, %p161
    %s164 = sadd.s32 %s163, 1
    %p167 = scmp.eq.s32.totalorder %s14, 1
    %p168 = scmp.ne.s32.totalorder %s163, %s165
    %p169 = scmp.eq.s32.totalorder %s14, 0
    %p170 = por %p168, %p169
    %p171 = scmp.ne.s32.totalorder %s163, %s165
    %p172 = scmp.eq.s32.totalorder %s19, 1
    %p173 = por %p171, %p172
    %p174 = scmp.ne.s32.totalorder %s165, %s166
    %p175 = scmp.eq.s32.totalorder %s19, 0
    %p176 = por %p174, %p175
    %p177 = scmp.ne.s32.totalorder %s165, %s166
    %p178 = scmp.eq.s32.totalorder %s20, 1
    %p179 = por %p177, %p178
    %p181 = scmp.ne.s32.totalorder %s166, %s180
    %p182 = scmp.eq.s32.totalorder %s20, 0
    %p183 = por %p181, %p182
    %s185 = sadd.s32 %s184, 1
    %p188 = scmp.eq.s32.totalorder %s14, 1
    %p189 = scmp.ne.s32.totalorder %s184, %s186
    %p190 = scmp.eq.s32.totalorder %s14, 0
    %p191 = por %p189, %p190
    %p192 = scmp.ne.s32.totalorder %s184, %s186
    %p193 = scmp.eq.s32.totalorder %s19, 1
    %p194 = por %p192, %p193
    %p195 = scmp.ne.s32.totalorder %s186, %s187
    %p196 = scmp.eq.s32.totalorder %s19, 0
    %p197 = por %p195, %p196
    %p198 = scmp.ne.s32.totalorder %s186, %s187
    %p199 = scmp.eq.s32.totalorder %s20, 1
    %p200 = por %p198, %p199
    %p202 = scmp.ne.s32.totalorder %s187, %s201
    %p203 = scmp.eq.s32.totalorder %s20, 0
    %p204 = por %p202, %p203
    %s205 = ssub.s32 %s14, %s21
    %p206 = scmp.eq.s32.totalorder %s205, 0
    %s208 = sadd.s32 %s207, 1
    %s209 = scalar_select %p206, %s207, %s208
    %p212 = pneg %p206
    %p213 = scmp.eq.s32.totalorder %s14, 1
    %p214 = por %p212, %p213
    %p215 = scmp.ne.s32.totalorder %s207, %s210
    %p216 = scmp.eq.s32.totalorder %s14, 0
    %p217 = por %p215, %p216
    %p218 = scmp.ne.s32.totalorder %s207, %s210
    %p219 = scmp.eq.s32.totalorder %s19, 1
    %p220 = por %p218, %p219
    %p221 = scmp.ne.s32.totalorder %s210, %s211
    %p222 = scmp.eq.s32.totalorder %s19, 0
    %p223 = por %p221, %p222
    %p224 = scmp.ne.s32.totalorder %s210, %s211
    %p225 = scmp.eq.s32.totalorder %s20, 1
    %p226 = por %p224, %p225
    %p228 = scmp.ne.s32.totalorder %s211, %s227
    %p229 = scmp.eq.s32.totalorder %s20, 0
    %p230 = por %p228, %p229
    %p231 = scmp.le.s32.totalorder 1, %s14
    %p232 = scmp.lt.s32.totalorder %s14, 3
    %p233 = pnand %p231, %p232
    %p234 = pneg %p233
    // Predicated region
    $region9: #{tri_res_v4_forward.5} parent=5 // pred_check
      _
    $region10: #{tri_res_v4_forward.5} parent=5 // pred_check_branch
      %236 = sbr.rel (%p233) target = $region12
    $region11: #{tri_res_v4_forward.5} parent=5 // pred_region
      %s237 = ssub.s32 %s14, 1
      // Predicated region
      $region13: #{tri_res_v4_forward.5} parent=11 // pred_check
        %p238 = pneg %p113
      $region14: #{tri_res_v4_forward.5} parent=11 // pred_check_branch
        %240 = sbr.rel (%p238) target = $region16
      $region15: #{tri_res_v4_forward.5} parent=11 // pred_region
        _
      $region16: #{tri_res_v4_forward.5} parent=11 // pred_fallthru
        _
      // Predicated region
      $region17: #{tri_res_v4_forward.5} parent=11 // pred_check
        %p241 = pneg %p134
      $region18: #{tri_res_v4_forward.5} parent=11 // pred_check_branch
        %243 = sbr.rel (%p241) target = $region20
      $region19: #{tri_res_v4_forward.5} parent=11 // pred_region
        _
      $region20: #{tri_res_v4_forward.5} parent=11 // pred_fallthru
        _
      // Predicated region
      $region21: #{tri_res_v4_forward.5} parent=11 // pred_check
        %p244 = pneg %p155
      $region22: #{tri_res_v4_forward.5} parent=11 // pred_check_branch
        %246 = sbr.rel (%p244) target = $region24
      $region23: #{tri_res_v4_forward.5} parent=11 // pred_region
        _
      $region24: #{tri_res_v4_forward.5} parent=11 // pred_fallthru
        _
      // Predicated region
      $region25: #{tri_res_v4_forward.5} parent=11 // pred_check
        %p247 = pneg %p176
      $region26: #{tri_res_v4_forward.5} parent=11 // pred_check_branch
        %249 = sbr.rel (%p247) target = $region28
      $region27: #{tri_res_v4_forward.5} parent=11 // pred_region
        _
      $region28: #{tri_res_v4_forward.5} parent=11 // pred_fallthru
        _
      // Predicated region
      $region29: #{tri_res_v4_forward.5} parent=11 // pred_check
        %p250 = pneg %p197
      $region30: #{tri_res_v4_forward.5} parent=11 // pred_check_branch
        %252 = sbr.rel (%p250) target = $region32
      $region31: #{tri_res_v4_forward.5} parent=11 // pred_region
        _
      $region32: #{tri_res_v4_forward.5} parent=11 // pred_fallthru
        _
    $region12: #{tri_res_v4_forward.5} parent=5 // pred_fallthru
      _
    %p253 = scmp.lt.s32.totalorder %s14, 2
    // Predicated region
    $region33: #{tri_res_v4_forward.5} parent=5 // pred_check
      %p254 = pneg %p253
    $region34: #{tri_res_v4_forward.5} parent=5 // pred_check_branch
      %256 = sbr.rel (%p254) target = $region36
    $region35: #{tri_res_v4_forward.5} parent=5 // pred_region
      // Predicated region
      $region37: #{tri_res_v4_forward.5} parent=35 // pred_check
        %p257 = pneg %p34
      $region38: #{tri_res_v4_forward.5} parent=35 // pred_check_branch
        %259 = sbr.rel (%p257) target = $region40
      $region39: #{tri_res_v4_forward.5} parent=35 // pred_region
        %p260 = scmp.lt.s32.totalorder %s14, 1
        %s261 = scalar_select %p260, %s14, 1
        %s262 = smul.addr %s261, 16
        %s263 = smul.addr %s262, 8
        %s264 = scalar_lea.vmem %s0, %s263
      $region40: #{tri_res_v4_forward.5} parent=35 // pred_fallthru
        _
      // Predicated region
      $region41: #{tri_res_v4_forward.5} parent=35 // pred_check
        %p265 = pneg %p60
      $region42: #{tri_res_v4_forward.5} parent=35 // pred_check_branch
        %267 = sbr.rel (%p265) target = $region44
      $region43: #{tri_res_v4_forward.5} parent=35 // pred_region
        %p268 = scmp.lt.s32.totalorder %s14, 1
        %s269 = scalar_select %p268, %s14, 1
        %s270 = smul.addr %s269, 16
        %s271 = smul.addr %s270, 8
        %s272 = scalar_lea.vmem %s1, %s271
      $region44: #{tri_res_v4_forward.5} parent=35 // pred_fallthru
        _
      // Predicated region
      $region45: #{tri_res_v4_forward.5} parent=35 // pred_check
        %p273 = pneg %p86
      $region46: #{tri_res_v4_forward.5} parent=35 // pred_check_branch
        %275 = sbr.rel (%p273) target = $region48
      $region47: #{tri_res_v4_forward.5} parent=35 // pred_region
        %p276 = scmp.lt.s32.totalorder %s14, 1
        %s277 = scalar_select %p276, %s14, 1
        %s278 = smul.addr %s277, 16
        %s279 = smul.addr %s278, 8
        %s280 = scalar_lea.vmem %s2, %s279
      $region48: #{tri_res_v4_forward.5} parent=35 // pred_fallthru
        _
    $region36: #{tri_res_v4_forward.5} parent=5 // pred_fallthru
      _
    %p281 = scmp.le.s32.totalorder 1, %s14
    %p282 = scmp.lt.s32.totalorder %s14, 3
    %p283 = pnand %p281, %p282
    %p284 = pneg %p283
    // Predicated region
    $region49: #{tri_res_v4_forward.5} parent=5 // pred_check
      _
    $region50: #{tri_res_v4_forward.5} parent=5 // pred_check_branch
      %286 = sbr.rel (%p283) target = $region52
    $region51: #{tri_res_v4_forward.5} parent=5 // pred_region
      %s287 = ssub.s32 %s14, 1
      %p288 = scmp.lt.s32.totalorder %s19, 1
      %s289 = scalar_select %p288, %s19, 1
      %s290 = smul.addr %s289, 16
      %s291 = smul.addr %s290, 8
      %s292 = scalar_lea.vmem %s0, %s291
      %p293 = pneg %p40
      %p294 = pneg %p37
      %p295 = scmp.lt.s32.totalorder %s19, 1
      %s296 = scalar_select %p295, %s19, 1
      %s297 = smul.addr %s296, 16
      %s298 = smul.addr %s297, 8
      %s299 = scalar_lea.vmem %s1, %s298
      %p300 = pneg %p66
      %p301 = pneg %p63
      %p302 = scmp.lt.s32.totalorder %s19, 1
      %s303 = scalar_select %p302, %s19, 1
      %s304 = smul.addr %s303, 16
      %s305 = smul.addr %s304, 8
      %s306 = scalar_lea.vmem %s2, %s305
      %p307 = pneg %p92
      %p308 = pneg %p89
      %p309 = pneg %p113
      %p310 = pneg %p110
      %p311 = pneg %p134
      %p312 = pneg %p131
      %p313 = pneg %p155
      %p314 = pneg %p152
      %p315 = pneg %p176
      %p316 = pneg %p173
      %p317 = pneg %p197
      %p318 = pneg %p194
      %p319 = pneg %p223
      %p320 = pneg %p220
      %p321 = scmp.lt.s32.totalorder %s19, 1
      %s322 = scalar_select %p321, %s19, 1
      %s323 = smul.addr %s322, 16
      %s324 = smul.addr %s323, 8
      %s325 = scalar_lea.vmem %s8, %s324
      %p326 = scmp.lt.s32.totalorder %s19, 1
      %s327 = scalar_select %p326, %s19, 1
      %s328 = smul.addr %s327, 16
      %s329 = smul.addr %s328, 8
      %s330 = scalar_lea.vmem %s0, %s329
      %p331 = scmp.lt.s32.totalorder %s19, 1
      %s332 = scalar_select %p331, %s19, 1
      %s333 = smul.addr %s332, 16
      %s334 = smul.addr %s333, 8
      %s335 = scalar_lea.vmem %s1, %s334
      %p336 = scmp.lt.s32.totalorder %s19, 1
      %s337 = scalar_select %p336, %s19, 1
      %s338 = smul.addr %s337, 16
      %s339 = smul.addr %s338, 8
      %s340 = scalar_lea.vmem %s2, %s339
      %p341 = scmp.lt.s32.totalorder %s19, 1
      %s342 = scalar_select %p341, %s19, 1
      %s343 = smul.addr %s342, 16
      %s344 = smul.addr %s343, 8
      %s345 = scalar_lea.vmem %s8, %s344
      %v347 = vld [vmem:[%s3] sm:$0xf]
      %v348 = vld [vmem:[%s330] sm:$0xff]
      %v349 = vld [vmem:[%s330 + $0x8] sm:$0xff]
      %v350 = vld [vmem:[%s330 + $0x10] sm:$0xff]
      %v351 = vld [vmem:[%s330 + $0x18] sm:$0xff]
      %v352 = vld [vmem:[%s330 + $0x20] sm:$0xff]
      %v353 = vld [vmem:[%s330 + $0x28] sm:$0xff]
      %v354 = vld [vmem:[%s330 + $0x30] sm:$0xff]
      %v355 = vld [vmem:[%s330 + $0x38] sm:$0xff]
      %v356 = vld [vmem:[%s330 + $0x40] sm:$0xff]
      %v357 = vld [vmem:[%s330 + $0x48] sm:$0xff]
      %v358 = vld [vmem:[%s330 + $0x50] sm:$0xff]
      %v359 = vld [vmem:[%s330 + $0x58] sm:$0xff]
      %v360 = vld [vmem:[%s330 + $0x60] sm:$0xff]
      %v361 = vld [vmem:[%s330 + $0x68] sm:$0xff]
      %v362 = vld [vmem:[%s330 + $0x70] sm:$0xff]
      %v363 = vld [vmem:[%s330 + $0x78] sm:$0xff]
      %v364 = vpack.c.bf16 %v348, %v348
      %v365 = vpack.c.bf16 %v349, %v349
      %v366 = vpack.c.bf16 %v350, %v350
      %v367 = vpack.c.bf16 %v351, %v351
      %v368 = vpack.c.bf16 %v352, %v352
      %v369 = vpack.c.bf16 %v353, %v353
      %v370 = vpack.c.bf16 %v354, %v354
      %v371 = vpack.c.bf16 %v355, %v355
      %v372 = vpack.c.bf16 %v356, %v356
      %v373 = vpack.c.bf16 %v357, %v357
      %v374 = vpack.c.bf16 %v358, %v358
      %v375 = vpack.c.bf16 %v359, %v359
      %v376 = vpack.c.bf16 %v360, %v360
      %v377 = vpack.c.bf16 %v361, %v361
      %v378 = vpack.c.bf16 %v362, %v362
      %v379 = vpack.c.bf16 %v363, %v363
      %v380 = vld [vmem:[%s4] sm:$0xf]
      %v381 = vld [vmem:[%s335] sm:$0xff]
      %v382 = vld [vmem:[%s335 + $0x8] sm:$0xff]
      %v383 = vld [vmem:[%s335 + $0x10] sm:$0xff]
      %v384 = vld [vmem:[%s335 + $0x18] sm:$0xff]
      %v385 = vld [vmem:[%s335 + $0x20] sm:$0xff]
      %v386 = vld [vmem:[%s335 + $0x28] sm:$0xff]
      %v387 = vld [vmem:[%s335 + $0x30] sm:$0xff]
      %v388 = vld [vmem:[%s335 + $0x38] sm:$0xff]
      %v389 = vld [vmem:[%s335 + $0x40] sm:$0xff]
      %v390 = vld [vmem:[%s335 + $0x48] sm:$0xff]
      %v391 = vld [vmem:[%s335 + $0x50] sm:$0xff]
      %v392 = vld [vmem:[%s335 + $0x58] sm:$0xff]
      %v393 = vld [vmem:[%s335 + $0x60] sm:$0xff]
      %v394 = vld [vmem:[%s335 + $0x68] sm:$0xff]
      %v395 = vld [vmem:[%s335 + $0x70] sm:$0xff]
      %v396 = vld [vmem:[%s335 + $0x78] sm:$0xff]
      %v397 = vpack.c.bf16 %v381, %v381
      %v398 = vpack.c.bf16 %v382, %v382
      %v399 = vpack.c.bf16 %v383, %v383
      %v400 = vpack.c.bf16 %v384, %v384
      %v401 = vpack.c.bf16 %v385, %v385
      %v402 = vpack.c.bf16 %v386, %v386
      %v403 = vpack.c.bf16 %v387, %v387
      %v404 = vpack.c.bf16 %v388, %v388
      %v405 = vpack.c.bf16 %v389, %v389
      %v406 = vpack.c.bf16 %v390, %v390
      %v407 = vpack.c.bf16 %v391, %v391
      %v408 = vpack.c.bf16 %v392, %v392
      %v409 = vpack.c.bf16 %v393, %v393
      %v410 = vpack.c.bf16 %v394, %v394
      %v411 = vpack.c.bf16 %v395, %v395
      %v412 = vpack.c.bf16 %v396, %v396
      %vm413 = vcmask 64512
      %v415 = vsel %vm413, %v380, 0
      %vm417 = vcmask 1043456
      %v419 = vsel %vm417, %v397, 0
      %v422 = vsel %vm417, %v398, 0
      %v425 = vsel %vm417, %v399, 0
      %v428 = vsel %vm417, %v400, 0
      %v431 = vsel %vm417, %v401, 0
      %v434 = vsel %vm417, %v402, 0
      %v437 = vsel %vm417, %v403, 0
      %v440 = vsel %vm417, %v404, 0
      %v443 = vsel %vm417, %v405, 0
      %v446 = vsel %vm417, %v406, 0
      %v449 = vsel %vm417, %v407, 0
      %v452 = vsel %vm417, %v408, 0
      %v455 = vsel %vm417, %v409, 0
      %v458 = vsel %vm417, %v410, 0
      %v461 = vsel %vm417, %v411, 0
      %v464 = vsel %vm417, %v412, 0
      %466 = vmatprep.subr.bf16.mxu0 %v422
      %467 = vmatpush1.bf16.msra.mxu0 %v419
      %468 = vmatprep.subr.bf16.mxu0 0
      %469 = vmatpush1.bf16.msra.mxu0 0
      %470 = vmatprep.subr.bf16.mxu0 0
      %471 = vmatpush1.bf16.msra.mxu0 0
      %472 = vmatprep.subr.bf16.mxu0 0
      %473 = vmatpush1.bf16.msra.mxu0 0
      %474 = vmatprep.subr.bf16.mxu0 0
      %475 = vmatpush1.bf16.msra.mxu0 0
      %476 = vmatprep.subr.bf16.mxu0 0
      %477 = vmatpush1.bf16.msra.mxu0 0
      %478 = vmatprep.subr.bf16.mxu0 0
      %479 = vmatpush1.bf16.msra.mxu0 0
      %480 = vmatprep.subr.bf16.mxu0 0
      %481 = vmatpush1.bf16.msra.mxu0 0
      %482 = vmatprep.subr.bf16.mxu0 0
      %483 = vmatpush1.bf16.msra.mxu0 0
      %484 = vmatprep.subr.bf16.mxu0 0
      %485 = vmatpush1.bf16.msra.mxu0 0
      %486 = vmatprep.subr.bf16.mxu0 0
      %487 = vmatpush1.bf16.msra.mxu0 0
      %488 = vmatprep.subr.bf16.mxu0 0
      %489 = vmatpush1.bf16.msra.mxu0 0
      %490 = vmatprep.subr.bf16.mxu0 0
      %491 = vmatpush1.bf16.msra.mxu0 0
      %492 = vmatprep.subr.bf16.mxu0 0
      %493 = vmatpush1.bf16.msra.mxu0 0
      %494 = vmatprep.subr.bf16.mxu0 0
      %495 = vmatpush1.bf16.msra.mxu0 0
      %496 = vmatprep.subr.bf16.mxu0 0
      %497 = vmatpush1.bf16.msra.mxu0 0
      %498 = vmatprep.mubr.bf16.mxu0 0
      %499 = vmatmul.mubr.bf16.gmra.mrb[0].mxu0 %v415
      %v500 = vpop.f32.mrb[0].mxu0
      %v501 = vadd.f32 0.0, %v500
      %v502 = vpop.f32.mrb[0].mxu0
      %v503 = vadd.f32 0.0, %v502
      %v504 = vpop.f32.mrb[0].mxu0
      %v505 = vpop.f32.mrb[0].mxu0
      %506 = vdwg.mxu0
      %507 = vmatprep.subr.bf16.mxu0 %v428
      %508 = vmatpush1.bf16.msra.mxu0 %v425
      %509 = vmatprep.subr.bf16.mxu0 0
      %510 = vmatpush1.bf16.msra.mxu0 0
      %511 = vmatprep.subr.bf16.mxu0 0
      %512 = vmatpush1.bf16.msra.mxu0 0
      %513 = vmatprep.subr.bf16.mxu0 0
      %514 = vmatpush1.bf16.msra.mxu0 0
      %515 = vmatprep.subr.bf16.mxu0 0
      %516 = vmatpush1.bf16.msra.mxu0 0
      %517 = vmatprep.subr.bf16.mxu0 0
      %518 = vmatpush1.bf16.msra.mxu0 0
      %519 = vmatprep.subr.bf16.mxu0 0
      %520 = vmatpush1.bf16.msra.mxu0 0
      %521 = vmatprep.subr.bf16.mxu0 0
      %522 = vmatpush1.bf16.msra.mxu0 0
      %523 = vmatprep.subr.bf16.mxu0 0
      %524 = vmatpush1.bf16.msra.mxu0 0
      %525 = vmatprep.subr.bf16.mxu0 0
      %526 = vmatpush1.bf16.msra.mxu0 0
      %527 = vmatprep.subr.bf16.mxu0 0
      %528 = vmatpush1.bf16.msra.mxu0 0
      %529 = vmatprep.subr.bf16.mxu0 0
      %530 = vmatpush1.bf16.msra.mxu0 0
      %531 = vmatprep.subr.bf16.mxu0 0
      %532 = vmatpush1.bf16.msra.mxu0 0
      %533 = vmatprep.subr.bf16.mxu0 0
      %534 = vmatpush1.bf16.msra.mxu0 0
      %535 = vmatprep.subr.bf16.mxu0 0
      %536 = vmatpush1.bf16.msra.mxu0 0
      %537 = vmatprep.subr.bf16.mxu0 0
      %538 = vmatpush1.bf16.msra.mxu0 0
      %539 = vmatprep.mubr.bf16.mxu0 0
      %540 = vmatmul.mubr.bf16.gmra.mrb[0].mxu0 %v415
      %v541 = vpop.f32.mrb[0].mxu0
      %v542 = vadd.f32 0.0, %v541
      %v543 = vpop.f32.mrb[0].mxu0
      %v544 = vadd.f32 0.0, %v543
      %v545 = vpop.f32.mrb[0].mxu0
      %v546 = vpop.f32.mrb[0].mxu0
      %547 = vdwg.mxu0
      %548 = vmatprep.subr.bf16.mxu0 %v434
      %549 = vmatpush1.bf16.msra.mxu0 %v431
      %550 = vmatprep.subr.bf16.mxu0 0
      %551 = vmatpush1.bf16.msra.mxu0 0
      %552 = vmatprep.subr.bf16.mxu0 0
      %553 = vmatpush1.bf16.msra.mxu0 0
      %554 = vmatprep.subr.bf16.mxu0 0
      %555 = vmatpush1.bf16.msra.mxu0 0
      %556 = vmatprep.subr.bf16.mxu0 0
      %557 = vmatpush1.bf16.msra.mxu0 0
      %558 = vmatprep.subr.bf16.mxu0 0
      %559 = vmatpush1.bf16.msra.mxu0 0
      %560 = vmatprep.subr.bf16.mxu0 0
      %561 = vmatpush1.bf16.msra.mxu0 0
      %562 = vmatprep.subr.bf16.mxu0 0
      %563 = vmatpush1.bf16.msra.mxu0 0
      %564 = vmatprep.subr.bf16.mxu0 0
      %565 = vmatpush1.bf16.msra.mxu0 0
      %566 = vmatprep.subr.bf16.mxu0 0
      %567 = vmatpush1.bf16.msra.mxu0 0
      %568 = vmatprep.subr.bf16.mxu0 0
      %569 = vmatpush1.bf16.msra.mxu0 0
      %570 = vmatprep.subr.bf16.mxu0 0
      %571 = vmatpush1.bf16.msra.mxu0 0
      %572 = vmatprep.subr.bf16.mxu0 0
      %573 = vmatpush1.bf16.msra.mxu0 0
      %574 = vmatprep.subr.bf16.mxu0 0
      %575 = vmatpush1.bf16.msra.mxu0 0
      %576 = vmatprep.subr.bf16.mxu0 0
      %577 = vmatpush1.bf16.msra.mxu0 0
      %578 = vmatprep.subr.bf16.mxu0 0
      %579 = vmatpush1.bf16.msra.mxu0 0
      %580 = vmatprep.mubr.bf16.mxu0 0
      %581 = vmatmul.mubr.bf16.gmra.mrb[0].mxu0 %v415
      %v582 = vpop.f32.mrb[0].mxu0
      %v583 = vadd.f32 0.0, %v582
      %v584 = vpop.f32.mrb[0].mxu0
      %v585 = vadd.f32 0.0, %v584
      %v586 = vpop.f32.mrb[0].mxu0
      %v587 = vpop.f32.mrb[0].mxu0
      %588 = vdwg.mxu0
      %589 = vmatprep.subr.bf16.mxu0 %v440
      %590 = vmatpush1.bf16.msra.mxu0 %v437
      %591 = vmatprep.subr.bf16.mxu0 0
      %592 = vmatpush1.bf16.msra.mxu0 0
      %593 = vmatprep.subr.bf16.mxu0 0
      %594 = vmatpush1.bf16.msra.mxu0 0
      %595 = vmatprep.subr.bf16.mxu0 0
      %596 = vmatpush1.bf16.msra.mxu0 0
      %597 = vmatprep.subr.bf16.mxu0 0
      %598 = vmatpush1.bf16.msra.mxu0 0
      %599 = vmatprep.subr.bf16.mxu0 0
      %600 = vmatpush1.bf16.msra.mxu0 0
      %601 = vmatprep.subr.bf16.mxu0 0
      %602 = vmatpush1.bf16.msra.mxu0 0
      %603 = vmatprep.subr.bf16.mxu0 0
      %604 = vmatpush1.bf16.msra.mxu0 0
      %605 = vmatprep.subr.bf16.mxu0 0
      %606 = vmatpush1.bf16.msra.mxu0 0
      %607 = vmatprep.subr.bf16.mxu0 0
      %608 = vmatpush1.bf16.msra.mxu0 0
      %609 = vmatprep.subr.bf16.mxu0 0
      %610 = vmatpush1.bf16.msra.mxu0 0
      %611 = vmatprep.subr.bf16.mxu0 0
      %612 = vmatpush1.bf16.msra.mxu0 0
      %613 = vmatprep.subr.bf16.mxu0 0
      %614 = vmatpush1.bf16.msra.mxu0 0
      %615 = vmatprep.subr.bf16.mxu0 0
      %616 = vmatpush1.bf16.msra.mxu0 0
      %617 = vmatprep.subr.bf16.mxu0 0
      %618 = vmatpush1.bf16.msra.mxu0 0
      %619 = vmatprep.subr.bf16.mxu0 0
      %620 = vmatpush1.bf16.msra.mxu0 0
      %621 = vmatprep.mubr.bf16.mxu0 0
      %622 = vmatmul.mubr.bf16.gmra.mrb[0].mxu0 %v415
      %v623 = vpop.f32.mrb[0].mxu0
      %v624 = vadd.f32 0.0, %v623
      %v625 = vpop.f32.mrb[0].mxu0
      %v626 = vadd.f32 0.0, %v625
      %v627 = vpop.f32.mrb[0].mxu0
      %v628 = vpop.f32.mrb[0].mxu0
      %629 = vdwg.mxu0
      %630 = vmatprep.subr.bf16.mxu0 %v446
      %631 = vmatpush1.bf16.msra.mxu0 %v443
      %632 = vmatprep.subr.bf16.mxu0 0
      %633 = vmatpush1.bf16.msra.mxu0 0
      %634 = vmatprep.subr.bf16.mxu0 0
      %635 = vmatpush1.bf16.msra.mxu0 0
      %636 = vmatprep.subr.bf16.mxu0 0
      %637 = vmatpush1.bf16.msra.mxu0 0
      %638 = vmatprep.subr.bf16.mxu0 0
      %639 = vmatpush1.bf16.msra.mxu0 0
      %640 = vmatprep.subr.bf16.mxu0 0
      %641 = vmatpush1.bf16.msra.mxu0 0
      %642 = vmatprep.subr.bf16.mxu0 0
      %643 = vmatpush1.bf16.msra.mxu0 0
      %644 = vmatprep.subr.bf16.mxu0 0
      %645 = vmatpush1.bf16.msra.mxu0 0
      %646 = vmatprep.subr.bf16.mxu0 0
      %647 = vmatpush1.bf16.msra.mxu0 0
      %648 = vmatprep.subr.bf16.mxu0 0
      %649 = vmatpush1.bf16.msra.mxu0 0
      %650 = vmatprep.subr.bf16.mxu0 0
      %651 = vmatpush1.bf16.msra.mxu0 0
      %652 = vmatprep.subr.bf16.mxu0 0
      %653 = vmatpush1.bf16.msra.mxu0 0
      %654 = vmatprep.subr.bf16.mxu0 0
      %655 = vmatpush1.bf16.msra.mxu0 0
      %656 = vmatprep.subr.bf16.mxu0 0
      %657 = vmatpush1.bf16.msra.mxu0 0
      %658 = vmatprep.subr.bf16.mxu0 0
      %659 = vmatpush1.bf16.msra.mxu0 0
      %660 = vmatprep.subr.bf16.mxu0 0
      %661 = vmatpush1.bf16.msra.mxu0 0
      %662 = vmatprep.mubr.bf16.mxu0 0
      %663 = vmatmul.mubr.bf16.gmra.mrb[0].mxu0 %v415
      %v664 = vpop.f32.mrb[0].mxu0
      %v665 = vadd.f32 0.0, %v664
      %v666 = vpop.f32.mrb[0].mxu0
      %v667 = vadd.f32 0.0, %v666
      %v668 = vpop.f32.mrb[0].mxu0
      %v669 = vpop.f32.mrb[0].mxu0
      %670 = vdwg.mxu0
      %671 = vmatprep.subr.bf16.mxu0 %v452
      %672 = vmatpush1.bf16.msra.mxu0 %v449
      %673 = vmatprep.subr.bf16.mxu0 0
      %674 = vmatpush1.bf16.msra.mxu0 0
      %675 = vmatprep.subr.bf16.mxu0 0
      %676 = vmatpush1.bf16.msra.mxu0 0
      %677 = vmatprep.subr.bf16.mxu0 0
      %678 = vmatpush1.bf16.msra.mxu0 0
      %679 = vmatprep.subr.bf16.mxu0 0
      %680 = vmatpush1.bf16.msra.mxu0 0
      %681 = vmatprep.subr.bf16.mxu0 0
      %682 = vmatpush1.bf16.msra.mxu0 0
      %683 = vmatprep.subr.bf16.mxu0 0
      %684 = vmatpush1.bf16.msra.mxu0 0
      %685 = vmatprep.subr.bf16.mxu0 0
      %686 = vmatpush1.bf16.msra.mxu0 0
      %687 = vmatprep.subr.bf16.mxu0 0
      %688 = vmatpush1.bf16.msra.mxu0 0
      %689 = vmatprep.subr.bf16.mxu0 0
      %690 = vmatpush1.bf16.msra.mxu0 0
      %691 = vmatprep.subr.bf16.mxu0 0
      %692 = vmatpush1.bf16.msra.mxu0 0
      %693 = vmatprep.subr.bf16.mxu0 0
      %694 = vmatpush1.bf16.msra.mxu0 0
      %695 = vmatprep.subr.bf16.mxu0 0
      %696 = vmatpush1.bf16.msra.mxu0 0
      %697 = vmatprep.subr.bf16.mxu0 0
      %698 = vmatpush1.bf16.msra.mxu0 0
      %699 = vmatprep.subr.bf16.mxu0 0
      %700 = vmatpush1.bf16.msra.mxu0 0
      %701 = vmatprep.subr.bf16.mxu0 0
      %702 = vmatpush1.bf16.msra.mxu0 0
      %703 = vmatprep.mubr.bf16.mxu0 0
      %704 = vmatmul.mubr.bf16.gmra.mrb[0].mxu0 %v415
      %v705 = vpop.f32.mrb[0].mxu0
      %v706 = vadd.f32 0.0, %v705
      %v707 = vpop.f32.mrb[0].mxu0
      %v708 = vadd.f32 0.0, %v707
      %v709 = vpop.f32.mrb[0].mxu0
      %v710 = vpop.f32.mrb[0].mxu0
      %711 = vdwg.mxu0
      %712 = vmatprep.subr.bf16.mxu0 %v458
      %713 = vmatpush1.bf16.msra.mxu0 %v455
      %714 = vmatprep.subr.bf16.mxu0 0
      %715 = vmatpush1.bf16.msra.mxu0 0
      %716 = vmatprep.subr.bf16.mxu0 0
      %717 = vmatpush1.bf16.msra.mxu0 0
      %718 = vmatprep.subr.bf16.mxu0 0
      %719 = vmatpush1.bf16.msra.mxu0 0
      %720 = vmatprep.subr.bf16.mxu0 0
      %721 = vmatpush1.bf16.msra.mxu0 0
      %722 = vmatprep.subr.bf16.mxu0 0
      %723 = vmatpush1.bf16.msra.mxu0 0
      %724 = vmatprep.subr.bf16.mxu0 0
      %725 = vmatpush1.bf16.msra.mxu0 0
      %726 = vmatprep.subr.bf16.mxu0 0
      %727 = vmatpush1.bf16.msra.mxu0 0
      %728 = vmatprep.subr.bf16.mxu0 0
      %729 = vmatpush1.bf16.msra.mxu0 0
      %730 = vmatprep.subr.bf16.mxu0 0
      %731 = vmatpush1.bf16.msra.mxu0 0
      %732 = vmatprep.subr.bf16.mxu0 0
      %733 = vmatpush1.bf16.msra.mxu0 0
      %734 = vmatprep.subr.bf16.mxu0 0
      %735 = vmatpush1.bf16.msra.mxu0 0
      %736 = vmatprep.subr.bf16.mxu0 0
      %737 = vmatpush1.bf16.msra.mxu0 0
      %738 = vmatprep.subr.bf16.mxu0 0
      %739 = vmatpush1.bf16.msra.mxu0 0
      %740 = vmatprep.subr.bf16.mxu0 0
      %741 = vmatpush1.bf16.msra.mxu0 0
      %742 = vmatprep.subr.bf16.mxu0 0
      %743 = vmatpush1.bf16.msra.mxu0 0
      %744 = vmatprep.mubr.bf16.mxu0 0
      %745 = vmatmul.mubr.bf16.gmra.mrb[0].mxu0 %v415
      %v746 = vpop.f32.mrb[0].mxu0
      %v747 = vadd.f32 0.0, %v746
      %v748 = vpop.f32.mrb[0].mxu0
      %v749 = vadd.f32 0.0, %v748
      %v750 = vpop.f32.mrb[0].mxu0
      %v751 = vpop.f32.mrb[0].mxu0
      %752 = vdwg.mxu0
      %753 = vmatprep.subr.bf16.mxu0 %v464
      %754 = vmatpush1.bf16.msra.mxu0 %v461
      %755 = vmatprep.subr.bf16.mxu0 0
      %756 = vmatpush1.bf16.msra.mxu0 0
      %757 = vmatprep.subr.bf16.mxu0 0
      %758 = vmatpush1.bf16.msra.mxu0 0
      %759 = vmatprep.subr.bf16.mxu0 0
      %760 = vmatpush1.bf16.msra.mxu0 0
      %761 = vmatprep.subr.bf16.mxu0 0
      %762 = vmatpush1.bf16.msra.mxu0 0
      %763 = vmatprep.subr.bf16.mxu0 0
      %764 = vmatpush1.bf16.msra.mxu0 0
      %765 = vmatprep.subr.bf16.mxu0 0
      %766 = vmatpush1.bf16.msra.mxu0 0
      %767 = vmatprep.subr.bf16.mxu0 0
      %768 = vmatpush1.bf16.msra.mxu0 0
      %769 = vmatprep.subr.bf16.mxu0 0
      %770 = vmatpush1.bf16.msra.mxu0 0
      %771 = vmatprep.subr.bf16.mxu0 0
      %772 = vmatpush1.bf16.msra.mxu0 0
      %773 = vmatprep.subr.bf16.mxu0 0
      %774 = vmatpush1.bf16.msra.mxu0 0
      %775 = vmatprep.subr.bf16.mxu0 0
      %776 = vmatpush1.bf16.msra.mxu0 0
      %777 = vmatprep.subr.bf16.mxu0 0
      %778 = vmatpush1.bf16.msra.mxu0 0
      %779 = vmatprep.subr.bf16.mxu0 0
      %780 = vmatpush1.bf16.msra.mxu0 0
      %781 = vmatprep.subr.bf16.mxu0 0
      %782 = vmatpush1.bf16.msra.mxu0 0
      %783 = vmatprep.subr.bf16.mxu0 0
      %784 = vmatpush1.bf16.msra.mxu0 0
      %785 = vmatprep.mubr.bf16.mxu0 0
      %786 = vmatmul.mubr.bf16.gmra.mrb[0].mxu0 %v415
      %v787 = vpop.f32.mrb[0].mxu0
      %v788 = vadd.f32 0.0, %v787
      %v789 = vpop.f32.mrb[0].mxu0
      %v790 = vadd.f32 0.0, %v789
      %v791 = vpop.f32.mrb[0].mxu0
      %v792 = vpop.f32.mrb[0].mxu0
      %793 = vdwg.mxu0
      %v795 = vsel %vm413, %v347, 0
      %v798 = vsel %vm417, %v364, 0
      %v801 = vsel %vm417, %v365, 0
      %v804 = vsel %vm417, %v366, 0
      %v807 = vsel %vm417, %v367, 0
      %v810 = vsel %vm417, %v368, 0
      %v813 = vsel %vm417, %v369, 0
      %v816 = vsel %vm417, %v370, 0
      %v819 = vsel %vm417, %v371, 0
      %v822 = vsel %vm417, %v372, 0
      %v825 = vsel %vm417, %v373, 0
      %v828 = vsel %vm417, %v374, 0
      %v831 = vsel %vm417, %v375, 0
      %v834 = vsel %vm417, %v376, 0
      %v837 = vsel %vm417, %v377, 0
      %v840 = vsel %vm417, %v378, 0
      %v843 = vsel %vm417, %v379, 0
      %845 = vmatprep.subr.bf16.mxu0 %v801
      %846 = vmatpush1.bf16.msra.mxu0 %v798
      %847 = vmatprep.subr.bf16.mxu0 0
      %848 = vmatpush1.bf16.msra.mxu0 0
      %849 = vmatprep.subr.bf16.mxu0 0
      %850 = vmatpush1.bf16.msra.mxu0 0
      %851 = vmatprep.subr.bf16.mxu0 0
      %852 = vmatpush1.bf16.msra.mxu0 0
      %853 = vmatprep.subr.bf16.mxu0 0
      %854 = vmatpush1.bf16.msra.mxu0 0
      %855 = vmatprep.subr.bf16.mxu0 0
      %856 = vmatpush1.bf16.msra.mxu0 0
      %857 = vmatprep.subr.bf16.mxu0 0
      %858 = vmatpush1.bf16.msra.mxu0 0
      %859 = vmatprep.subr.bf16.mxu0 0
      %860 = vmatpush1.bf16.msra.mxu0 0
      %861 = vmatprep.subr.bf16.mxu0 0
      %862 = vmatpush1.bf16.msra.mxu0 0
      %863 = vmatprep.subr.bf16.mxu0 0
      %864 = vmatpush1.bf16.msra.mxu0 0
      %865 = vmatprep.subr.bf16.mxu0 0
      %866 = vmatpush1.bf16.msra.mxu0 0
      %867 = vmatprep.subr.bf16.mxu0 0
      %868 = vmatpush1.bf16.msra.mxu0 0
      %869 = vmatprep.subr.bf16.mxu0 0
      %870 = vmatpush1.bf16.msra.mxu0 0
      %871 = vmatprep.subr.bf16.mxu0 0
      %872 = vmatpush1.bf16.msra.mxu0 0
      %873 = vmatprep.subr.bf16.mxu0 0
      %874 = vmatpush1.bf16.msra.mxu0 0
      %875 = vmatprep.subr.bf16.mxu0 0
      %876 = vmatpush1.bf16.msra.mxu0 0
      %877 = vmatprep.mubr.bf16.mxu0 0
      %878 = vmatmul.mubr.bf16.gmra.mrb[0].mxu0 %v795
      %v879 = vpop.f32.mrb[0].mxu0
      %v880 = vadd.f32 %v501, %v879
      %v881 = vpop.f32.mrb[0].mxu0
      %v882 = vadd.f32 %v503, %v881
      %v883 = vpop.f32.mrb[0].mxu0
      %v884 = vpop.f32.mrb[0].mxu0
      %885 = vdwg.mxu0
      %886 = vmatprep.subr.bf16.mxu0 %v807
      %887 = vmatpush1.bf16.msra.mxu0 %v804
      %888 = vmatprep.subr.bf16.mxu0 0
      %889 = vmatpush1.bf16.msra.mxu0 0
      %890 = vmatprep.subr.bf16.mxu0 0
      %891 = vmatpush1.bf16.msra.mxu0 0
      %892 = vmatprep.subr.bf16.mxu0 0
      %893 = vmatpush1.bf16.msra.mxu0 0
      %894 = vmatprep.subr.bf16.mxu0 0
      %895 = vmatpush1.bf16.msra.mxu0 0
      %896 = vmatprep.subr.bf16.mxu0 0
      %897 = vmatpush1.bf16.msra.mxu0 0
      %898 = vmatprep.subr.bf16.mxu0 0
      %899 = vmatpush1.bf16.msra.mxu0 0
      %900 = vmatprep.subr.bf16.mxu0 0
      %901 = vmatpush1.bf16.msra.mxu0 0
      %902 = vmatprep.subr.bf16.mxu0 0
      %903 = vmatpush1.bf16.msra.mxu0 0
      %904 = vmatprep.subr.bf16.mxu0 0
      %905 = vmatpush1.bf16.msra.mxu0 0
      %906 = vmatprep.subr.bf16.mxu0 0
      %907 = vmatpush1.bf16.msra.mxu0 0
      %908 = vmatprep.subr.bf16.mxu0 0
      %909 = vmatpush1.bf16.msra.mxu0 0
      %910 = vmatprep.subr.bf16.mxu0 0
      %911 = vmatpush1.bf16.msra.mxu0 0
      %912 = vmatprep.subr.bf16.mxu0 0
      %913 = vmatpush1.bf16.msra.mxu0 0
      %914 = vmatprep.subr.bf16.mxu0 0
      %915 = vmatpush1.bf16.msra.mxu0 0
      %916 = vmatprep.subr.bf16.mxu0 0
      %917 = vmatpush1.bf16.msra.mxu0 0
      %918 = vmatprep.mubr.bf16.mxu0 0
      %919 = vmatmul.mubr.bf16.gmra.mrb[0].mxu0 %v795
      %v920 = vpop.f32.mrb[0].mxu0
      %v921 = vadd.f32 %v542, %v920
      %v922 = vpop.f32.mrb[0].mxu0
      %v923 = vadd.f32 %v544, %v922
      %v924 = vpop.f32.mrb[0].mxu0
      %v925 = vpop.f32.mrb[0].mxu0
      %926 = vdwg.mxu0
      %927 = vmatprep.subr.bf16.mxu0 %v813
      %928 = vmatpush1.bf16.msra.mxu0 %v810
      %929 = vmatprep.subr.bf16.mxu0 0
      %930 = vmatpush1.bf16.msra.mxu0 0
      %931 = vmatprep.subr.bf16.mxu0 0
      %932 = vmatpush1.bf16.msra.mxu0 0
      %933 = vmatprep.subr.bf16.mxu0 0
      %934 = vmatpush1.bf16.msra.mxu0 0
      %935 = vmatprep.subr.bf16.mxu0 0
      %936 = vmatpush1.bf16.msra.mxu0 0
      %937 = vmatprep.subr.bf16.mxu0 0
      %938 = vmatpush1.bf16.msra.mxu0 0
      %939 = vmatprep.subr.bf16.mxu0 0
      %940 = vmatpush1.bf16.msra.mxu0 0
      %941 = vmatprep.subr.bf16.mxu0 0
      %942 = vmatpush1.bf16.msra.mxu0 0
      %943 = vmatprep.subr.bf16.mxu0 0
      %944 = vmatpush1.bf16.msra.mxu0 0
      %945 = vmatprep.subr.bf16.mxu0 0
      %946 = vmatpush1.bf16.msra.mxu0 0
      %947 = vmatprep.subr.bf16.mxu0 0
      %948 = vmatpush1.bf16.msra.mxu0 0
      %949 = vmatprep.subr.bf16.mxu0 0
      %950 = vmatpush1.bf16.msra.mxu0 0
      %951 = vmatprep.subr.bf16.mxu0 0
      %952 = vmatpush1.bf16.msra.mxu0 0
      %953 = vmatprep.subr.bf16.mxu0 0
      %954 = vmatpush1.bf16.msra.mxu0 0
      %955 = vmatprep.subr.bf16.mxu0 0
      %956 = vmatpush1.bf16.msra.mxu0 0
      %957 = vmatprep.subr.bf16.mxu0 0
      %958 = vmatpush1.bf16.msra.mxu0 0
      %959 = vmatprep.mubr.bf16.mxu0 0
      %960 = vmatmul.mubr.bf16.gmra.mrb[0].mxu0 %v795
      %v961 = vpop.f32.mrb[0].mxu0
      %v962 = vadd.f32 %v583, %v961
      %v963 = vpop.f32.mrb[0].mxu0
      %v964 = vadd.f32 %v585, %v963
      %v965 = vpop.f32.mrb[0].mxu0
      %v966 = vpop.f32.mrb[0].mxu0
      %967 = vdwg.mxu0
      %968 = vmatprep.subr.bf16.mxu0 %v819
      %969 = vmatpush1.bf16.msra.mxu0 %v816
      %970 = vmatprep.subr.bf16.mxu0 0
      %971 = vmatpush1.bf16.msra.mxu0 0
      %972 = vmatprep.subr.bf16.mxu0 0
      %973 = vmatpush1.bf16.msra.mxu0 0
      %974 = vmatprep.subr.bf16.mxu0 0
      %975 = vmatpush1.bf16.msra.mxu0 0
      %976 = vmatprep.subr.bf16.mxu0 0
      %977 = vmatpush1.bf16.msra.mxu0 0
      %978 = vmatprep.subr.bf16.mxu0 0
      %979 = vmatpush1.bf16.msra.mxu0 0
      %980 = vmatprep.subr.bf16.mxu0 0
      %981 = vmatpush1.bf16.msra.mxu0 0
      %982 = vmatprep.subr.bf16.mxu0 0
      %983 = vmatpush1.bf16.msra.mxu0 0
      %984 = vmatprep.subr.bf16.mxu0 0
      %985 = vmatpush1.bf16.msra.mxu0 0
      %986 = vmatprep.subr.bf16.mxu0 0
      %987 = vmatpush1.bf16.msra.mxu0 0
      %988 = vmatprep.subr.bf16.mxu0 0
      %989 = vmatpush1.bf16.msra.mxu0 0
      %990 = vmatprep.subr.bf16.mxu0 0
      %991 = vmatpush1.bf16.msra.mxu0 0
      %992 = vmatprep.subr.bf16.mxu0 0
      %993 = vmatpush1.bf16.msra.mxu0 0
      %994 = vmatprep.subr.bf16.mxu0 0
      %995 = vmatpush1.bf16.msra.mxu0 0
      %996 = vmatprep.subr.bf16.mxu0 0
      %997 = vmatpush1.bf16.msra.mxu0 0
      %998 = vmatprep.subr.bf16.mxu0 0
      %999 = vmatpush1.bf16.msra.mxu0 0
      %1000 = vmatprep.mubr.bf16.mxu0 0
      %1001 = vmatmul.mubr.bf16.gmra.mrb[0].mxu0 %v795
      %v1002 = vpop.f32.mrb[0].mxu0
      %v1003 = vadd.f32 %v624, %v1002
      %v1004 = vpop.f32.mrb[0].mxu0
      %v1005 = vadd.f32 %v626, %v1004
      %v1006 = vpop.f32.mrb[0].mxu0
      %v1007 = vpop.f32.mrb[0].mxu0
      %1008 = vdwg.mxu0
      %1009 = vmatprep.subr.bf16.mxu0 %v825
      %1010 = vmatpush1.bf16.msra.mxu0 %v822
      %1011 = vmatprep.subr.bf16.mxu0 0
      %1012 = vmatpush1.bf16.msra.mxu0 0
      %1013 = vmatprep.subr.bf16.mxu0 0
      %1014 = vmatpush1.bf16.msra.mxu0 0
      %1015 = vmatprep.subr.bf16.mxu0 0
      %1016 = vmatpush1.bf16.msra.mxu0 0
      %1017 = vmatprep.subr.bf16.mxu0 0
      %1018 = vmatpush1.bf16.msra.mxu0 0
      %1019 = vmatprep.subr.bf16.mxu0 0
      %1020 = vmatpush1.bf16.msra.mxu0 0
      %1021 = vmatprep.subr.bf16.mxu0 0
      %1022 = vmatpush1.bf16.msra.mxu0 0
      %1023 = vmatprep.subr.bf16.mxu0 0
      %1024 = vmatpush1.bf16.msra.mxu0 0
      %1025 = vmatprep.subr.bf16.mxu0 0
      %1026 = vmatpush1.bf16.msra.mxu0 0
      %1027 = vmatprep.subr.bf16.mxu0 0
      %1028 = vmatpush1.bf16.msra.mxu0 0
      %1029 = vmatprep.subr.bf16.mxu0 0
      %1030 = vmatpush1.bf16.msra.mxu0 0
      %1031 = vmatprep.subr.bf16.mxu0 0
      %1032 = vmatpush1.bf16.msra.mxu0 0
      %1033 = vmatprep.subr.bf16.mxu0 0
      %1034 = vmatpush1.bf16.msra.mxu0 0
      %1035 = vmatprep.subr.bf16.mxu0 0
      %1036 = vmatpush1.bf16.msra.mxu0 0
      %1037 = vmatprep.subr.bf16.mxu0 0
      %1038 = vmatpush1.bf16.msra.mxu0 0
      %1039 = vmatprep.subr.bf16.mxu0 0
      %1040 = vmatpush1.bf16.msra.mxu0 0
      %1041 = vmatprep.mubr.bf16.mxu0 0
      %1042 = vmatmul.mubr.bf16.gmra.mrb[0].mxu0 %v795
      %v1043 = vpop.f32.mrb[0].mxu0
      %v1044 = vadd.f32 %v665, %v1043
      %v1045 = vpop.f32.mrb[0].mxu0
      %v1046 = vadd.f32 %v667, %v1045
      %v1047 = vpop.f32.mrb[0].mxu0
      %v1048 = vpop.f32.mrb[0].mxu0
      %1049 = vdwg.mxu0
      %1050 = vmatprep.subr.bf16.mxu0 %v831
      %1051 = vmatpush1.bf16.msra.mxu0 %v828
      %1052 = vmatprep.subr.bf16.mxu0 0
      %1053 = vmatpush1.bf16.msra.mxu0 0
      %1054 = vmatprep.subr.bf16.mxu0 0
      %1055 = vmatpush1.bf16.msra.mxu0 0
      %1056 = vmatprep.subr.bf16.mxu0 0
      %1057 = vmatpush1.bf16.msra.mxu0 0
      %1058 = vmatprep.subr.bf16.mxu0 0
      %1059 = vmatpush1.bf16.msra.mxu0 0
      %1060 = vmatprep.subr.bf16.mxu0 0
      %1061 = vmatpush1.bf16.msra.mxu0 0
      %1062 = vmatprep.subr.bf16.mxu0 0
      %1063 = vmatpush1.bf16.msra.mxu0 0
      %1064 = vmatprep.subr.bf16.mxu0 0
      %1065 = vmatpush1.bf16.msra.mxu0 0
      %1066 = vmatprep.subr.bf16.mxu0 0
      %1067 = vmatpush1.bf16.msra.mxu0 0
      %1068 = vmatprep.subr.bf16.mxu0 0
      %1069 = vmatpush1.bf16.msra.mxu0 0
      %1070 = vmatprep.subr.bf16.mxu0 0
      %1071 = vmatpush1.bf16.msra.mxu0 0
      %1072 = vmatprep.subr.bf16.mxu0 0
      %1073 = vmatpush1.bf16.msra.mxu0 0
      %1074 = vmatprep.subr.bf16.mxu0 0
      %1075 = vmatpush1.bf16.msra.mxu0 0
      %1076 = vmatprep.subr.bf16.mxu0 0
      %1077 = vmatpush1.bf16.msra.mxu0 0
      %1078 = vmatprep.subr.bf16.mxu0 0
      %1079 = vmatpush1.bf16.msra.mxu0 0
      %1080 = vmatprep.subr.bf16.mxu0 0
      %1081 = vmatpush1.bf16.msra.mxu0 0
      %1082 = vmatprep.mubr.bf16.mxu0 0
      %1083 = vmatmul.mubr.bf16.gmra.mrb[0].mxu0 %v795
      %v1084 = vpop.f32.mrb[0].mxu0
      %v1085 = vadd.f32 %v706, %v1084
      %v1086 = vpop.f32.mrb[0].mxu0
      %v1087 = vadd.f32 %v708, %v1086
      %v1088 = vpop.f32.mrb[0].mxu0
      %v1089 = vpop.f32.mrb[0].mxu0
      %1090 = vdwg.mxu0
      %1091 = vmatprep.subr.bf16.mxu0 %v837
      %1092 = vmatpush1.bf16.msra.mxu0 %v834
      %1093 = vmatprep.subr.bf16.mxu0 0
      %1094 = vmatpush1.bf16.msra.mxu0 0
      %1095 = vmatprep.subr.bf16.mxu0 0
      %1096 = vmatpush1.bf16.msra.mxu0 0
      %1097 = vmatprep.subr.bf16.mxu0 0
      %1098 = vmatpush1.bf16.msra.mxu0 0
      %1099 = vmatprep.subr.bf16.mxu0 0
      %1100 = vmatpush1.bf16.msra.mxu0 0
      %1101 = vmatprep.subr.bf16.mxu0 0
      %1102 = vmatpush1.bf16.msra.mxu0 0
      %1103 = vmatprep.subr.bf16.mxu0 0
      %1104 = vmatpush1.bf16.msra.mxu0 0
      %1105 = vmatprep.subr.bf16.mxu0 0
      %1106 = vmatpush1.bf16.msra.mxu0 0
      %1107 = vmatprep.subr.bf16.mxu0 0
      %1108 = vmatpush1.bf16.msra.mxu0 0
      %1109 = vmatprep.subr.bf16.mxu0 0
      %1110 = vmatpush1.bf16.msra.mxu0 0
      %1111 = vmatprep.subr.bf16.mxu0 0
      %1112 = vmatpush1.bf16.msra.mxu0 0
      %1113 = vmatprep.subr.bf16.mxu0 0
      %1114 = vmatpush1.bf16.msra.mxu0 0
      %1115 = vmatprep.subr.bf16.mxu0 0
      %1116 = vmatpush1.bf16.msra.mxu0 0
      %1117 = vmatprep.subr.bf16.mxu0 0
      %1118 = vmatpush1.bf16.msra.mxu0 0
      %1119 = vmatprep.subr.bf16.mxu0 0
      %1120 = vmatpush1.bf16.msra.mxu0 0
      %1121 = vmatprep.subr.bf16.mxu0 0
      %1122 = vmatpush1.bf16.msra.mxu0 0
      %1123 = vmatprep.mubr.bf16.mxu0 0
      %1124 = vmatmul.mubr.bf16.gmra.mrb[0].mxu0 %v795
      %v1125 = vpop.f32.mrb[0].mxu0
      %v1126 = vadd.f32 %v747, %v1125
      %v1127 = vpop.f32.mrb[0].mxu0
      %v1128 = vadd.f32 %v749, %v1127
      %v1129 = vpop.f32.mrb[0].mxu0
      %v1130 = vpop.f32.mrb[0].mxu0
      %1131 = vdwg.mxu0
      %1132 = vmatprep.subr.bf16.mxu0 %v843
      %1133 = vmatpush1.bf16.msra.mxu0 %v840
      %1134 = vmatprep.subr.bf16.mxu0 0
      %1135 = vmatpush1.bf16.msra.mxu0 0
      %1136 = vmatprep.subr.bf16.mxu0 0
      %1137 = vmatpush1.bf16.msra.mxu0 0
      %1138 = vmatprep.subr.bf16.mxu0 0
      %1139 = vmatpush1.bf16.msra.mxu0 0
      %1140 = vmatprep.subr.bf16.mxu0 0
      %1141 = vmatpush1.bf16.msra.mxu0 0
      %1142 = vmatprep.subr.bf16.mxu0 0
      %1143 = vmatpush1.bf16.msra.mxu0 0
      %1144 = vmatprep.subr.bf16.mxu0 0
      %1145 = vmatpush1.bf16.msra.mxu0 0
      %1146 = vmatprep.subr.bf16.mxu0 0
      %1147 = vmatpush1.bf16.msra.mxu0 0
      %1148 = vmatprep.subr.bf16.mxu0 0
      %1149 = vmatpush1.bf16.msra.mxu0 0
      %1150 = vmatprep.subr.bf16.mxu0 0
      %1151 = vmatpush1.bf16.msra.mxu0 0
      %1152 = vmatprep.subr.bf16.mxu0 0
      %1153 = vmatpush1.bf16.msra.mxu0 0
      %1154 = vmatprep.subr.bf16.mxu0 0
      %1155 = vmatpush1.bf16.msra.mxu0 0
      %1156 = vmatprep.subr.bf16.mxu0 0
      %1157 = vmatpush1.bf16.msra.mxu0 0
      %1158 = vmatprep.subr.bf16.mxu0 0
      %1159 = vmatpush1.bf16.msra.mxu0 0
      %1160 = vmatprep.subr.bf16.mxu0 0
      %1161 = vmatpush1.bf16.msra.mxu0 0
      %1162 = vmatprep.subr.bf16.mxu0 0
      %1163 = vmatpush1.bf16.msra.mxu0 0
      %1164 = vmatprep.mubr.bf16.mxu0 0
      %1165 = vmatmul.mubr.bf16.gmra.mrb[0].mxu0 %v795
      %v1166 = vpop.f32.mrb[0].mxu0
      %v1167 = vadd.f32 %v788, %v1166
      %v1168 = vpop.f32.mrb[0].mxu0
      %v1169 = vadd.f32 %v790, %v1168
      %v1170 = vpop.f32.mrb[0].mxu0
      %v1171 = vpop.f32.mrb[0].mxu0
      %1172 = vdwg.mxu0
      %v1173 = vld [vmem:[%s5] sm:$0xff]
      %1175 = vset.pattern.permute.xlu0 0
      %1176 = vperm.xlu0 %1175, %v1173
      %v1177 = vpop.permute.xlu0 %1176
      %v1179 = vadd.f32 %v880, %v1177
      %v1180 = vadd.f32 %v882, %v1177
      %v1181 = vadd.f32 %v921, %v1177
      %v1182 = vadd.f32 %v923, %v1177
      %v1183 = vadd.f32 %v962, %v1177
      %v1184 = vadd.f32 %v964, %v1177
      %v1185 = vadd.f32 %v1003, %v1177
      %v1186 = vadd.f32 %v1005, %v1177
      %v1187 = vadd.f32 %v1044, %v1177
      %v1188 = vadd.f32 %v1046, %v1177
      %v1189 = vadd.f32 %v1085, %v1177
      %v1190 = vadd.f32 %v1087, %v1177
      %v1191 = vadd.f32 %v1126, %v1177
      %v1192 = vadd.f32 %v1128, %v1177
      %v1193 = vadd.f32 %v1167, %v1177
      %v1194 = vadd.f32 %v1169, %v1177
      %v1195 = vmax.f32 %v1179, 0.0
      %v1196 = vmax.f32 %v1180, 0.0
      %v1197 = vmax.f32 %v1181, 0.0
      %v1198 = vmax.f32 %v1182, 0.0
      %v1199 = vmax.f32 %v1183, 0.0
      %v1200 = vmax.f32 %v1184, 0.0
      %v1201 = vmax.f32 %v1185, 0.0
      %v1202 = vmax.f32 %v1186, 0.0
      %v1203 = vmax.f32 %v1187, 0.0
      %v1204 = vmax.f32 %v1188, 0.0
      %v1205 = vmax.f32 %v1189, 0.0
      %v1206 = vmax.f32 %v1190, 0.0
      %v1207 = vmax.f32 %v1191, 0.0
      %v1208 = vmax.f32 %v1192, 0.0
      %v1209 = vmax.f32 %v1193, 0.0
      %v1210 = vmax.f32 %v1194, 0.0
      %v1211 = vld [vmem:[%s340] sm:$0xff]
      %v1212 = vld [vmem:[%s340 + $0x8] sm:$0xff]
      %v1213 = vld [vmem:[%s340 + $0x10] sm:$0xff]
      %v1214 = vld [vmem:[%s340 + $0x18] sm:$0xff]
      %v1215 = vld [vmem:[%s340 + $0x20] sm:$0xff]
      %v1216 = vld [vmem:[%s340 + $0x28] sm:$0xff]
      %v1217 = vld [vmem:[%s340 + $0x30] sm:$0xff]
      %v1218 = vld [vmem:[%s340 + $0x38] sm:$0xff]
      %v1219 = vld [vmem:[%s340 + $0x40] sm:$0xff]
      %v1220 = vld [vmem:[%s340 + $0x48] sm:$0xff]
      %v1221 = vld [vmem:[%s340 + $0x50] sm:$0xff]
      %v1222 = vld [vmem:[%s340 + $0x58] sm:$0xff]
      %v1223 = vld [vmem:[%s340 + $0x60] sm:$0xff]
      %v1224 = vld [vmem:[%s340 + $0x68] sm:$0xff]
      %v1225 = vld [vmem:[%s340 + $0x70] sm:$0xff]
      %v1226 = vld [vmem:[%s340 + $0x78] sm:$0xff]
      %v1227 = vadd.f32 %v1195, %v1211
      %v1228 = vadd.f32 %v1196, %v1212
      %v1229 = vadd.f32 %v1197, %v1213
      %v1230 = vadd.f32 %v1198, %v1214
      %v1231 = vadd.f32 %v1199, %v1215
      %v1232 = vadd.f32 %v1200, %v1216
      %v1233 = vadd.f32 %v1201, %v1217
      %v1234 = vadd.f32 %v1202, %v1218
      %v1235 = vadd.f32 %v1203, %v1219
      %v1236 = vadd.f32 %v1204, %v1220
      %v1237 = vadd.f32 %v1205, %v1221
      %v1238 = vadd.f32 %v1206, %v1222
      %v1239 = vadd.f32 %v1207, %v1223
      %v1240 = vadd.f32 %v1208, %v1224
      %v1241 = vadd.f32 %v1209, %v1225
      %v1242 = vadd.f32 %v1210, %v1226
      %v1243 = vpack.c.bf16 %v1227, %v1227
      %v1244 = vpack.c.bf16 %v1228, %v1228
      %v1245 = vpack.c.bf16 %v1229, %v1229
      %v1246 = vpack.c.bf16 %v1230, %v1230
      %v1247 = vpack.c.bf16 %v1231, %v1231
      %v1248 = vpack.c.bf16 %v1232, %v1232
      %v1249 = vpack.c.bf16 %v1233, %v1233
      %v1250 = vpack.c.bf16 %v1234, %v1234
      %v1251 = vpack.c.bf16 %v1235, %v1235
      %v1252 = vpack.c.bf16 %v1236, %v1236
      %v1253 = vpack.c.bf16 %v1237, %v1237
      %v1254 = vpack.c.bf16 %v1238, %v1238
      %v1255 = vpack.c.bf16 %v1239, %v1239
      %v1256 = vpack.c.bf16 %v1240, %v1240
      %v1257 = vpack.c.bf16 %v1241, %v1241
      %v1258 = vpack.c.bf16 %v1242, %v1242
      %v1259 = vld [vmem:[%s6] sm:$0xf]
      %v1260 = vld [vmem:[%s7] sm:$0xff]
      %1262 = vset.pattern.permute.xlu0 0
      %1263 = vperm.xlu0 %1262, %v1260
      %v1264 = vpop.permute.xlu0 %1263
      %v1267 = vsel %vm413, %v1259, 0
      %v1270 = vsel %vm417, %v1243, 0
      %v1273 = vsel %vm417, %v1244, 0
      %v1276 = vsel %vm417, %v1245, 0
      %v1279 = vsel %vm417, %v1246, 0
      %v1282 = vsel %vm417, %v1247, 0
      %v1285 = vsel %vm417, %v1248, 0
      %v1288 = vsel %vm417, %v1249, 0
      %v1291 = vsel %vm417, %v1250, 0
      %v1294 = vsel %vm417, %v1251, 0
      %v1297 = vsel %vm417, %v1252, 0
      %v1300 = vsel %vm417, %v1253, 0
      %v1303 = vsel %vm417, %v1254, 0
      %v1306 = vsel %vm417, %v1255, 0
      %v1309 = vsel %vm417, %v1256, 0
      %v1312 = vsel %vm417, %v1257, 0
      %v1315 = vsel %vm417, %v1258, 0
      %1317 = vmatprep.subr.bf16.mxu0 %v1273
      %1318 = vmatpush1.bf16.msra.mxu0 %v1270
      %1319 = vmatprep.subr.bf16.mxu0 0
      %1320 = vmatpush1.bf16.msra.mxu0 0
      %1321 = vmatprep.subr.bf16.mxu0 0
      %1322 = vmatpush1.bf16.msra.mxu0 0
      %1323 = vmatprep.subr.bf16.mxu0 0
      %1324 = vmatpush1.bf16.msra.mxu0 0
      %1325 = vmatprep.subr.bf16.mxu0 0
      %1326 = vmatpush1.bf16.msra.mxu0 0
      %1327 = vmatprep.subr.bf16.mxu0 0
      %1328 = vmatpush1.bf16.msra.mxu0 0
      %1329 = vmatprep.subr.bf16.mxu0 0
      %1330 = vmatpush1.bf16.msra.mxu0 0
      %1331 = vmatprep.subr.bf16.mxu0 0
      %1332 = vmatpush1.bf16.msra.mxu0 0
      %1333 = vmatprep.subr.bf16.mxu0 0
      %1334 = vmatpush1.bf16.msra.mxu0 0
      %1335 = vmatprep.subr.bf16.mxu0 0
      %1336 = vmatpush1.bf16.msra.mxu0 0
      %1337 = vmatprep.subr.bf16.mxu0 0
      %1338 = vmatpush1.bf16.msra.mxu0 0
      %1339 = vmatprep.subr.bf16.mxu0 0
      %1340 = vmatpush1.bf16.msra.mxu0 0
      %1341 = vmatprep.subr.bf16.mxu0 0
      %1342 = vmatpush1.bf16.msra.mxu0 0
      %1343 = vmatprep.subr.bf16.mxu0 0
      %1344 = vmatpush1.bf16.msra.mxu0 0
      %1345 = vmatprep.subr.bf16.mxu0 0
      %1346 = vmatpush1.bf16.msra.mxu0 0
      %1347 = vmatprep.subr.bf16.mxu0 0
      %1348 = vmatpush1.bf16.msra.mxu0 0
      %1349 = vmatprep.mubr.bf16.mxu0 0
      %1350 = vmatmul.mubr.bf16.gmra.mrb[0].mxu0 %v1267
      %v1351 = vpop.f32.mrb[0].mxu0
      %v1352 = vadd.f32 %v1264, %v1351
      %v1353 = vpop.f32.mrb[0].mxu0
      %v1354 = vadd.f32 %v1264, %v1353
      %v1355 = vpop.f32.mrb[0].mxu0
      %v1356 = vpop.f32.mrb[0].mxu0
      %1357 = vdwg.mxu0
      %1358 = vmatprep.subr.bf16.mxu0 %v1279
      %1359 = vmatpush1.bf16.msra.mxu0 %v1276
      %1360 = vmatprep.subr.bf16.mxu0 0
      %1361 = vmatpush1.bf16.msra.mxu0 0
      %1362 = vmatprep.subr.bf16.mxu0 0
      %1363 = vmatpush1.bf16.msra.mxu0 0
      %1364 = vmatprep.subr.bf16.mxu0 0
      %1365 = vmatpush1.bf16.msra.mxu0 0
      %1366 = vmatprep.subr.bf16.mxu0 0
      %1367 = vmatpush1.bf16.msra.mxu0 0
      %1368 = vmatprep.subr.bf16.mxu0 0
      %1369 = vmatpush1.bf16.msra.mxu0 0
      %1370 = vmatprep.subr.bf16.mxu0 0
      %1371 = vmatpush1.bf16.msra.mxu0 0
      %1372 = vmatprep.subr.bf16.mxu0 0
      %1373 = vmatpush1.bf16.msra.mxu0 0
      %1374 = vmatprep.subr.bf16.mxu0 0
      %1375 = vmatpush1.bf16.msra.mxu0 0
      %1376 = vmatprep.subr.bf16.mxu0 0
      %1377 = vmatpush1.bf16.msra.mxu0 0
      %1378 = vmatprep.subr.bf16.mxu0 0
      %1379 = vmatpush1.bf16.msra.mxu0 0
      %1380 = vmatprep.subr.bf16.mxu0 0
      %1381 = vmatpush1.bf16.msra.mxu0 0
      %1382 = vmatprep.subr.bf16.mxu0 0
      %1383 = vmatpush1.bf16.msra.mxu0 0
      %1384 = vmatprep.subr.bf16.mxu0 0
      %1385 = vmatpush1.bf16.msra.mxu0 0
      %1386 = vmatprep.subr.bf16.mxu0 0
      %1387 = vmatpush1.bf16.msra.mxu0 0
      %1388 = vmatprep.subr.bf16.mxu0 0
      %1389 = vmatpush1.bf16.msra.mxu0 0
      %1390 = vmatprep.mubr.bf16.mxu0 0
      %1391 = vmatmul.mubr.bf16.gmra.mrb[0].mxu0 %v1267
      %v1392 = vpop.f32.mrb[0].mxu0
      %v1393 = vadd.f32 %v1264, %v1392
      %v1394 = vpop.f32.mrb[0].mxu0
      %v1395 = vadd.f32 %v1264, %v1394
      %v1396 = vpop.f32.mrb[0].mxu0
      %v1397 = vpop.f32.mrb[0].mxu0
      %1398 = vdwg.mxu0
      %1399 = vmatprep.subr.bf16.mxu0 %v1285
      %1400 = vmatpush1.bf16.msra.mxu0 %v1282
      %1401 = vmatprep.subr.bf16.mxu0 0
      %1402 = vmatpush1.bf16.msra.mxu0 0
      %1403 = vmatprep.subr.bf16.mxu0 0
      %1404 = vmatpush1.bf16.msra.mxu0 0
      %1405 = vmatprep.subr.bf16.mxu0 0
      %1406 = vmatpush1.bf16.msra.mxu0 0
      %1407 = vmatprep.subr.bf16.mxu0 0
      %1408 = vmatpush1.bf16.msra.mxu0 0
      %1409 = vmatprep.subr.bf16.mxu0 0
      %1410 = vmatpush1.bf16.msra.mxu0 0
      %1411 = vmatprep.subr.bf16.mxu0 0
      %1412 = vmatpush1.bf16.msra.mxu0 0
      %1413 = vmatprep.subr.bf16.mxu0 0
      %1414 = vmatpush1.bf16.msra.mxu0 0
      %1415 = vmatprep.subr.bf16.mxu0 0
      %1416 = vmatpush1.bf16.msra.mxu0 0
      %1417 = vmatprep.subr.bf16.mxu0 0
      %1418 = vmatpush1.bf16.msra.mxu0 0
      %1419 = vmatprep.subr.bf16.mxu0 0
      %1420 = vmatpush1.bf16.msra.mxu0 0
      %1421 = vmatprep.subr.bf16.mxu0 0
      %1422 = vmatpush1.bf16.msra.mxu0 0
      %1423 = vmatprep.subr.bf16.mxu0 0
      %1424 = vmatpush1.bf16.msra.mxu0 0
      %1425 = vmatprep.subr.bf16.mxu0 0
      %1426 = vmatpush1.bf16.msra.mxu0 0
      %1427 = vmatprep.subr.bf16.mxu0 0
      %1428 = vmatpush1.bf16.msra.mxu0 0
      %1429 = vmatprep.subr.bf16.mxu0 0
      %1430 = vmatpush1.bf16.msra.mxu0 0
      %1431 = vmatprep.mubr.bf16.mxu0 0
      %1432 = vmatmul.mubr.bf16.gmra.mrb[0].mxu0 %v1267
      %v1433 = vpop.f32.mrb[0].mxu0
      %v1434 = vadd.f32 %v1264, %v1433
      %v1435 = vpop.f32.mrb[0].mxu0
      %v1436 = vadd.f32 %v1264, %v1435
      %v1437 = vpop.f32.mrb[0].mxu0
      %v1438 = vpop.f32.mrb[0].mxu0
      %1439 = vdwg.mxu0
      %1440 = vmatprep.subr.bf16.mxu0 %v1291
      %1441 = vmatpush1.bf16.msra.mxu0 %v1288
      %1442 = vmatprep.subr.bf16.mxu0 0
      %1443 = vmatpush1.bf16.msra.mxu0 0
      %1444 = vmatprep.subr.bf16.mxu0 0
      %1445 = vmatpush1.bf16.msra.mxu0 0
      %1446 = vmatprep.subr.bf16.mxu0 0
      %1447 = vmatpush1.bf16.msra.mxu0 0
      %1448 = vmatprep.subr.bf16.mxu0 0
      %1449 = vmatpush1.bf16.msra.mxu0 0
      %1450 = vmatprep.subr.bf16.mxu0 0
      %1451 = vmatpush1.bf16.msra.mxu0 0
      %1452 = vmatprep.subr.bf16.mxu0 0
      %1453 = vmatpush1.bf16.msra.mxu0 0
      %1454 = vmatprep.subr.bf16.mxu0 0
      %1455 = vmatpush1.bf16.msra.mxu0 0
      %1456 = vmatprep.subr.bf16.mxu0 0
      %1457 = vmatpush1.bf16.msra.mxu0 0
      %1458 = vmatprep.subr.bf16.mxu0 0
      %1459 = vmatpush1.bf16.msra.mxu0 0
      %1460 = vmatprep.subr.bf16.mxu0 0
      %1461 = vmatpush1.bf16.msra.mxu0 0
      %1462 = vmatprep.subr.bf16.mxu0 0
      %1463 = vmatpush1.bf16.msra.mxu0 0
      %1464 = vmatprep.subr.bf16.mxu0 0
      %1465 = vmatpush1.bf16.msra.mxu0 0
      %1466 = vmatprep.subr.bf16.mxu0 0
      %1467 = vmatpush1.bf16.msra.mxu0 0
      %1468 = vmatprep.subr.bf16.mxu0 0
      %1469 = vmatpush1.bf16.msra.mxu0 0
      %1470 = vmatprep.subr.bf16.mxu0 0
      %1471 = vmatpush1.bf16.msra.mxu0 0
      %1472 = vmatprep.mubr.bf16.mxu0 0
      %1473 = vmatmul.mubr.bf16.gmra.mrb[0].mxu0 %v1267
      %v1474 = vpop.f32.mrb[0].mxu0
      %v1475 = vadd.f32 %v1264, %v1474
      %v1476 = vpop.f32.mrb[0].mxu0
      %v1477 = vadd.f32 %v1264, %v1476
      %v1478 = vpop.f32.mrb[0].mxu0
      %v1479 = vpop.f32.mrb[0].mxu0
      %1480 = vdwg.mxu0
      %1481 = vmatprep.subr.bf16.mxu0 %v1297
      %1482 = vmatpush1.bf16.msra.mxu0 %v1294
      %1483 = vmatprep.subr.bf16.mxu0 0
      %1484 = vmatpush1.bf16.msra.mxu0 0
      %1485 = vmatprep.subr.bf16.mxu0 0
      %1486 = vmatpush1.bf16.msra.mxu0 0
      %1487 = vmatprep.subr.bf16.mxu0 0
      %1488 = vmatpush1.bf16.msra.mxu0 0
      %1489 = vmatprep.subr.bf16.mxu0 0
      %1490 = vmatpush1.bf16.msra.mxu0 0
      %1491 = vmatprep.subr.bf16.mxu0 0
      %1492 = vmatpush1.bf16.msra.mxu0 0
      %1493 = vmatprep.subr.bf16.mxu0 0
      %1494 = vmatpush1.bf16.msra.mxu0 0
      %1495 = vmatprep.subr.bf16.mxu0 0
      %1496 = vmatpush1.bf16.msra.mxu0 0
      %1497 = vmatprep.subr.bf16.mxu0 0
      %1498 = vmatpush1.bf16.msra.mxu0 0
      %1499 = vmatprep.subr.bf16.mxu0 0
      %1500 = vmatpush1.bf16.msra.mxu0 0
      %1501 = vmatprep.subr.bf16.mxu0 0
      %1502 = vmatpush1.bf16.msra.mxu0 0
      %1503 = vmatprep.subr.bf16.mxu0 0
      %1504 = vmatpush1.bf16.msra.mxu0 0
      %1505 = vmatprep.subr.bf16.mxu0 0
      %1506 = vmatpush1.bf16.msra.mxu0 0
      %1507 = vmatprep.subr.bf16.mxu0 0
      %1508 = vmatpush1.bf16.msra.mxu0 0
      %1509 = vmatprep.subr.bf16.mxu0 0
      %1510 = vmatpush1.bf16.msra.mxu0 0
      %1511 = vmatprep.subr.bf16.mxu0 0
      %1512 = vmatpush1.bf16.msra.mxu0 0
      %1513 = vmatprep.mubr.bf16.mxu0 0
      %1514 = vmatmul.mubr.bf16.gmra.mrb[0].mxu0 %v1267
      %v1515 = vpop.f32.mrb[0].mxu0
      %v1516 = vadd.f32 %v1264, %v1515
      %v1517 = vpop.f32.mrb[0].mxu0
      %v1518 = vadd.f32 %v1264, %v1517
      %v1519 = vpop.f32.mrb[0].mxu0
      %v1520 = vpop.f32.mrb[0].mxu0
      %1521 = vdwg.mxu0
      %1522 = vmatprep.subr.bf16.mxu0 %v1303
      %1523 = vmatpush1.bf16.msra.mxu0 %v1300
      %1524 = vmatprep.subr.bf16.mxu0 0
      %1525 = vmatpush1.bf16.msra.mxu0 0
      %1526 = vmatprep.subr.bf16.mxu0 0
      %1527 = vmatpush1.bf16.msra.mxu0 0
      %1528 = vmatprep.subr.bf16.mxu0 0
      %1529 = vmatpush1.bf16.msra.mxu0 0
      %1530 = vmatprep.subr.bf16.mxu0 0
      %1531 = vmatpush1.bf16.msra.mxu0 0
      %1532 = vmatprep.subr.bf16.mxu0 0
      %1533 = vmatpush1.bf16.msra.mxu0 0
      %1534 = vmatprep.subr.bf16.mxu0 0
      %1535 = vmatpush1.bf16.msra.mxu0 0
      %1536 = vmatprep.subr.bf16.mxu0 0
      %1537 = vmatpush1.bf16.msra.mxu0 0
      %1538 = vmatprep.subr.bf16.mxu0 0
      %1539 = vmatpush1.bf16.msra.mxu0 0
      %1540 = vmatprep.subr.bf16.mxu0 0
      %1541 = vmatpush1.bf16.msra.mxu0 0
      %1542 = vmatprep.subr.bf16.mxu0 0
      %1543 = vmatpush1.bf16.msra.mxu0 0
      %1544 = vmatprep.subr.bf16.mxu0 0
      %1545 = vmatpush1.bf16.msra.mxu0 0
      %1546 = vmatprep.subr.bf16.mxu0 0
      %1547 = vmatpush1.bf16.msra.mxu0 0
      %1548 = vmatprep.subr.bf16.mxu0 0
      %1549 = vmatpush1.bf16.msra.mxu0 0
      %1550 = vmatprep.subr.bf16.mxu0 0
      %1551 = vmatpush1.bf16.msra.mxu0 0
      %1552 = vmatprep.subr.bf16.mxu0 0
      %1553 = vmatpush1.bf16.msra.mxu0 0
      %1554 = vmatprep.mubr.bf16.mxu0 0
      %1555 = vmatmul.mubr.bf16.gmra.mrb[0].mxu0 %v1267
      %v1556 = vpop.f32.mrb[0].mxu0
      %v1557 = vadd.f32 %v1264, %v1556
      %v1558 = vpop.f32.mrb[0].mxu0
      %v1559 = vadd.f32 %v1264, %v1558
      %v1560 = vpop.f32.mrb[0].mxu0
      %v1561 = vpop.f32.mrb[0].mxu0
      %1562 = vdwg.mxu0
      %1563 = vmatprep.subr.bf16.mxu0 %v1309
      %1564 = vmatpush1.bf16.msra.mxu0 %v1306
      %1565 = vmatprep.subr.bf16.mxu0 0
      %1566 = vmatpush1.bf16.msra.mxu0 0
      %1567 = vmatprep.subr.bf16.mxu0 0
      %1568 = vmatpush1.bf16.msra.mxu0 0
      %1569 = vmatprep.subr.bf16.mxu0 0
      %1570 = vmatpush1.bf16.msra.mxu0 0
      %1571 = vmatprep.subr.bf16.mxu0 0
      %1572 = vmatpush1.bf16.msra.mxu0 0
      %1573 = vmatprep.subr.bf16.mxu0 0
      %1574 = vmatpush1.bf16.msra.mxu0 0
      %1575 = vmatprep.subr.bf16.mxu0 0
      %1576 = vmatpush1.bf16.msra.mxu0 0
      %1577 = vmatprep.subr.bf16.mxu0 0
      %1578 = vmatpush1.bf16.msra.mxu0 0
      %1579 = vmatprep.subr.bf16.mxu0 0
      %1580 = vmatpush1.bf16.msra.mxu0 0
      %1581 = vmatprep.subr.bf16.mxu0 0
      %1582 = vmatpush1.bf16.msra.mxu0 0
      %1583 = vmatprep.subr.bf16.mxu0 0
      %1584 = vmatpush1.bf16.msra.mxu0 0
      %1585 = vmatprep.subr.bf16.mxu0 0
      %1586 = vmatpush1.bf16.msra.mxu0 0
      %1587 = vmatprep.subr.bf16.mxu0 0
      %1588 = vmatpush1.bf16.msra.mxu0 0
      %1589 = vmatprep.subr.bf16.mxu0 0
      %1590 = vmatpush1.bf16.msra.mxu0 0
      %1591 = vmatprep.subr.bf16.mxu0 0
      %1592 = vmatpush1.bf16.msra.mxu0 0
      %1593 = vmatprep.subr.bf16.mxu0 0
      %1594 = vmatpush1.bf16.msra.mxu0 0
      %1595 = vmatprep.mubr.bf16.mxu0 0
      %1596 = vmatmul.mubr.bf16.gmra.mrb[0].mxu0 %v1267
      %v1597 = vpop.f32.mrb[0].mxu0
      %v1598 = vadd.f32 %v1264, %v1597
      %v1599 = vpop.f32.mrb[0].mxu0
      %v1600 = vadd.f32 %v1264, %v1599
      %v1601 = vpop.f32.mrb[0].mxu0
      %v1602 = vpop.f32.mrb[0].mxu0
      %1603 = vdwg.mxu0
      %1604 = vmatprep.subr.bf16.mxu0 %v1315
      %1605 = vmatpush1.bf16.msra.mxu0 %v1312
      %1606 = vmatprep.subr.bf16.mxu0 0
      %1607 = vmatpush1.bf16.msra.mxu0 0
      %1608 = vmatprep.subr.bf16.mxu0 0
      %1609 = vmatpush1.bf16.msra.mxu0 0
      %1610 = vmatprep.subr.bf16.mxu0 0
      %1611 = vmatpush1.bf16.msra.mxu0 0
      %1612 = vmatprep.subr.bf16.mxu0 0
      %1613 = vmatpush1.bf16.msra.mxu0 0
      %1614 = vmatprep.subr.bf16.mxu0 0
      %1615 = vmatpush1.bf16.msra.mxu0 0
      %1616 = vmatprep.subr.bf16.mxu0 0
      %1617 = vmatpush1.bf16.msra.mxu0 0
      %1618 = vmatprep.subr.bf16.mxu0 0
      %1619 = vmatpush1.bf16.msra.mxu0 0
      %1620 = vmatprep.subr.bf16.mxu0 0
      %1621 = vmatpush1.bf16.msra.mxu0 0
      %1622 = vmatprep.subr.bf16.mxu0 0
      %1623 = vmatpush1.bf16.msra.mxu0 0
      %1624 = vmatprep.subr.bf16.mxu0 0
      %1625 = vmatpush1.bf16.msra.mxu0 0
      %1626 = vmatprep.subr.bf16.mxu0 0
      %1627 = vmatpush1.bf16.msra.mxu0 0
      %1628 = vmatprep.subr.bf16.mxu0 0
      %1629 = vmatpush1.bf16.msra.mxu0 0
      %1630 = vmatprep.subr.bf16.mxu0 0
      %1631 = vmatpush1.bf16.msra.mxu0 0
      %1632 = vmatprep.subr.bf16.mxu0 0
      %1633 = vmatpush1.bf16.msra.mxu0 0
      %1634 = vmatprep.subr.bf16.mxu0 0
      %1635 = vmatpush1.bf16.msra.mxu0 0
      %1636 = vmatprep.mubr.bf16.mxu0 0
      %1637 = vmatmul.mubr.bf16.gmra.mrb[0].mxu0 %v1267
      %v1638 = vpop.f32.mrb[0].mxu0
      %v1639 = vadd.f32 %v1264, %v1638
      %v1640 = vpop.f32.mrb[0].mxu0
      %v1641 = vadd.f32 %v1264, %v1640
      %v1642 = vpop.f32.mrb[0].mxu0
      %v1643 = vpop.f32.mrb[0].mxu0
      %1644 = vdwg.mxu0
      %v1645 = vmax.f32 %v1352, 0.0
      %v1646 = vmax.f32 %v1354, 0.0
      %v1647 = vmax.f32 %v1393, 0.0
      %v1648 = vmax.f32 %v1395, 0.0
      %v1649 = vmax.f32 %v1434, 0.0
      %v1650 = vmax.f32 %v1436, 0.0
      %v1651 = vmax.f32 %v1475, 0.0
      %v1652 = vmax.f32 %v1477, 0.0
      %v1653 = vmax.f32 %v1516, 0.0
      %v1654 = vmax.f32 %v1518, 0.0
      %v1655 = vmax.f32 %v1557, 0.0
      %v1656 = vmax.f32 %v1559, 0.0
      %v1657 = vmax.f32 %v1598, 0.0
      %v1658 = vmax.f32 %v1600, 0.0
      %v1659 = vmax.f32 %v1639, 0.0
      %v1660 = vmax.f32 %v1641, 0.0
      %1661 = vst [vmem:[%s345] sm:$0xff] %v1645
      %1662 = vst [vmem:[%s345 + $0x8] sm:$0xff] %v1646
      %1663 = vst [vmem:[%s345 + $0x10] sm:$0xff] %v1647
      %1664 = vst [vmem:[%s345 + $0x18] sm:$0xff] %v1648
      %1665 = vst [vmem:[%s345 + $0x20] sm:$0xff] %v1649
      %1666 = vst [vmem:[%s345 + $0x28] sm:$0xff] %v1650
      %1667 = vst [vmem:[%s345 + $0x30] sm:$0xff] %v1651
      %1668 = vst [vmem:[%s345 + $0x38] sm:$0xff] %v1652
      %1669 = vst [vmem:[%s345 + $0x40] sm:$0xff] %v1653
      %1670 = vst [vmem:[%s345 + $0x48] sm:$0xff] %v1654
      %1671 = vst [vmem:[%s345 + $0x50] sm:$0xff] %v1655
      %1672 = vst [vmem:[%s345 + $0x58] sm:$0xff] %v1656
      %1673 = vst [vmem:[%s345 + $0x60] sm:$0xff] %v1657
      %1674 = vst [vmem:[%s345 + $0x68] sm:$0xff] %v1658
      %1675 = vst [vmem:[%s345 + $0x70] sm:$0xff] %v1659
      %1676 = vst [vmem:[%s345 + $0x78] sm:$0xff] %v1660
      %p1677 = scmp.lt.s32.totalorder %s19, 1
      %s1678 = scalar_select %p1677, %s19, 1
      %s1679 = smul.addr %s1678, 16
      %s1680 = smul.addr %s1679, 8
      %s1681 = scalar_lea.vmem %s8, %s1680
      // Predicated region
      $region53: #{tri_res_v4_forward.5} parent=51 // pred_check
        %p1682 = pneg %p220
      $region54: #{tri_res_v4_forward.5} parent=51 // pred_check_branch
        %1684 = sbr.rel (%p1682) target = $region56
      $region55: #{tri_res_v4_forward.5} parent=51 // pred_region
        _
      $region56: #{tri_res_v4_forward.5} parent=51 // pred_fallthru
        _
    $region52: #{tri_res_v4_forward.5} parent=5 // pred_fallthru
      _
    %p1685 = scmp.le.s32.totalorder 2, %s14
    // Predicated region
    $region57: #{tri_res_v4_forward.5} parent=5 // pred_check
      %p1686 = pneg %p1685
    $region58: #{tri_res_v4_forward.5} parent=5 // pred_check_branch
      %1688 = sbr.rel (%p1686) target = $region60
    $region59: #{tri_res_v4_forward.5} parent=5 // pred_region
      %s1689 = ssub.s32 %s14, 2
      // Predicated region
      $region61: #{tri_res_v4_forward.5} parent=59 // pred_check
        %p1690 = pneg %p226
      $region62: #{tri_res_v4_forward.5} parent=59 // pred_check_branch
        %1692 = sbr.rel (%p1690) target = $region64
      $region63: #{tri_res_v4_forward.5} parent=59 // pred_region
        %p1693 = scmp.lt.s32.totalorder %s20, 1
        %s1694 = scalar_select %p1693, %s20, 1
        %s1695 = smul.addr %s1694, 16
        %s1696 = smul.addr %s1695, 8
        %s1697 = scalar_lea.vmem %s8, %s1696
      $region64: #{tri_res_v4_forward.5} parent=59 // pred_fallthru
        _
    $region60: #{tri_res_v4_forward.5} parent=5 // pred_fallthru
      _
  $region6: #{tri_res_v4_forward.5} parent=0 // loop_footer
    %s18 = sadd.s32 1, %s14
  $region7: #{tri_res_v4_forward.5} parent=0 // loop_footer_branch
    %13 = sbr.rel target = $region3
  $region8: #{tri_res_v4_forward.5} parent=0 // loop_exit
    _

</llo_original>
